<compile_context>
chip_gen: v6e
topology: v6e:2x2x1
jax: 0.10.0
libtpu: 0.0.40
codegen_flags: <defaults>
</compile_context>

<pallas_src>
import math

import jax
import jax.numpy as jnp
from jax.experimental import pallas as pl
from jax.experimental.pallas import tpu as pltpu

EMB_DIM = 100          # GloVe-100, fixed by the PyTorch module
EMB_DIM_PAD = 128      # lane-dense padding of the embedding dim


def _round_up(x, m):
    return ((x + m - 1) // m) * m


# --------------------------------------------------------------------------
# Fused kernel: n_layers x LSTM + FC, everything VMEM-resident, no grid.
# --------------------------------------------------------------------------
def _make_fused_kernel(n_layers, T, Bp, H):
    def kernel(*refs):
        # ---- unpack refs -------------------------------------------------
        x_ref, h0_ref, c0_ref = refs[0], refs[1], refs[2]
        pos = 3
        layer_refs = []
        for _ in range(n_layers):
            layer_refs.append((refs[pos], refs[pos + 1], refs[pos + 2]))
            pos += 3
        fcw_ref, fcb_ref = refs[pos], refs[pos + 1]
        pos += 2
        logits_ref, hT_ref, cT_ref = refs[pos], refs[pos + 1], refs[pos + 2]
        pos += 3
        gates_sc, y_sc = refs[pos], refs[pos + 1]

        # Static lane mask: lanes [2H, 3H) are the 'g' gate (tanh); i, f, o are
        # sigmoid.  Hoisted out of the time loop (broadcast is not CSE'd).
        lane = jax.lax.broadcasted_iota(jnp.int32, (Bp, 4 * H), 1)
        g_mask = (lane >= 2 * H) & (lane < 3 * H)

        layer_in_ref = x_ref                        # (T*Bp, Dp) for layer 0
        for l, (wih_ref, whh_ref, b_ref) in enumerate(layer_refs):
            # Hoisted input projection: one big matmul covering all T steps.
            gates_sc[...] = (
                jnp.dot(layer_in_ref[...], wih_ref[...],
                        preferred_element_type=jnp.float32) + b_ref[...])
            whh = whh_ref[...]                      # (H, 4H), held in vregs

            def step(t, carry, _whh=whh):
                h, c = carry
                row = pl.multiple_of(t * Bp, Bp)
                g = gates_sc[pl.ds(row, Bp), :] + jnp.dot(
                    h, _whh, preferred_element_type=jnp.float32)
                # Full-width activations, then select tanh lanes for 'g'.
                act = jnp.where(g_mask, jnp.tanh(g), jax.nn.sigmoid(g))
                i_g = act[:, 0 * H:1 * H]
                f_g = act[:, 1 * H:2 * H]
                g_g = act[:, 2 * H:3 * H]
                o_g = act[:, 3 * H:4 * H]
                c_new = f_g * c + i_g * g_g
                h_new = o_g * jnp.tanh(c_new)
                y_sc[pl.ds(row, Bp), :] = h_new
                return h_new, c_new

            h_fin, c_fin = jax.lax.fori_loop(
                0, T, step, (h0_ref[l], c0_ref[l]), unroll=True)
            hT_ref[l] = h_fin                       # written once per layer
            cT_ref[l] = c_fin
            layer_in_ref = y_sc                     # next layer reads (T*Bp, H)
            # TODO(synk): inter-layer / output dropout is identity (eval mode);
            # training-mode stochastic dropout not implemented.

        # Fused final linear layer over the whole sequence (lane-dense Vp).
        logits_ref[...] = (
            jnp.dot(y_sc[...], fcw_ref[...],
                    preferred_element_type=jnp.float32) + fcb_ref[...])

    return kernel


def fused_lstm_fc(x_flat, h0, c0, lstm_params, fc_w, fc_b):
    """x_flat: (T*Bp, Dp) time-major; h0/c0: (L, Bp, H).

    Returns (logits (T*Bp, Vp) time-major, h_T (L, Bp, H), c_T (L, Bp, H)).
    """
    TB, _ = x_flat.shape
    L, Bp, H = h0.shape
    T = TB // Bp
    Vp = fc_w.shape[1]

    inputs = [x_flat, h0, c0]
    for (w_ih, w_hh, b) in lstm_params:
        inputs += [w_ih, w_hh, b]
    inputs += [fc_w, fc_b]

    kernel = _make_fused_kernel(L, T, Bp, H)
    vmem = lambda: pl.BlockSpec(memory_space=pltpu.MemorySpace.VMEM)
    return pl.pallas_call(
        kernel,
        out_shape=(
            jax.ShapeDtypeStruct((TB, Vp), jnp.float32),   # logits (time-major)
            jax.ShapeDtypeStruct((L, Bp, H), jnp.float32),  # h_T
            jax.ShapeDtypeStruct((L, Bp, H), jnp.float32),  # c_T
        ),
        in_specs=[vmem() for _ in inputs],
        out_specs=(vmem(), vmem(), vmem()),
        scratch_shapes=[
            pltpu.VMEM((TB, 4 * H), jnp.float32),  # hoisted input projections
            pltpu.VMEM((TB, H), jnp.float32),      # per-layer hidden outputs
        ],
    )(*inputs)


# --------------------------------------------------------------------------
# Module analogue of WordLSTM_with_Glove
# --------------------------------------------------------------------------
class WordLSTMWithGlove:
    def __init__(self, vocab_size, n_hidden=32, n_layers=2,
                 drop_prob=0.3, lr=0.001, key=None):
        self.vocab_size = vocab_size
        self.vocab_pad = _round_up(vocab_size, 128)   # lane-dense logits width
        self.n_hidden = n_hidden
        self.n_layers = n_layers
        self.drop_prob = drop_prob
        self.lr = lr

        key = jax.random.PRNGKey(0) if key is None else key
        k_emb, k_lstm, k_fc = jax.random.split(key, 3)

        # Frozen "GloVe" embedding table; padding_idx=0 row zero; columns
        # zero-padded 100 -> 128 (matched by zero rows in W_ih of layer 0).
        emb = 0.1 * jax.random.normal(k_emb, (vocab_size, EMB_DIM), jnp.float32)
        emb = emb.at[0].set(0.0)
        self.emb = jnp.pad(emb, ((0, 0), (0, EMB_DIM_PAD - EMB_DIM)))

        # LSTM parameters (PyTorch init: U(-1/sqrt(H), 1/sqrt(H))), stored
        # transposed ((Din, 4H), (H, 4H)) with the two biases pre-summed.
        bound = 1.0 / math.sqrt(n_hidden)
        self.lstm_params = []
        for layer in range(n_layers):
            in_dim = EMB_DIM if layer == 0 else n_hidden
            in_dim_pad = EMB_DIM_PAD if layer == 0 else n_hidden
            k_lstm, k1, k2, k3, k4 = jax.random.split(k_lstm, 5)
            w_ih = jax.random.uniform(k1, (in_dim, 4 * n_hidden),
                                      jnp.float32, -bound, bound)
            w_ih = jnp.pad(w_ih, ((0, in_dim_pad - in_dim), (0, 0)))
            w_hh = jax.random.uniform(k2, (n_hidden, 4 * n_hidden),
                                      jnp.float32, -bound, bound)
            b_ih = jax.random.uniform(k3, (4 * n_hidden,), jnp.float32,
                                      -bound, bound)
            b_hh = jax.random.uniform(k4, (4 * n_hidden,), jnp.float32,
                                      -bound, bound)
            b = (b_ih + b_hh).reshape(1, 4 * n_hidden)
            self.lstm_params.append((w_ih, w_hh, b))

        # fc: torch weight is (V, H); store transposed + padded to (H, Vp).
        k_fc, kw, kb = jax.random.split(k_fc, 3)
        fbound = 1.0 / math.sqrt(n_hidden)
        fc_w = jax.random.uniform(kw, (n_hidden, vocab_size),
                                  jnp.float32, -fbound, fbound)
        fc_b = jax.random.uniform(kb, (vocab_size,), jnp.float32,
                                  -fbound, fbound)
        self.fc_w = jnp.pad(fc_w, ((0, 0), (0, self.vocab_pad - vocab_size)))
        self.fc_b = jnp.pad(fc_b, (0, self.vocab_pad - vocab_size)).reshape(1, -1)

    def forward(self, x, hidden):
        B, T = x.shape
        Bp = _round_up(max(B, 8), 8)          # full sublane groups
        H, V, Vp = self.n_hidden, self.vocab_size, self.vocab_pad

        # Embedding lookup (gather glue, not a hot-path matmul).
        embedded = jnp.take(self.emb, x, axis=0)          # (B, T, Dp)
        xt = jnp.transpose(embedded, (1, 0, 2))           # time-major (T, B, Dp)
        if Bp != B:
            xt = jnp.pad(xt, ((0, 0), (0, Bp - B), (0, 0)))
        x_flat = xt.reshape(T * Bp, EMB_DIM_PAD)

        h0, c0 = hidden                                   # (L, B, H) each
        if Bp != B:
            h0 = jnp.pad(h0, ((0, 0), (0, Bp - B), (0, 0)))
            c0 = jnp.pad(c0, ((0, 0), (0, Bp - B), (0, 0)))

        logits_pad, hT, cT = fused_lstm_fc(
            x_flat, h0, c0, self.lstm_params, self.fc_w, self.fc_b)

        # Un-pad and reorder to PyTorch's (B*T, V) row order (batch-major).
        logits = logits_pad.reshape(T, Bp, Vp)[:, :B, :V]
        logits = jnp.transpose(logits, (1, 0, 2)).reshape(B * T, V)
        return logits, (hT[:, :B, :], cT[:, :B, :])

    def init_hidden(self, batch_size):
        z = jnp.zeros((self.n_layers, batch_size, self.n_hidden), jnp.float32)
        return (z, z)


if __name__ == "__main__":
    vocab_size = 40
    B, T, H, L = 2, 8, 32, 2

    model = WordLSTMWithGlove(vocab_size, n_hidden=H, n_layers=L,
                              key=jax.random.PRNGKey(0))
    x = jax.random.randint(jax.random.PRNGKey(0), (B, T), 0, vocab_size,
                           dtype=jnp.int32)
    hidden = model.init_hidden(B)

    out, (hn, cn) = model.forward(x, hidden)
    out, hn, cn = jax.block_until_ready((out, hn, cn))

    assert out.shape == (B * T, vocab_size)
    assert hn.shape == (L, B, H) and cn.shape == (L, B, H)
    assert bool(jnp.all(jnp.isfinite(out)))
    print("KERNEL_OK")
</pallas_src>

<mosaic_0001>
module attributes {stable_mosaic.version = 11 : i64} {
  func.func @kernel(%arg0: memref<64x128xf32, #tpu.memory_space<vmem>>, %arg1: memref<2x8x32xf32, #tpu.memory_space<vmem>>, %arg2: memref<2x8x32xf32, #tpu.memory_space<vmem>>, %arg3: memref<128x128xf32, #tpu.memory_space<vmem>>, %arg4: memref<32x128xf32, #tpu.memory_space<vmem>>, %arg5: memref<1x128xf32, #tpu.memory_space<vmem>>, %arg6: memref<32x128xf32, #tpu.memory_space<vmem>>, %arg7: memref<32x128xf32, #tpu.memory_space<vmem>>, %arg8: memref<1x128xf32, #tpu.memory_space<vmem>>, %arg9: memref<32x128xf32, #tpu.memory_space<vmem>>, %arg10: memref<1x128xf32, #tpu.memory_space<vmem>>, %arg11: memref<64x128xf32, #tpu.memory_space<vmem>>, %arg12: memref<2x8x32xf32, #tpu.memory_space<vmem>>, %arg13: memref<2x8x32xf32, #tpu.memory_space<vmem>>, %arg14: memref<64x128xf32, #tpu.memory_space<vmem>>, %arg15: memref<64x32xf32, #tpu.memory_space<vmem>>) attributes {dimension_semantics = [], scalar_prefetch = 0 : i64, scratch_operands = 2 : i64, tpu.core_type = #tpu.core_type<tc>} {
    %0 = tpu.iota {dimensions = array<i32: 1>} : vector<8x128xi32>
    %c64_i32 = arith.constant 64 : i32
    %1 = vector.broadcast %c64_i32 : i32 to vector<8x128xi32>
    %2 = arith.cmpi sge, %0, %1 : vector<8x128xi32>
    %c96_i32 = arith.constant 96 : i32
    %3 = vector.broadcast %c96_i32 : i32 to vector<8x128xi32>
    %4 = arith.cmpi slt, %0, %3 : vector<8x128xi32>
    %5 = arith.andi %2, %4 : vector<8x128xi1>
    %c0 = arith.constant 0 : index
    %c0_0 = arith.constant 0 : index
    %6 = vector.load %arg0[%c0, %c0_0] : memref<64x128xf32, #tpu.memory_space<vmem>>, vector<64x128xf32>
    %c0_1 = arith.constant 0 : index
    %c0_2 = arith.constant 0 : index
    %7 = vector.load %arg3[%c0_1, %c0_2] : memref<128x128xf32, #tpu.memory_space<vmem>>, vector<128x128xf32>
    %cst = arith.constant dense<0.000000e+00> : vector<64x128xf32>
    %8 = tpu.matmul %6, %7, %cst {dimension_numbers = #tpu.dot_dimension_numbers<[1], [0], [0], [1], [0, 0, 1, 1], [], []>} : vector<64x128xf32>, vector<128x128xf32>, vector<64x128xf32> -> vector<64x128xf32>
    %c0_3 = arith.constant 0 : index
    %c0_4 = arith.constant 0 : index
    %9 = vector.load %arg5[%c0_3, %c0_4] : memref<1x128xf32, #tpu.memory_space<vmem>>, vector<1x128xf32>
    %10 = vector.broadcast %9 : vector<1x128xf32> to vector<64x128xf32>
    %11 = arith.addf %8, %10 : vector<64x128xf32>
    %c0_5 = arith.constant 0 : index
    %c0_6 = arith.constant 0 : index
    %12 = vector.load %arg14[%c0_5, %c0_6] : memref<64x128xf32, #tpu.memory_space<vmem>>, vector<64x128xf32>
    tpu.vector_store %arg14[%c0_5, %c0_6], %11 {strides = array<i32>} : memref<64x128xf32, #tpu.memory_space<vmem>>, vector<64x128xf32>,
    %c0_7 = arith.constant 0 : index
    %c0_8 = arith.constant 0 : index
    %13 = vector.load %arg4[%c0_7, %c0_8] : memref<32x128xf32, #tpu.memory_space<vmem>>, vector<32x128xf32>
    %c0_9 = arith.constant 0 : index
    %c0_10 = arith.constant 0 : index
    %c0_11 = arith.constant 0 : index
    %14 = vector.load %arg1[%c0_9, %c0_10, %c0_11] : memref<2x8x32xf32, #tpu.memory_space<vmem>>, vector<1x8x32xf32>
    %15 = vector.shape_cast %14 : vector<1x8x32xf32> to vector<8x32xf32>
    %c0_12 = arith.constant 0 : index
    %c0_13 = arith.constant 0 : index
    %c0_14 = arith.constant 0 : index
    %16 = vector.load %arg2[%c0_12, %c0_13, %c0_14] : memref<2x8x32xf32, #tpu.memory_space<vmem>>, vector<1x8x32xf32>
    %17 = vector.shape_cast %16 : vector<1x8x32xf32> to vector<8x32xf32>
    %c0_i32 = arith.constant 0 : i32
    %c8_i32 = arith.constant 8 : i32
    %18 = arith.muli %c0_i32, %c8_i32 : i32
    %19 = tpu.assume_multiple %18, 8 : i32
    %20 = arith.index_cast %19 : i32 to index
    %c0_15 = arith.constant 0 : index
    %21 = vector.load %arg14[%20, %c0_15] : memref<64x128xf32, #tpu.memory_space<vmem>>, vector<8x128xf32>
    %cst_16 = arith.constant dense<0.000000e+00> : vector<8x128xf32>
    %22 = tpu.matmul %15, %13, %cst_16 {dimension_numbers = #tpu.dot_dimension_numbers<[1], [0], [0], [1], [0, 0, 1, 1], [], []>} : vector<8x32xf32>, vector<32x128xf32>, vector<8x128xf32> -> vector<8x128xf32>
    %23 = arith.addf %21, %22 : vector<8x128xf32>
    %24 = math.tanh %23 : vector<8x128xf32>
    %25 = arith.negf %23 : vector<8x128xf32>
    %26 = math.exp %25 : vector<8x128xf32>
    %cst_17 = arith.constant 1.000000e+00 : f32
    %27 = vector.broadcast %cst_17 : f32 to vector<8x128xf32>
    %28 = arith.addf %27, %26 : vector<8x128xf32>
    %29 = arith.divf %27, %28 : vector<8x128xf32>
    %30 = arith.select %5, %24, %29 : vector<8x128xi1>, vector<8x128xf32>
    %31 = vector.extract_strided_slice %30 {offsets = [0, 0], sizes = [8, 32], strides = [1, 1]} : vector<8x128xf32> to vector<8x32xf32>
    %32 = vector.extract_strided_slice %30 {offsets = [0, 32], sizes = [8, 32], strides = [1, 1]} : vector<8x128xf32> to vector<8x32xf32>
    %33 = vector.extract_strided_slice %30 {offsets = [0, 64], sizes = [8, 32], strides = [1, 1]} : vector<8x128xf32> to vector<8x32xf32>
    %34 = vector.extract_strided_slice %30 {offsets = [0, 96], sizes = [8, 32], strides = [1, 1]} : vector<8x128xf32> to vector<8x32xf32>
    %35 = arith.mulf %32, %17 : vector<8x32xf32>
    %36 = arith.mulf %31, %33 : vector<8x32xf32>
    %37 = arith.addf %35, %36 : vector<8x32xf32>
    %38 = math.tanh %37 : vector<8x32xf32>
    %39 = arith.mulf %34, %38 : vector<8x32xf32>
    %40 = arith.index_cast %19 : i32 to index
    %c0_18 = arith.constant 0 : index
    %41 = vector.load %arg15[%40, %c0_18] : memref<64x32xf32, #tpu.memory_space<vmem>>, vector<8x32xf32>
    tpu.vector_store %arg15[%40, %c0_18], %39 {strides = array<i32>} : memref<64x32xf32, #tpu.memory_space<vmem>>, vector<8x32xf32>,
    %c1_i32 = arith.constant 1 : i32
    %c8_i32_19 = arith.constant 8 : i32
    %42 = arith.muli %c1_i32, %c8_i32_19 : i32
    %43 = tpu.assume_multiple %42, 8 : i32
    %44 = arith.index_cast %43 : i32 to index
    %c0_20 = arith.constant 0 : index
    %45 = vector.load %arg14[%44, %c0_20] : memref<64x128xf32, #tpu.memory_space<vmem>>, vector<8x128xf32>
    %cst_21 = arith.constant dense<0.000000e+00> : vector<8x128xf32>
    %46 = tpu.matmul %39, %13, %cst_21 {dimension_numbers = #tpu.dot_dimension_numbers<[1], [0], [0], [1], [0, 0, 1, 1], [], []>} : vector<8x32xf32>, vector<32x128xf32>, vector<8x128xf32> -> vector<8x128xf32>
    %47 = arith.addf %45, %46 : vector<8x128xf32>
    %48 = math.tanh %47 : vector<8x128xf32>
    %49 = arith.negf %47 : vector<8x128xf32>
    %50 = math.exp %49 : vector<8x128xf32>
    %cst_22 = arith.constant 1.000000e+00 : f32
    %51 = vector.broadcast %cst_22 : f32 to vector<8x128xf32>
    %52 = arith.addf %51, %50 : vector<8x128xf32>
    %53 = arith.divf %51, %52 : vector<8x128xf32>
    %54 = arith.select %5, %48, %53 : vector<8x128xi1>, vector<8x128xf32>
    %55 = vector.extract_strided_slice %54 {offsets = [0, 0], sizes = [8, 32], strides = [1, 1]} : vector<8x128xf32> to vector<8x32xf32>
    %56 = vector.extract_strided_slice %54 {offsets = [0, 32], sizes = [8, 32], strides = [1, 1]} : vector<8x128xf32> to vector<8x32xf32>
    %57 = vector.extract_strided_slice %54 {offsets = [0, 64], sizes = [8, 32], strides = [1, 1]} : vector<8x128xf32> to vector<8x32xf32>
    %58 = vector.extract_strided_slice %54 {offsets = [0, 96], sizes = [8, 32], strides = [1, 1]} : vector<8x128xf32> to vector<8x32xf32>
    %59 = arith.mulf %56, %37 : vector<8x32xf32>
    %60 = arith.mulf %55, %57 : vector<8x32xf32>
    %61 = arith.addf %59, %60 : vector<8x32xf32>
    %62 = math.tanh %61 : vector<8x32xf32>
    %63 = arith.mulf %58, %62 : vector<8x32xf32>
    %64 = arith.index_cast %43 : i32 to index
    %c0_23 = arith.constant 0 : index
    %65 = vector.load %arg15[%64, %c0_23] : memref<64x32xf32, #tpu.memory_space<vmem>>, vector<8x32xf32>
    tpu.vector_store %arg15[%64, %c0_23], %63 {strides = array<i32>} : memref<64x32xf32, #tpu.memory_space<vmem>>, vector<8x32xf32>,
    %c2_i32 = arith.constant 2 : i32
    %c8_i32_24 = arith.constant 8 : i32
    %66 = arith.muli %c2_i32, %c8_i32_24 : i32
    %67 = tpu.assume_multiple %66, 8 : i32
    %68 = arith.index_cast %67 : i32 to index
    %c0_25 = arith.constant 0 : index
    %69 = vector.load %arg14[%68, %c0_25] : memref<64x128xf32, #tpu.memory_space<vmem>>, vector<8x128xf32>
    %cst_26 = arith.constant dense<0.000000e+00> : vector<8x128xf32>
    %70 = tpu.matmul %63, %13, %cst_26 {dimension_numbers = #tpu.dot_dimension_numbers<[1], [0], [0], [1], [0, 0, 1, 1], [], []>} : vector<8x32xf32>, vector<32x128xf32>, vector<8x128xf32> -> vector<8x128xf32>
    %71 = arith.addf %69, %70 : vector<8x128xf32>
    %72 = math.tanh %71 : vector<8x128xf32>
    %73 = arith.negf %71 : vector<8x128xf32>
    %74 = math.exp %73 : vector<8x128xf32>
    %cst_27 = arith.constant 1.000000e+00 : f32
    %75 = vector.broadcast %cst_27 : f32 to vector<8x128xf32>
    %76 = arith.addf %75, %74 : vector<8x128xf32>
    %77 = arith.divf %75, %76 : vector<8x128xf32>
    %78 = arith.select %5, %72, %77 : vector<8x128xi1>, vector<8x128xf32>
    %79 = vector.extract_strided_slice %78 {offsets = [0, 0], sizes = [8, 32], strides = [1, 1]} : vector<8x128xf32> to vector<8x32xf32>
    %80 = vector.extract_strided_slice %78 {offsets = [0, 32], sizes = [8, 32], strides = [1, 1]} : vector<8x128xf32> to vector<8x32xf32>
    %81 = vector.extract_strided_slice %78 {offsets = [0, 64], sizes = [8, 32], strides = [1, 1]} : vector<8x128xf32> to vector<8x32xf32>
    %82 = vector.extract_strided_slice %78 {offsets = [0, 96], sizes = [8, 32], strides = [1, 1]} : vector<8x128xf32> to vector<8x32xf32>
    %83 = arith.mulf %80, %61 : vector<8x32xf32>
    %84 = arith.mulf %79, %81 : vector<8x32xf32>
    %85 = arith.addf %83, %84 : vector<8x32xf32>
    %86 = math.tanh %85 : vector<8x32xf32>
    %87 = arith.mulf %82, %86 : vector<8x32xf32>
    %88 = arith.index_cast %67 : i32 to index
    %c0_28 = arith.constant 0 : index
    %89 = vector.load %arg15[%88, %c0_28] : memref<64x32xf32, #tpu.memory_space<vmem>>, vector<8x32xf32>
    tpu.vector_store %arg15[%88, %c0_28], %87 {strides = array<i32>} : memref<64x32xf32, #tpu.memory_space<vmem>>, vector<8x32xf32>,
    %c3_i32 = arith.constant 3 : i32
    %c8_i32_29 = arith.constant 8 : i32
    %90 = arith.muli %c3_i32, %c8_i32_29 : i32
    %91 = tpu.assume_multiple %90, 8 : i32
    %92 = arith.index_cast %91 : i32 to index
    %c0_30 = arith.constant 0 : index
    %93 = vector.load %arg14[%92, %c0_30] : memref<64x128xf32, #tpu.memory_space<vmem>>, vector<8x128xf32>
    %cst_31 = arith.constant dense<0.000000e+00> : vector<8x128xf32>
    %94 = tpu.matmul %87, %13, %cst_31 {dimension_numbers = #tpu.dot_dimension_numbers<[1], [0], [0], [1], [0, 0, 1, 1], [], []>} : vector<8x32xf32>, vector<32x128xf32>, vector<8x128xf32> -> vector<8x128xf32>
    %95 = arith.addf %93, %94 : vector<8x128xf32>
    %96 = math.tanh %95 : vector<8x128xf32>
    %97 = arith.negf %95 : vector<8x128xf32>
    %98 = math.exp %97 : vector<8x128xf32>
    %cst_32 = arith.constant 1.000000e+00 : f32
    %99 = vector.broadcast %cst_32 : f32 to vector<8x128xf32>
    %100 = arith.addf %99, %98 : vector<8x128xf32>
    %101 = arith.divf %99, %100 : vector<8x128xf32>
    %102 = arith.select %5, %96, %101 : vector<8x128xi1>, vector<8x128xf32>
    %103 = vector.extract_strided_slice %102 {offsets = [0, 0], sizes = [8, 32], strides = [1, 1]} : vector<8x128xf32> to vector<8x32xf32>
    %104 = vector.extract_strided_slice %102 {offsets = [0, 32], sizes = [8, 32], strides = [1, 1]} : vector<8x128xf32> to vector<8x32xf32>
    %105 = vector.extract_strided_slice %102 {offsets = [0, 64], sizes = [8, 32], strides = [1, 1]} : vector<8x128xf32> to vector<8x32xf32>
    %106 = vector.extract_strided_slice %102 {offsets = [0, 96], sizes = [8, 32], strides = [1, 1]} : vector<8x128xf32> to vector<8x32xf32>
    %107 = arith.mulf %104, %85 : vector<8x32xf32>
    %108 = arith.mulf %103, %105 : vector<8x32xf32>
    %109 = arith.addf %107, %108 : vector<8x32xf32>
    %110 = math.tanh %109 : vector<8x32xf32>
    %111 = arith.mulf %106, %110 : vector<8x32xf32>
    %112 = arith.index_cast %91 : i32 to index
    %c0_33 = arith.constant 0 : index
    %113 = vector.load %arg15[%112, %c0_33] : memref<64x32xf32, #tpu.memory_space<vmem>>, vector<8x32xf32>
    tpu.vector_store %arg15[%112, %c0_33], %111 {strides = array<i32>} : memref<64x32xf32, #tpu.memory_space<vmem>>, vector<8x32xf32>,
    %c4_i32 = arith.constant 4 : i32
    %c8_i32_34 = arith.constant 8 : i32
    %114 = arith.muli %c4_i32, %c8_i32_34 : i32
    %115 = tpu.assume_multiple %114, 8 : i32
    %116 = arith.index_cast %115 : i32 to index
    %c0_35 = arith.constant 0 : index
    %117 = vector.load %arg14[%116, %c0_35] : memref<64x128xf32, #tpu.memory_space<vmem>>, vector<8x128xf32>
    %cst_36 = arith.constant dense<0.000000e+00> : vector<8x128xf32>
    %118 = tpu.matmul %111, %13, %cst_36 {dimension_numbers = #tpu.dot_dimension_numbers<[1], [0], [0], [1], [0, 0, 1, 1], [], []>} : vector<8x32xf32>, vector<32x128xf32>, vector<8x128xf32> -> vector<8x128xf32>
    %119 = arith.addf %117, %118 : vector<8x128xf32>
    %120 = math.tanh %119 : vector<8x128xf32>
    %121 = arith.negf %119 : vector<8x128xf32>
    %122 = math.exp %121 : vector<8x128xf32>
    %cst_37 = arith.constant 1.000000e+00 : f32
    %123 = vector.broadcast %cst_37 : f32 to vector<8x128xf32>
    %124 = arith.addf %123, %122 : vector<8x128xf32>
    %125 = arith.divf %123, %124 : vector<8x128xf32>
    %126 = arith.select %5, %120, %125 : vector<8x128xi1>, vector<8x128xf32>
    %127 = vector.extract_strided_slice %126 {offsets = [0, 0], sizes = [8, 32], strides = [1, 1]} : vector<8x128xf32> to vector<8x32xf32>
    %128 = vector.extract_strided_slice %126 {offsets = [0, 32], sizes = [8, 32], strides = [1, 1]} : vector<8x128xf32> to vector<8x32xf32>
    %129 = vector.extract_strided_slice %126 {offsets = [0, 64], sizes = [8, 32], strides = [1, 1]} : vector<8x128xf32> to vector<8x32xf32>
    %130 = vector.extract_strided_slice %126 {offsets = [0, 96], sizes = [8, 32], strides = [1, 1]} : vector<8x128xf32> to vector<8x32xf32>
    %131 = arith.mulf %128, %109 : vector<8x32xf32>
    %132 = arith.mulf %127, %129 : vector<8x32xf32>
    %133 = arith.addf %131, %132 : vector<8x32xf32>
    %134 = math.tanh %133 : vector<8x32xf32>
    %135 = arith.mulf %130, %134 : vector<8x32xf32>
    %136 = arith.index_cast %115 : i32 to index
    %c0_38 = arith.constant 0 : index
    %137 = vector.load %arg15[%136, %c0_38] : memref<64x32xf32, #tpu.memory_space<vmem>>, vector<8x32xf32>
    tpu.vector_store %arg15[%136, %c0_38], %135 {strides = array<i32>} : memref<64x32xf32, #tpu.memory_space<vmem>>, vector<8x32xf32>,
    %c5_i32 = arith.constant 5 : i32
    %c8_i32_39 = arith.constant 8 : i32
    %138 = arith.muli %c5_i32, %c8_i32_39 : i32
    %139 = tpu.assume_multiple %138, 8 : i32
    %140 = arith.index_cast %139 : i32 to index
    %c0_40 = arith.constant 0 : index
    %141 = vector.load %arg14[%140, %c0_40] : memref<64x128xf32, #tpu.memory_space<vmem>>, vector<8x128xf32>
    %cst_41 = arith.constant dense<0.000000e+00> : vector<8x128xf32>
    %142 = tpu.matmul %135, %13, %cst_41 {dimension_numbers = #tpu.dot_dimension_numbers<[1], [0], [0], [1], [0, 0, 1, 1], [], []>} : vector<8x32xf32>, vector<32x128xf32>, vector<8x128xf32> -> vector<8x128xf32>
    %143 = arith.addf %141, %142 : vector<8x128xf32>
    %144 = math.tanh %143 : vector<8x128xf32>
    %145 = arith.negf %143 : vector<8x128xf32>
    %146 = math.exp %145 : vector<8x128xf32>
    %cst_42 = arith.constant 1.000000e+00 : f32
    %147 = vector.broadcast %cst_42 : f32 to vector<8x128xf32>
    %148 = arith.addf %147, %146 : vector<8x128xf32>
    %149 = arith.divf %147, %148 : vector<8x128xf32>
    %150 = arith.select %5, %144, %149 : vector<8x128xi1>, vector<8x128xf32>
    %151 = vector.extract_strided_slice %150 {offsets = [0, 0], sizes = [8, 32], strides = [1, 1]} : vector<8x128xf32> to vector<8x32xf32>
    %152 = vector.extract_strided_slice %150 {offsets = [0, 32], sizes = [8, 32], strides = [1, 1]} : vector<8x128xf32> to vector<8x32xf32>
    %153 = vector.extract_strided_slice %150 {offsets = [0, 64], sizes = [8, 32], strides = [1, 1]} : vector<8x128xf32> to vector<8x32xf32>
    %154 = vector.extract_strided_slice %150 {offsets = [0, 96], sizes = [8, 32], strides = [1, 1]} : vector<8x128xf32> to vector<8x32xf32>
    %155 = arith.mulf %152, %133 : vector<8x32xf32>
    %156 = arith.mulf %151, %153 : vector<8x32xf32>
    %157 = arith.addf %155, %156 : vector<8x32xf32>
    %158 = math.tanh %157 : vector<8x32xf32>
    %159 = arith.mulf %154, %158 : vector<8x32xf32>
    %160 = arith.index_cast %139 : i32 to index
    %c0_43 = arith.constant 0 : index
    %161 = vector.load %arg15[%160, %c0_43] : memref<64x32xf32, #tpu.memory_space<vmem>>, vector<8x32xf32>
    tpu.vector_store %arg15[%160, %c0_43], %159 {strides = array<i32>} : memref<64x32xf32, #tpu.memory_space<vmem>>, vector<8x32xf32>,
    %c6_i32 = arith.constant 6 : i32
    %c8_i32_44 = arith.constant 8 : i32
    %162 = arith.muli %c6_i32, %c8_i32_44 : i32
    %163 = tpu.assume_multiple %162, 8 : i32
    %164 = arith.index_cast %163 : i32 to index
    %c0_45 = arith.constant 0 : index
    %165 = vector.load %arg14[%164, %c0_45] : memref<64x128xf32, #tpu.memory_space<vmem>>, vector<8x128xf32>
    %cst_46 = arith.constant dense<0.000000e+00> : vector<8x128xf32>
    %166 = tpu.matmul %159, %13, %cst_46 {dimension_numbers = #tpu.dot_dimension_numbers<[1], [0], [0], [1], [0, 0, 1, 1], [], []>} : vector<8x32xf32>, vector<32x128xf32>, vector<8x128xf32> -> vector<8x128xf32>
    %167 = arith.addf %165, %166 : vector<8x128xf32>
    %168 = math.tanh %167 : vector<8x128xf32>
    %169 = arith.negf %167 : vector<8x128xf32>
    %170 = math.exp %169 : vector<8x128xf32>
    %cst_47 = arith.constant 1.000000e+00 : f32
    %171 = vector.broadcast %cst_47 : f32 to vector<8x128xf32>
    %172 = arith.addf %171, %170 : vector<8x128xf32>
    %173 = arith.divf %171, %172 : vector<8x128xf32>
    %174 = arith.select %5, %168, %173 : vector<8x128xi1>, vector<8x128xf32>
    %175 = vector.extract_strided_slice %174 {offsets = [0, 0], sizes = [8, 32], strides = [1, 1]} : vector<8x128xf32> to vector<8x32xf32>
    %176 = vector.extract_strided_slice %174 {offsets = [0, 32], sizes = [8, 32], strides = [1, 1]} : vector<8x128xf32> to vector<8x32xf32>
    %177 = vector.extract_strided_slice %174 {offsets = [0, 64], sizes = [8, 32], strides = [1, 1]} : vector<8x128xf32> to vector<8x32xf32>
    %178 = vector.extract_strided_slice %174 {offsets = [0, 96], sizes = [8, 32], strides = [1, 1]} : vector<8x128xf32> to vector<8x32xf32>
    %179 = arith.mulf %176, %157 : vector<8x32xf32>
    %180 = arith.mulf %175, %177 : vector<8x32xf32>
    %181 = arith.addf %179, %180 : vector<8x32xf32>
    %182 = math.tanh %181 : vector<8x32xf32>
    %183 = arith.mulf %178, %182 : vector<8x32xf32>
    %184 = arith.index_cast %163 : i32 to index
    %c0_48 = arith.constant 0 : index
    %185 = vector.load %arg15[%184, %c0_48] : memref<64x32xf32, #tpu.memory_space<vmem>>, vector<8x32xf32>
    tpu.vector_store %arg15[%184, %c0_48], %183 {strides = array<i32>} : memref<64x32xf32, #tpu.memory_space<vmem>>, vector<8x32xf32>,
    %c7_i32 = arith.constant 7 : i32
    %c8_i32_49 = arith.constant 8 : i32
    %186 = arith.muli %c7_i32, %c8_i32_49 : i32
    %187 = tpu.assume_multiple %186, 8 : i32
    %188 = arith.index_cast %187 : i32 to index
    %c0_50 = arith.constant 0 : index
    %189 = vector.load %arg14[%188, %c0_50] : memref<64x128xf32, #tpu.memory_space<vmem>>, vector<8x128xf32>
    %cst_51 = arith.constant dense<0.000000e+00> : vector<8x128xf32>
    %190 = tpu.matmul %183, %13, %cst_51 {dimension_numbers = #tpu.dot_dimension_numbers<[1], [0], [0], [1], [0, 0, 1, 1], [], []>} : vector<8x32xf32>, vector<32x128xf32>, vector<8x128xf32> -> vector<8x128xf32>
    %191 = arith.addf %189, %190 : vector<8x128xf32>
    %192 = math.tanh %191 : vector<8x128xf32>
    %193 = arith.negf %191 : vector<8x128xf32>
    %194 = math.exp %193 : vector<8x128xf32>
    %cst_52 = arith.constant 1.000000e+00 : f32
    %195 = vector.broadcast %cst_52 : f32 to vector<8x128xf32>
    %196 = arith.addf %195, %194 : vector<8x128xf32>
    %197 = arith.divf %195, %196 : vector<8x128xf32>
    %198 = arith.select %5, %192, %197 : vector<8x128xi1>, vector<8x128xf32>
    %199 = vector.extract_strided_slice %198 {offsets = [0, 0], sizes = [8, 32], strides = [1, 1]} : vector<8x128xf32> to vector<8x32xf32>
    %200 = vector.extract_strided_slice %198 {offsets = [0, 32], sizes = [8, 32], strides = [1, 1]} : vector<8x128xf32> to vector<8x32xf32>
    %201 = vector.extract_strided_slice %198 {offsets = [0, 64], sizes = [8, 32], strides = [1, 1]} : vector<8x128xf32> to vector<8x32xf32>
    %202 = vector.extract_strided_slice %198 {offsets = [0, 96], sizes = [8, 32], strides = [1, 1]} : vector<8x128xf32> to vector<8x32xf32>
    %203 = arith.mulf %200, %181 : vector<8x32xf32>
    %204 = arith.mulf %199, %201 : vector<8x32xf32>
    %205 = arith.addf %203, %204 : vector<8x32xf32>
    %206 = math.tanh %205 : vector<8x32xf32>
    %207 = arith.mulf %202, %206 : vector<8x32xf32>
    %208 = arith.index_cast %187 : i32 to index
    %c0_53 = arith.constant 0 : index
    %209 = vector.load %arg15[%208, %c0_53] : memref<64x32xf32, #tpu.memory_space<vmem>>, vector<8x32xf32>
    tpu.vector_store %arg15[%208, %c0_53], %207 {strides = array<i32>} : memref<64x32xf32, #tpu.memory_space<vmem>>, vector<8x32xf32>,
    %c8_i32_54 = arith.constant 8 : i32
    %c0_55 = arith.constant 0 : index
    %c0_56 = arith.constant 0 : index
    %c0_57 = arith.constant 0 : index
    %210 = vector.load %arg12[%c0_55, %c0_56, %c0_57] : memref<2x8x32xf32, #tpu.memory_space<vmem>>, vector<1x8x32xf32>
    %211 = vector.shape_cast %210 : vector<1x8x32xf32> to vector<8x32xf32>
    %212 = vector.shape_cast %207 : vector<8x32xf32> to vector<1x8x32xf32>
    tpu.vector_store %arg12[%c0_55, %c0_56, %c0_57], %212 {strides = array<i32>} : memref<2x8x32xf32, #tpu.memory_space<vmem>>, vector<1x8x32xf32>,
    %c0_58 = arith.constant 0 : index
    %c0_59 = arith.constant 0 : index
    %c0_60 = arith.constant 0 : index
    %213 = vector.load %arg13[%c0_58, %c0_59, %c0_60] : memref<2x8x32xf32, #tpu.memory_space<vmem>>, vector<1x8x32xf32>
    %214 = vector.shape_cast %213 : vector<1x8x32xf32> to vector<8x32xf32>
    %215 = vector.shape_cast %205 : vector<8x32xf32> to vector<1x8x32xf32>
    tpu.vector_store %arg13[%c0_58, %c0_59, %c0_60], %215 {strides = array<i32>} : memref<2x8x32xf32, #tpu.memory_space<vmem>>, vector<1x8x32xf32>,
    %c0_61 = arith.constant 0 : index
    %c0_62 = arith.constant 0 : index
    %216 = vector.load %arg15[%c0_61, %c0_62] : memref<64x32xf32, #tpu.memory_space<vmem>>, vector<64x32xf32>
    %c0_63 = arith.constant 0 : index
    %c0_64 = arith.constant 0 : index
    %217 = vector.load %arg6[%c0_63, %c0_64] : memref<32x128xf32, #tpu.memory_space<vmem>>, vector<32x128xf32>
    %cst_65 = arith.constant dense<0.000000e+00> : vector<64x128xf32>
    %218 = tpu.matmul %216, %217, %cst_65 {dimension_numbers = #tpu.dot_dimension_numbers<[1], [0], [0], [1], [0, 0, 1, 1], [], []>} : vector<64x32xf32>, vector<32x128xf32>, vector<64x128xf32> -> vector<64x128xf32>
    %c0_66 = arith.constant 0 : index
    %c0_67 = arith.constant 0 : index
    %219 = vector.load %arg8[%c0_66, %c0_67] : memref<1x128xf32, #tpu.memory_space<vmem>>, vector<1x128xf32>
    %220 = vector.broadcast %219 : vector<1x128xf32> to vector<64x128xf32>
    %221 = arith.addf %218, %220 : vector<64x128xf32>
    %c0_68 = arith.constant 0 : index
    %c0_69 = arith.constant 0 : index
    %222 = vector.load %arg14[%c0_68, %c0_69] : memref<64x128xf32, #tpu.memory_space<vmem>>, vector<64x128xf32>
    tpu.vector_store %arg14[%c0_68, %c0_69], %221 {strides = array<i32>} : memref<64x128xf32, #tpu.memory_space<vmem>>, vector<64x128xf32>,
    %c0_70 = arith.constant 0 : index
    %c0_71 = arith.constant 0 : index
    %223 = vector.load %arg7[%c0_70, %c0_71] : memref<32x128xf32, #tpu.memory_space<vmem>>, vector<32x128xf32>
    %c1 = arith.constant 1 : index
    %c0_72 = arith.constant 0 : index
    %c0_73 = arith.constant 0 : index
    %224 = vector.load %arg1[%c1, %c0_72, %c0_73] : memref<2x8x32xf32, #tpu.memory_space<vmem>>, vector<1x8x32xf32>
    %225 = vector.shape_cast %224 : vector<1x8x32xf32> to vector<8x32xf32>
    %c1_74 = arith.constant 1 : index
    %c0_75 = arith.constant 0 : index
    %c0_76 = arith.constant 0 : index
    %226 = vector.load %arg2[%c1_74, %c0_75, %c0_76] : memref<2x8x32xf32, #tpu.memory_space<vmem>>, vector<1x8x32xf32>
    %227 = vector.shape_cast %226 : vector<1x8x32xf32> to vector<8x32xf32>
    %c0_i32_77 = arith.constant 0 : i32
    %c8_i32_78 = arith.constant 8 : i32
    %228 = arith.muli %c0_i32_77, %c8_i32_78 : i32
    %229 = tpu.assume_multiple %228, 8 : i32
    %230 = arith.index_cast %229 : i32 to index
    %c0_79 = arith.constant 0 : index
    %231 = vector.load %arg14[%230, %c0_79] : memref<64x128xf32, #tpu.memory_space<vmem>>, vector<8x128xf32>
    %cst_80 = arith.constant dense<0.000000e+00> : vector<8x128xf32>
    %232 = tpu.matmul %225, %223, %cst_80 {dimension_numbers = #tpu.dot_dimension_numbers<[1], [0], [0], [1], [0, 0, 1, 1], [], []>} : vector<8x32xf32>, vector<32x128xf32>, vector<8x128xf32> -> vector<8x128xf32>
    %233 = arith.addf %231, %232 : vector<8x128xf32>
    %234 = math.tanh %233 : vector<8x128xf32>
    %235 = arith.negf %233 : vector<8x128xf32>
    %236 = math.exp %235 : vector<8x128xf32>
    %cst_81 = arith.constant 1.000000e+00 : f32
    %237 = vector.broadcast %cst_81 : f32 to vector<8x128xf32>
    %238 = arith.addf %237, %236 : vector<8x128xf32>
    %239 = arith.divf %237, %238 : vector<8x128xf32>
    %240 = arith.select %5, %234, %239 : vector<8x128xi1>, vector<8x128xf32>
    %241 = vector.extract_strided_slice %240 {offsets = [0, 0], sizes = [8, 32], strides = [1, 1]} : vector<8x128xf32> to vector<8x32xf32>
    %242 = vector.extract_strided_slice %240 {offsets = [0, 32], sizes = [8, 32], strides = [1, 1]} : vector<8x128xf32> to vector<8x32xf32>
    %243 = vector.extract_strided_slice %240 {offsets = [0, 64], sizes = [8, 32], strides = [1, 1]} : vector<8x128xf32> to vector<8x32xf32>
    %244 = vector.extract_strided_slice %240 {offsets = [0, 96], sizes = [8, 32], strides = [1, 1]} : vector<8x128xf32> to vector<8x32xf32>
    %245 = arith.mulf %242, %227 : vector<8x32xf32>
    %246 = arith.mulf %241, %243 : vector<8x32xf32>
    %247 = arith.addf %245, %246 : vector<8x32xf32>
    %248 = math.tanh %247 : vector<8x32xf32>
    %249 = arith.mulf %244, %248 : vector<8x32xf32>
    %250 = arith.index_cast %229 : i32 to index
    %c0_82 = arith.constant 0 : index
    %251 = vector.load %arg15[%250, %c0_82] : memref<64x32xf32, #tpu.memory_space<vmem>>, vector<8x32xf32>
    tpu.vector_store %arg15[%250, %c0_82], %249 {strides = array<i32>} : memref<64x32xf32, #tpu.memory_space<vmem>>, vector<8x32xf32>,
    %c1_i32_83 = arith.constant 1 : i32
    %c8_i32_84 = arith.constant 8 : i32
    %252 = arith.muli %c1_i32_83, %c8_i32_84 : i32
    %253 = tpu.assume_multiple %252, 8 : i32
    %254 = arith.index_cast %253 : i32 to index
    %c0_85 = arith.constant 0 : index
    %255 = vector.load %arg14[%254, %c0_85] : memref<64x128xf32, #tpu.memory_space<vmem>>, vector<8x128xf32>
    %cst_86 = arith.constant dense<0.000000e+00> : vector<8x128xf32>
    %256 = tpu.matmul %249, %223, %cst_86 {dimension_numbers = #tpu.dot_dimension_numbers<[1], [0], [0], [1], [0, 0, 1, 1], [], []>} : vector<8x32xf32>, vector<32x128xf32>, vector<8x128xf32> -> vector<8x128xf32>
    %257 = arith.addf %255, %256 : vector<8x128xf32>
    %258 = math.tanh %257 : vector<8x128xf32>
    %259 = arith.negf %257 : vector<8x128xf32>
    %260 = math.exp %259 : vector<8x128xf32>
    %cst_87 = arith.constant 1.000000e+00 : f32
    %261 = vector.broadcast %cst_87 : f32 to vector<8x128xf32>
    %262 = arith.addf %261, %260 : vector<8x128xf32>
    %263 = arith.divf %261, %262 : vector<8x128xf32>
    %264 = arith.select %5, %258, %263 : vector<8x128xi1>, vector<8x128xf32>
    %265 = vector.extract_strided_slice %264 {offsets = [0, 0], sizes = [8, 32], strides = [1, 1]} : vector<8x128xf32> to vector<8x32xf32>
    %266 = vector.extract_strided_slice %264 {offsets = [0, 32], sizes = [8, 32], strides = [1, 1]} : vector<8x128xf32> to vector<8x32xf32>
    %267 = vector.extract_strided_slice %264 {offsets = [0, 64], sizes = [8, 32], strides = [1, 1]} : vector<8x128xf32> to vector<8x32xf32>
    %268 = vector.extract_strided_slice %264 {offsets = [0, 96], sizes = [8, 32], strides = [1, 1]} : vector<8x128xf32> to vector<8x32xf32>
    %269 = arith.mulf %266, %247 : vector<8x32xf32>
    %270 = arith.mulf %265, %267 : vector<8x32xf32>
    %271 = arith.addf %269, %270 : vector<8x32xf32>
    %272 = math.tanh %271 : vector<8x32xf32>
    %273 = arith.mulf %268, %272 : vector<8x32xf32>
    %274 = arith.index_cast %253 : i32 to index
    %c0_88 = arith.constant 0 : index
    %275 = vector.load %arg15[%274, %c0_88] : memref<64x32xf32, #tpu.memory_space<vmem>>, vector<8x32xf32>
    tpu.vector_store %arg15[%274, %c0_88], %273 {strides = array<i32>} : memref<64x32xf32, #tpu.memory_space<vmem>>, vector<8x32xf32>,
    %c2_i32_89 = arith.constant 2 : i32
    %c8_i32_90 = arith.constant 8 : i32
    %276 = arith.muli %c2_i32_89, %c8_i32_90 : i32
    %277 = tpu.assume_multiple %276, 8 : i32
    %278 = arith.index_cast %277 : i32 to index
    %c0_91 = arith.constant 0 : index
    %279 = vector.load %arg14[%278, %c0_91] : memref<64x128xf32, #tpu.memory_space<vmem>>, vector<8x128xf32>
    %cst_92 = arith.constant dense<0.000000e+00> : vector<8x128xf32>
    %280 = tpu.matmul %273, %223, %cst_92 {dimension_numbers = #tpu.dot_dimension_numbers<[1], [0], [0], [1], [0, 0, 1, 1], [], []>} : vector<8x32xf32>, vector<32x128xf32>, vector<8x128xf32> -> vector<8x128xf32>
    %281 = arith.addf %279, %280 : vector<8x128xf32>
    %282 = math.tanh %281 : vector<8x128xf32>
    %283 = arith.negf %281 : vector<8x128xf32>
    %284 = math.exp %283 : vector<8x128xf32>
    %cst_93 = arith.constant 1.000000e+00 : f32
    %285 = vector.broadcast %cst_93 : f32 to vector<8x128xf32>
    %286 = arith.addf %285, %284 : vector<8x128xf32>
    %287 = arith.divf %285, %286 : vector<8x128xf32>
    %288 = arith.select %5, %282, %287 : vector<8x128xi1>, vector<8x128xf32>
    %289 = vector.extract_strided_slice %288 {offsets = [0, 0], sizes = [8, 32], strides = [1, 1]} : vector<8x128xf32> to vector<8x32xf32>
    %290 = vector.extract_strided_slice %288 {offsets = [0, 32], sizes = [8, 32], strides = [1, 1]} : vector<8x128xf32> to vector<8x32xf32>
    %291 = vector.extract_strided_slice %288 {offsets = [0, 64], sizes = [8, 32], strides = [1, 1]} : vector<8x128xf32> to vector<8x32xf32>
    %292 = vector.extract_strided_slice %288 {offsets = [0, 96], sizes = [8, 32], strides = [1, 1]} : vector<8x128xf32> to vector<8x32xf32>
    %293 = arith.mulf %290, %271 : vector<8x32xf32>
    %294 = arith.mulf %289, %291 : vector<8x32xf32>
    %295 = arith.addf %293, %294 : vector<8x32xf32>
    %296 = math.tanh %295 : vector<8x32xf32>
    %297 = arith.mulf %292, %296 : vector<8x32xf32>
    %298 = arith.index_cast %277 : i32 to index
    %c0_94 = arith.constant 0 : index
    %299 = vector.load %arg15[%298, %c0_94] : memref<64x32xf32, #tpu.memory_space<vmem>>, vector<8x32xf32>
    tpu.vector_store %arg15[%298, %c0_94], %297 {strides = array<i32>} : memref<64x32xf32, #tpu.memory_space<vmem>>, vector<8x32xf32>,
    %c3_i32_95 = arith.constant 3 : i32
    %c8_i32_96 = arith.constant 8 : i32
    %300 = arith.muli %c3_i32_95, %c8_i32_96 : i32
    %301 = tpu.assume_multiple %300, 8 : i32
    %302 = arith.index_cast %301 : i32 to index
    %c0_97 = arith.constant 0 : index
    %303 = vector.load %arg14[%302, %c0_97] : memref<64x128xf32, #tpu.memory_space<vmem>>, vector<8x128xf32>
    %cst_98 = arith.constant dense<0.000000e+00> : vector<8x128xf32>
    %304 = tpu.matmul %297, %223, %cst_98 {dimension_numbers = #tpu.dot_dimension_numbers<[1], [0], [0], [1], [0, 0, 1, 1], [], []>} : vector<8x32xf32>, vector<32x128xf32>, vector<8x128xf32> -> vector<8x128xf32>
    %305 = arith.addf %303, %304 : vector<8x128xf32>
    %306 = math.tanh %305 : vector<8x128xf32>
    %307 = arith.negf %305 : vector<8x128xf32>
    %308 = math.exp %307 : vector<8x128xf32>
    %cst_99 = arith.constant 1.000000e+00 : f32
    %309 = vector.broadcast %cst_99 : f32 to vector<8x128xf32>
    %310 = arith.addf %309, %308 : vector<8x128xf32>
    %311 = arith.divf %309, %310 : vector<8x128xf32>
    %312 = arith.select %5, %306, %311 : vector<8x128xi1>, vector<8x128xf32>
    %313 = vector.extract_strided_slice %312 {offsets = [0, 0], sizes = [8, 32], strides = [1, 1]} : vector<8x128xf32> to vector<8x32xf32>
    %314 = vector.extract_strided_slice %312 {offsets = [0, 32], sizes = [8, 32], strides = [1, 1]} : vector<8x128xf32> to vector<8x32xf32>
    %315 = vector.extract_strided_slice %312 {offsets = [0, 64], sizes = [8, 32], strides = [1, 1]} : vector<8x128xf32> to vector<8x32xf32>
    %316 = vector.extract_strided_slice %312 {offsets = [0, 96], sizes = [8, 32], strides = [1, 1]} : vector<8x128xf32> to vector<8x32xf32>
    %317 = arith.mulf %314, %295 : vector<8x32xf32>
    %318 = arith.mulf %313, %315 : vector<8x32xf32>
    %319 = arith.addf %317, %318 : vector<8x32xf32>
    %320 = math.tanh %319 : vector<8x32xf32>
    %321 = arith.mulf %316, %320 : vector<8x32xf32>
    %322 = arith.index_cast %301 : i32 to index
    %c0_100 = arith.constant 0 : index
    %323 = vector.load %arg15[%322, %c0_100] : memref<64x32xf32, #tpu.memory_space<vmem>>, vector<8x32xf32>
    tpu.vector_store %arg15[%322, %c0_100], %321 {strides = array<i32>} : memref<64x32xf32, #tpu.memory_space<vmem>>, vector<8x32xf32>,
    %c4_i32_101 = arith.constant 4 : i32
    %c8_i32_102 = arith.constant 8 : i32
    %324 = arith.muli %c4_i32_101, %c8_i32_102 : i32
    %325 = tpu.assume_multiple %324, 8 : i32
    %326 = arith.index_cast %325 : i32 to index
    %c0_103 = arith.constant 0 : index
    %327 = vector.load %arg14[%326, %c0_103] : memref<64x128xf32, #tpu.memory_space<vmem>>, vector<8x128xf32>
    %cst_104 = arith.constant dense<0.000000e+00> : vector<8x128xf32>
    %328 = tpu.matmul %321, %223, %cst_104 {dimension_numbers = #tpu.dot_dimension_numbers<[1], [0], [0], [1], [0, 0, 1, 1], [], []>} : vector<8x32xf32>, vector<32x128xf32>, vector<8x128xf32> -> vector<8x128xf32>
    %329 = arith.addf %327, %328 : vector<8x128xf32>
    %330 = math.tanh %329 : vector<8x128xf32>
    %331 = arith.negf %329 : vector<8x128xf32>
    %332 = math.exp %331 : vector<8x128xf32>
    %cst_105 = arith.constant 1.000000e+00 : f32
    %333 = vector.broadcast %cst_105 : f32 to vector<8x128xf32>
    %334 = arith.addf %333, %332 : vector<8x128xf32>
    %335 = arith.divf %333, %334 : vector<8x128xf32>
    %336 = arith.select %5, %330, %335 : vector<8x128xi1>, vector<8x128xf32>
    %337 = vector.extract_strided_slice %336 {offsets = [0, 0], sizes = [8, 32], strides = [1, 1]} : vector<8x128xf32> to vector<8x32xf32>
    %338 = vector.extract_strided_slice %336 {offsets = [0, 32], sizes = [8, 32], strides = [1, 1]} : vector<8x128xf32> to vector<8x32xf32>
    %339 = vector.extract_strided_slice %336 {offsets = [0, 64], sizes = [8, 32], strides = [1, 1]} : vector<8x128xf32> to vector<8x32xf32>
    %340 = vector.extract_strided_slice %336 {offsets = [0, 96], sizes = [8, 32], strides = [1, 1]} : vector<8x128xf32> to vector<8x32xf32>
    %341 = arith.mulf %338, %319 : vector<8x32xf32>
    %342 = arith.mulf %337, %339 : vector<8x32xf32>
    %343 = arith.addf %341, %342 : vector<8x32xf32>
    %344 = math.tanh %343 : vector<8x32xf32>
    %345 = arith.mulf %340, %344 : vector<8x32xf32>
    %346 = arith.index_cast %325 : i32 to index
    %c0_106 = arith.constant 0 : index
    %347 = vector.load %arg15[%346, %c0_106] : memref<64x32xf32, #tpu.memory_space<vmem>>, vector<8x32xf32>
    tpu.vector_store %arg15[%346, %c0_106], %345 {strides = array<i32>} : memref<64x32xf32, #tpu.memory_space<vmem>>, vector<8x32xf32>,
    %c5_i32_107 = arith.constant 5 : i32
    %c8_i32_108 = arith.constant 8 : i32
    %348 = arith.muli %c5_i32_107, %c8_i32_108 : i32
    %349 = tpu.assume_multiple %348, 8 : i32
    %350 = arith.index_cast %349 : i32 to index
    %c0_109 = arith.constant 0 : index
    %351 = vector.load %arg14[%350, %c0_109] : memref<64x128xf32, #tpu.memory_space<vmem>>, vector<8x128xf32>
    %cst_110 = arith.constant dense<0.000000e+00> : vector<8x128xf32>
    %352 = tpu.matmul %345, %223, %cst_110 {dimension_numbers = #tpu.dot_dimension_numbers<[1], [0], [0], [1], [0, 0, 1, 1], [], []>} : vector<8x32xf32>, vector<32x128xf32>, vector<8x128xf32> -> vector<8x128xf32>
    %353 = arith.addf %351, %352 : vector<8x128xf32>
    %354 = math.tanh %353 : vector<8x128xf32>
    %355 = arith.negf %353 : vector<8x128xf32>
    %356 = math.exp %355 : vector<8x128xf32>
    %cst_111 = arith.constant 1.000000e+00 : f32
    %357 = vector.broadcast %cst_111 : f32 to vector<8x128xf32>
    %358 = arith.addf %357, %356 : vector<8x128xf32>
    %359 = arith.divf %357, %358 : vector<8x128xf32>
    %360 = arith.select %5, %354, %359 : vector<8x128xi1>, vector<8x128xf32>
    %361 = vector.extract_strided_slice %360 {offsets = [0, 0], sizes = [8, 32], strides = [1, 1]} : vector<8x128xf32> to vector<8x32xf32>
    %362 = vector.extract_strided_slice %360 {offsets = [0, 32], sizes = [8, 32], strides = [1, 1]} : vector<8x128xf32> to vector<8x32xf32>
    %363 = vector.extract_strided_slice %360 {offsets = [0, 64], sizes = [8, 32], strides = [1, 1]} : vector<8x128xf32> to vector<8x32xf32>
    %364 = vector.extract_strided_slice %360 {offsets = [0, 96], sizes = [8, 32], strides = [1, 1]} : vector<8x128xf32> to vector<8x32xf32>
    %365 = arith.mulf %362, %343 : vector<8x32xf32>
    %366 = arith.mulf %361, %363 : vector<8x32xf32>
    %367 = arith.addf %365, %366 : vector<8x32xf32>
    %368 = math.tanh %367 : vector<8x32xf32>
    %369 = arith.mulf %364, %368 : vector<8x32xf32>
    %370 = arith.index_cast %349 : i32 to index
    %c0_112 = arith.constant 0 : index
    %371 = vector.load %arg15[%370, %c0_112] : memref<64x32xf32, #tpu.memory_space<vmem>>, vector<8x32xf32>
    tpu.vector_store %arg15[%370, %c0_112], %369 {strides = array<i32>} : memref<64x32xf32, #tpu.memory_space<vmem>>, vector<8x32xf32>,
    %c6_i32_113 = arith.constant 6 : i32
    %c8_i32_114 = arith.constant 8 : i32
    %372 = arith.muli %c6_i32_113, %c8_i32_114 : i32
    %373 = tpu.assume_multiple %372, 8 : i32
    %374 = arith.index_cast %373 : i32 to index
    %c0_115 = arith.constant 0 : index
    %375 = vector.load %arg14[%374, %c0_115] : memref<64x128xf32, #tpu.memory_space<vmem>>, vector<8x128xf32>
    %cst_116 = arith.constant dense<0.000000e+00> : vector<8x128xf32>
    %376 = tpu.matmul %369, %223, %cst_116 {dimension_numbers = #tpu.dot_dimension_numbers<[1], [0], [0], [1], [0, 0, 1, 1], [], []>} : vector<8x32xf32>, vector<32x128xf32>, vector<8x128xf32> -> vector<8x128xf32>
    %377 = arith.addf %375, %376 : vector<8x128xf32>
    %378 = math.tanh %377 : vector<8x128xf32>
    %379 = arith.negf %377 : vector<8x128xf32>
    %380 = math.exp %379 : vector<8x128xf32>
    %cst_117 = arith.constant 1.000000e+00 : f32
    %381 = vector.broadcast %cst_117 : f32 to vector<8x128xf32>
    %382 = arith.addf %381, %380 : vector<8x128xf32>
    %383 = arith.divf %381, %382 : vector<8x128xf32>
    %384 = arith.select %5, %378, %383 : vector<8x128xi1>, vector<8x128xf32>
    %385 = vector.extract_strided_slice %384 {offsets = [0, 0], sizes = [8, 32], strides = [1, 1]} : vector<8x128xf32> to vector<8x32xf32>
    %386 = vector.extract_strided_slice %384 {offsets = [0, 32], sizes = [8, 32], strides = [1, 1]} : vector<8x128xf32> to vector<8x32xf32>
    %387 = vector.extract_strided_slice %384 {offsets = [0, 64], sizes = [8, 32], strides = [1, 1]} : vector<8x128xf32> to vector<8x32xf32>
    %388 = vector.extract_strided_slice %384 {offsets = [0, 96], sizes = [8, 32], strides = [1, 1]} : vector<8x128xf32> to vector<8x32xf32>
    %389 = arith.mulf %386, %367 : vector<8x32xf32>
    %390 = arith.mulf %385, %387 : vector<8x32xf32>
    %391 = arith.addf %389, %390 : vector<8x32xf32>
    %392 = math.tanh %391 : vector<8x32xf32>
    %393 = arith.mulf %388, %392 : vector<8x32xf32>
    %394 = arith.index_cast %373 : i32 to index
    %c0_118 = arith.constant 0 : index
    %395 = vector.load %arg15[%394, %c0_118] : memref<64x32xf32, #tpu.memory_space<vmem>>, vector<8x32xf32>
    tpu.vector_store %arg15[%394, %c0_118], %393 {strides = array<i32>} : memref<64x32xf32, #tpu.memory_space<vmem>>, vector<8x32xf32>,
    %c7_i32_119 = arith.constant 7 : i32
    %c8_i32_120 = arith.constant 8 : i32
    %396 = arith.muli %c7_i32_119, %c8_i32_120 : i32
    %397 = tpu.assume_multiple %396, 8 : i32
    %398 = arith.index_cast %397 : i32 to index
    %c0_121 = arith.constant 0 : index
    %399 = vector.load %arg14[%398, %c0_121] : memref<64x128xf32, #tpu.memory_space<vmem>>, vector<8x128xf32>
    %cst_122 = arith.constant dense<0.000000e+00> : vector<8x128xf32>
    %400 = tpu.matmul %393, %223, %cst_122 {dimension_numbers = #tpu.dot_dimension_numbers<[1], [0], [0], [1], [0, 0, 1, 1], [], []>} : vector<8x32xf32>, vector<32x128xf32>, vector<8x128xf32> -> vector<8x128xf32>
    %401 = arith.addf %399, %400 : vector<8x128xf32>
    %402 = math.tanh %401 : vector<8x128xf32>
    %403 = arith.negf %401 : vector<8x128xf32>
    %404 = math.exp %403 : vector<8x128xf32>
    %cst_123 = arith.constant 1.000000e+00 : f32
    %405 = vector.broadcast %cst_123 : f32 to vector<8x128xf32>
    %406 = arith.addf %405, %404 : vector<8x128xf32>
    %407 = arith.divf %405, %406 : vector<8x128xf32>
    %408 = arith.select %5, %402, %407 : vector<8x128xi1>, vector<8x128xf32>
    %409 = vector.extract_strided_slice %408 {offsets = [0, 0], sizes = [8, 32], strides = [1, 1]} : vector<8x128xf32> to vector<8x32xf32>
    %410 = vector.extract_strided_slice %408 {offsets = [0, 32], sizes = [8, 32], strides = [1, 1]} : vector<8x128xf32> to vector<8x32xf32>
    %411 = vector.extract_strided_slice %408 {offsets = [0, 64], sizes = [8, 32], strides = [1, 1]} : vector<8x128xf32> to vector<8x32xf32>
    %412 = vector.extract_strided_slice %408 {offsets = [0, 96], sizes = [8, 32], strides = [1, 1]} : vector<8x128xf32> to vector<8x32xf32>
    %413 = arith.mulf %410, %391 : vector<8x32xf32>
    %414 = arith.mulf %409, %411 : vector<8x32xf32>
    %415 = arith.addf %413, %414 : vector<8x32xf32>
    %416 = math.tanh %415 : vector<8x32xf32>
    %417 = arith.mulf %412, %416 : vector<8x32xf32>
    %418 = arith.index_cast %397 : i32 to index
    %c0_124 = arith.constant 0 : index
    %419 = vector.load %arg15[%418, %c0_124] : memref<64x32xf32, #tpu.memory_space<vmem>>, vector<8x32xf32>
    tpu.vector_store %arg15[%418, %c0_124], %417 {strides = array<i32>} : memref<64x32xf32, #tpu.memory_space<vmem>>, vector<8x32xf32>,
    %c8_i32_125 = arith.constant 8 : i32
    %c1_126 = arith.constant 1 : index
    %c0_127 = arith.constant 0 : index
    %c0_128 = arith.constant 0 : index
    %420 = vector.load %arg12[%c1_126, %c0_127, %c0_128] : memref<2x8x32xf32, #tpu.memory_space<vmem>>, vector<1x8x32xf32>
    %421 = vector.shape_cast %420 : vector<1x8x32xf32> to vector<8x32xf32>
    %422 = vector.shape_cast %417 : vector<8x32xf32> to vector<1x8x32xf32>
    tpu.vector_store %arg12[%c1_126, %c0_127, %c0_128], %422 {strides = array<i32>} : memref<2x8x32xf32, #tpu.memory_space<vmem>>, vector<1x8x32xf32>,
    %c1_129 = arith.constant 1 : index
    %c0_130 = arith.constant 0 : index
    %c0_131 = arith.constant 0 : index
    %423 = vector.load %arg13[%c1_129, %c0_130, %c0_131] : memref<2x8x32xf32, #tpu.memory_space<vmem>>, vector<1x8x32xf32>
    %424 = vector.shape_cast %423 : vector<1x8x32xf32> to vector<8x32xf32>
    %425 = vector.shape_cast %415 : vector<8x32xf32> to vector<1x8x32xf32>
    tpu.vector_store %arg13[%c1_129, %c0_130, %c0_131], %425 {strides = array<i32>} : memref<2x8x32xf32, #tpu.memory_space<vmem>>, vector<1x8x32xf32>,
    %c0_132 = arith.constant 0 : index
    %c0_133 = arith.constant 0 : index
    %426 = vector.load %arg15[%c0_132, %c0_133] : memref<64x32xf32, #tpu.memory_space<vmem>>, vector<64x32xf32>
    %c0_134 = arith.constant 0 : index
    %c0_135 = arith.constant 0 : index
    %427 = vector.load %arg9[%c0_134, %c0_135] : memref<32x128xf32, #tpu.memory_space<vmem>>, vector<32x128xf32>
    %cst_136 = arith.constant dense<0.000000e+00> : vector<64x128xf32>
    %428 = tpu.matmul %426, %427, %cst_136 {dimension_numbers = #tpu.dot_dimension_numbers<[1], [0], [0], [1], [0, 0, 1, 1], [], []>} : vector<64x32xf32>, vector<32x128xf32>, vector<64x128xf32> -> vector<64x128xf32>
    %c0_137 = arith.constant 0 : index
    %c0_138 = arith.constant 0 : index
    %429 = vector.load %arg10[%c0_137, %c0_138] : memref<1x128xf32, #tpu.memory_space<vmem>>, vector<1x128xf32>
    %430 = vector.broadcast %429 : vector<1x128xf32> to vector<64x128xf32>
    %431 = arith.addf %428, %430 : vector<64x128xf32>
    %c0_139 = arith.constant 0 : index
    %c0_140 = arith.constant 0 : index
    %432 = vector.load %arg11[%c0_139, %c0_140] : memref<64x128xf32, #tpu.memory_space<vmem>>, vector<64x128xf32>
    tpu.vector_store %arg11[%c0_139, %c0_140], %431 {strides = array<i32>} : memref<64x128xf32, #tpu.memory_space<vmem>>, vector<64x128xf32>,
    return
  }
}

</mosaic_0001>

<llo_original>
// kernel: tpu_custom_call.1
$region0: #{tpu_custom_call.1}
  #allocation0 [shape = 'u32[]', space=smem, size = 0x4, offset = 0x4, fixed_abs, tag = 'smem constant byte address 0x4 - core index']
  #allocation1 [shape = 'u32[144,128]{1,0:T(1,128)}', space=vmem, size = 0x12000, scoped, tag = 'internal scratch']
  #allocation2 [shape = 'f32[64,128]{1,0:T(8,128)}', space=vmem, size = 0x8000, scoped, tag = 'scratch operand']
  #allocation3 [shape = 'f32[64,32]{1,0:T(8,128)}', space=vmem, size = 0x8000, scoped, tag = 'scratch operand']
  %s0 = inlined_call_operand.hbm [shape: f32[64,128], index: 0, kind: input, shape index: {}]
  %s1 = inlined_call_operand.hbm [shape: f32[2,8,32], index: 1, kind: input, shape index: {}]
  %s2 = inlined_call_operand.hbm [shape: f32[2,8,32], index: 2, kind: input, shape index: {}]
  %s3 = inlined_call_operand.hbm [shape: f32[128,128], index: 3, kind: input, shape index: {}]
  %s4 = inlined_call_operand.hbm [shape: f32[32,128], index: 4, kind: input, shape index: {}]
  %s5 = inlined_call_operand.vmem [shape: f32[1,128], index: 5, kind: input, shape index: {}]
  %s6 = inlined_call_operand.hbm [shape: f32[32,128], index: 6, kind: input, shape index: {}]
  %s7 = inlined_call_operand.hbm [shape: f32[32,128], index: 7, kind: input, shape index: {}]
  %s8 = inlined_call_operand.vmem [shape: f32[1,128], index: 8, kind: input, shape index: {}]
  %s9 = inlined_call_operand.hbm [shape: f32[32,128], index: 9, kind: input, shape index: {}]
  %s10 = inlined_call_operand.vmem [shape: f32[1,128], index: 10, kind: input, shape index: {}]
  %s11 = inlined_call_operand.hbm [shape: f32[64,128], index: 11, kind: output, shape index: {0}]
  %s12 = inlined_call_operand.hbm [shape: f32[2,8,32], index: 12, kind: output, shape index: {1}]
  %s13 = inlined_call_operand.hbm [shape: f32[2,8,32], index: 13, kind: output, shape index: {2}]
  %14 = xla_tuple %s11, %s12, %s13
  %s15 = sld [smem:[#allocation0]]
  $region102: #{tpu_custom_call.1} parent=0
    _
  %s17 = ssub.s32 1, %s15
  %s18 = scalar_select 0, %s17, %s15
  $region1: #{tpu_custom_call.1} parent=0
    #allocation4 [shape = 'u8[32768]{0}', space=vmem, size = 0x8000, scoped, tag = 'input window, operand 0, single buffered']
    #allocation5 [shape = 's32[1]{0}', space=sflag, size = 0x4, scoped, tag = 'scoped memory for tpu_custom_call.1']
    #allocation6 [shape = 's32[1]{0}', space=sflag, size = 0x4, scoped, tag = 'scoped memory for tpu_custom_call.1']
    #allocation7 [shape = 'u8[8192]{0}', space=vmem, size = 0x2000, scoped, tag = 'input window, operand 1, single buffered']
    #allocation8 [shape = 's32[1]{0}', space=sflag, size = 0x4, scoped, tag = 'scoped memory for tpu_custom_call.1']
    #allocation9 [shape = 'u8[8192]{0}', space=vmem, size = 0x2000, scoped, tag = 'input window, operand 2, single buffered']
    #allocation10 [shape = 'u8[65536]{0}', space=vmem, size = 0x10000, scoped, tag = 'input window, operand 3, single buffered']
    #allocation11 [shape = 's32[1]{0}', space=sflag, size = 0x4, scoped, tag = 'scoped memory for tpu_custom_call.1']
    #allocation12 [shape = 'u8[16384]{0}', space=vmem, size = 0x4000, scoped, tag = 'input window, operand 4, single buffered']
    #allocation13 [shape = 'u8[16384]{0}', space=vmem, size = 0x4000, scoped, tag = 'input window, operand 6, single buffered']
    #allocation14 [shape = 's32[1]{0}', space=sflag, size = 0x4, scoped, tag = 'scoped memory for tpu_custom_call.1']
    #allocation15 [shape = 'u8[16384]{0}', space=vmem, size = 0x4000, scoped, tag = 'input window, operand 7, single buffered']
    #allocation16 [shape = 'u8[16384]{0}', space=vmem, size = 0x4000, scoped, tag = 'input window, operand 9, single buffered']
    #allocation17 [shape = 's32[1]{0}', space=sflag, size = 0x4, scoped, tag = 'scoped memory for tpu_custom_call.1']
    #allocation18 [shape = 'u8[32768]{0}', space=vmem, size = 0x8000, scoped, tag = 'output window, operand 0, single buffered']
    #allocation19 [shape = 'u8[8192]{0}', space=vmem, size = 0x2000, scoped, tag = 'output window, operand 1, single buffered']
    #allocation20 [shape = 's32[1]{0}', space=sflag, size = 0x4, scoped, tag = 'scoped memory for tpu_custom_call.1']
    #allocation21 [shape = 'u8[8192]{0}', space=vmem, size = 0x2000, scoped, tag = 'output window, operand 2, single buffered']
    %19 = vsyncpa [#allocation5], 0
    %20 = vsyncpa [#allocation8], 0
    %21 = vsyncpa [#allocation11], 0
    %22 = vsyncpa [#allocation14], 0
    %23 = vsyncpa [#allocation17], 0
    %24 = vsyncpa [#allocation6], 0
    %25 = vsyncpa [#allocation20], 0
    // Predicated region
    $region2: #{tpu_custom_call.1} parent=1 // pred_check
      _
    $region3: #{tpu_custom_call.1} parent=1 // pred_check_branch
      %27 = sbr.rel (0) target = $region5
    $region4: #{tpu_custom_call.1} parent=1 // pred_region
      %s29 = ssub.s32 1024, 1024
      %30 = vsyncadd [#allocation5], %s29
      %s31 = sshll.u32 [#allocation4], 4
      %s32 = int_to_ptr.vmem [resolvable:$true] %s31
      %37 = dma.hbm_to_vmem [thread:$0]  %s0, 1024, %s32, [#allocation5], 128, 128, 8
    $region5: #{tpu_custom_call.1} parent=1 // pred_fallthru
      _
    // Predicated region
    $region6: #{tpu_custom_call.1} parent=1 // pred_check
      _
    $region7: #{tpu_custom_call.1} parent=1 // pred_check_branch
      %39 = sbr.rel (0) target = $region9
    $region8: #{tpu_custom_call.1} parent=1 // pred_region
      %s41 = ssub.s32 256, 256
      %42 = vsyncadd [#allocation8], %s41
      %s43 = sshll.u32 [#allocation7], 4
      %s44 = int_to_ptr.vmem [resolvable:$true] %s43
      %49 = dma.hbm_to_vmem [thread:$0]  %s1, 256, %s44, [#allocation8], 128, 128, 8
    $region9: #{tpu_custom_call.1} parent=1 // pred_fallthru
      _
    // Predicated region
    $region10: #{tpu_custom_call.1} parent=1 // pred_check
      _
    $region11: #{tpu_custom_call.1} parent=1 // pred_check_branch
      %51 = sbr.rel (0) target = $region13
    $region12: #{tpu_custom_call.1} parent=1 // pred_region
      %s53 = ssub.s32 256, 256
      %54 = vsyncadd [#allocation8], %s53
      %s55 = sshll.u32 [#allocation9], 4
      %s56 = int_to_ptr.vmem [resolvable:$true] %s55
      %61 = dma.hbm_to_vmem [thread:$0]  %s2, 256, %s56, [#allocation8], 128, 128, 8
    $region13: #{tpu_custom_call.1} parent=1 // pred_fallthru
      _
    // Predicated region
    $region14: #{tpu_custom_call.1} parent=1 // pred_check
      _
    $region15: #{tpu_custom_call.1} parent=1 // pred_check_branch
      %63 = sbr.rel (0) target = $region17
    $region16: #{tpu_custom_call.1} parent=1 // pred_region
      %s65 = ssub.s32 2048, 2048
      %66 = vsyncadd [#allocation11], %s65
      %s67 = sshll.u32 [#allocation10], 4
      %s68 = int_to_ptr.vmem [resolvable:$true] %s67
      %73 = dma.hbm_to_vmem [thread:$0]  %s3, 2048, %s68, [#allocation11], 128, 128, 8
    $region17: #{tpu_custom_call.1} parent=1 // pred_fallthru
      _
    // Predicated region
    $region18: #{tpu_custom_call.1} parent=1 // pred_check
      _
    $region19: #{tpu_custom_call.1} parent=1 // pred_check_branch
      %75 = sbr.rel (0) target = $region21
    $region20: #{tpu_custom_call.1} parent=1 // pred_region
      %s77 = ssub.s32 512, 512
      %78 = vsyncadd [#allocation11], %s77
      %s79 = sshll.u32 [#allocation12], 4
      %s80 = int_to_ptr.vmem [resolvable:$true] %s79
      %85 = dma.hbm_to_vmem [thread:$0]  %s4, 512, %s80, [#allocation11], 128, 128, 8
    $region21: #{tpu_custom_call.1} parent=1 // pred_fallthru
      _
    // Predicated region
    $region22: #{tpu_custom_call.1} parent=1 // pred_check
      _
    $region23: #{tpu_custom_call.1} parent=1 // pred_check_branch
      %87 = sbr.rel (0) target = $region25
    $region24: #{tpu_custom_call.1} parent=1 // pred_region
      _
    $region25: #{tpu_custom_call.1} parent=1 // pred_fallthru
      _
    // Predicated region
    $region26: #{tpu_custom_call.1} parent=1 // pred_check
      _
    $region27: #{tpu_custom_call.1} parent=1 // pred_check_branch
      %89 = sbr.rel (0) target = $region29
    $region28: #{tpu_custom_call.1} parent=1 // pred_region
      %s91 = ssub.s32 512, 512
      %92 = vsyncadd [#allocation14], %s91
      %s93 = sshll.u32 [#allocation13], 4
      %s94 = int_to_ptr.vmem [resolvable:$true] %s93
      %99 = dma.hbm_to_vmem [thread:$0]  %s6, 512, %s94, [#allocation14], 128, 128, 8
    $region29: #{tpu_custom_call.1} parent=1 // pred_fallthru
      _
    // Predicated region
    $region30: #{tpu_custom_call.1} parent=1 // pred_check
      _
    $region31: #{tpu_custom_call.1} parent=1 // pred_check_branch
      %101 = sbr.rel (0) target = $region33
    $region32: #{tpu_custom_call.1} parent=1 // pred_region
      %s103 = ssub.s32 512, 512
      %104 = vsyncadd [#allocation14], %s103
      %s105 = sshll.u32 [#allocation15], 4
      %s106 = int_to_ptr.vmem [resolvable:$true] %s105
      %111 = dma.hbm_to_vmem [thread:$0]  %s7, 512, %s106, [#allocation14], 128, 128, 8
    $region33: #{tpu_custom_call.1} parent=1 // pred_fallthru
      _
    // Predicated region
    $region34: #{tpu_custom_call.1} parent=1 // pred_check
      _
    $region35: #{tpu_custom_call.1} parent=1 // pred_check_branch
      %113 = sbr.rel (0) target = $region37
    $region36: #{tpu_custom_call.1} parent=1 // pred_region
      _
    $region37: #{tpu_custom_call.1} parent=1 // pred_fallthru
      _
    // Predicated region
    $region38: #{tpu_custom_call.1} parent=1 // pred_check
      _
    $region39: #{tpu_custom_call.1} parent=1 // pred_check_branch
      %115 = sbr.rel (0) target = $region41
    $region40: #{tpu_custom_call.1} parent=1 // pred_region
      %s117 = ssub.s32 512, 512
      %118 = vsyncadd [#allocation17], %s117
      %s119 = sshll.u32 [#allocation16], 4
      %s120 = int_to_ptr.vmem [resolvable:$true] %s119
      %125 = dma.hbm_to_vmem [thread:$0]  %s9, 512, %s120, [#allocation17], 128, 128, 8
    $region41: #{tpu_custom_call.1} parent=1 // pred_fallthru
      _
    // Predicated region
    $region42: #{tpu_custom_call.1} parent=1 // pred_check
      _
    $region43: #{tpu_custom_call.1} parent=1 // pred_check_branch
      %127 = sbr.rel (0) target = $region45
    $region44: #{tpu_custom_call.1} parent=1 // pred_region
      _
    $region45: #{tpu_custom_call.1} parent=1 // pred_fallthru
      _
    // Predicated region
    $region46: #{tpu_custom_call.1} parent=1 // pred_check
      _
    $region47: #{tpu_custom_call.1} parent=1 // pred_check_branch
      %129 = sbr.rel (0) target = $region49
    $region48: #{tpu_custom_call.1} parent=1 // pred_region
      %130 = dma.done [#allocation5], 1024
    $region49: #{tpu_custom_call.1} parent=1 // pred_fallthru
      _
    // Predicated region
    $region50: #{tpu_custom_call.1} parent=1 // pred_check
      _
    $region51: #{tpu_custom_call.1} parent=1 // pred_check_branch
      %132 = sbr.rel (0) target = $region53
    $region52: #{tpu_custom_call.1} parent=1 // pred_region
      %133 = dma.done [#allocation8], 256
    $region53: #{tpu_custom_call.1} parent=1 // pred_fallthru
      _
    // Predicated region
    $region54: #{tpu_custom_call.1} parent=1 // pred_check
      _
    $region55: #{tpu_custom_call.1} parent=1 // pred_check_branch
      %135 = sbr.rel (0) target = $region57
    $region56: #{tpu_custom_call.1} parent=1 // pred_region
      %136 = dma.done [#allocation8], 256
    $region57: #{tpu_custom_call.1} parent=1 // pred_fallthru
      _
    // Predicated region
    $region58: #{tpu_custom_call.1} parent=1 // pred_check
      _
    $region59: #{tpu_custom_call.1} parent=1 // pred_check_branch
      %138 = sbr.rel (0) target = $region61
    $region60: #{tpu_custom_call.1} parent=1 // pred_region
      %139 = dma.done [#allocation11], 2048
    $region61: #{tpu_custom_call.1} parent=1 // pred_fallthru
      _
    // Predicated region
    $region62: #{tpu_custom_call.1} parent=1 // pred_check
      _
    $region63: #{tpu_custom_call.1} parent=1 // pred_check_branch
      %141 = sbr.rel (0) target = $region65
    $region64: #{tpu_custom_call.1} parent=1 // pred_region
      %142 = dma.done [#allocation11], 512
    $region65: #{tpu_custom_call.1} parent=1 // pred_fallthru
      _
    // Predicated region
    $region66: #{tpu_custom_call.1} parent=1 // pred_check
      _
    $region67: #{tpu_custom_call.1} parent=1 // pred_check_branch
      %144 = sbr.rel (0) target = $region69
    $region68: #{tpu_custom_call.1} parent=1 // pred_region
      %145 = dma.done [#allocation14], 512
    $region69: #{tpu_custom_call.1} parent=1 // pred_fallthru
      _
    // Predicated region
    $region70: #{tpu_custom_call.1} parent=1 // pred_check
      _
    $region71: #{tpu_custom_call.1} parent=1 // pred_check_branch
      %147 = sbr.rel (0) target = $region73
    $region72: #{tpu_custom_call.1} parent=1 // pred_region
      %148 = dma.done [#allocation14], 512
    $region73: #{tpu_custom_call.1} parent=1 // pred_fallthru
      _
    // Predicated region
    $region74: #{tpu_custom_call.1} parent=1 // pred_check
      _
    $region75: #{tpu_custom_call.1} parent=1 // pred_check_branch
      %150 = sbr.rel (0) target = $region77
    $region76: #{tpu_custom_call.1} parent=1 // pred_region
      %151 = dma.done [#allocation17], 512
    $region77: #{tpu_custom_call.1} parent=1 // pred_fallthru
      _
    %v152 = vlaneseq
    %v153 = vand.u32 %v152, 127
    %vm154 = vcmp.ge.s32.totalorder %v153, 64
    %vm155 = vcmp.lt.s32.totalorder %v153, 96
    %vm156 = vmand %vm154, %vm155
    %v157 = vld [vmem:[#allocation4] sm:$0xff]
    %v158 = vld [vmem:[#allocation4 + $0x8] sm:$0xff]
    %v159 = vld [vmem:[#allocation4 + $0x10] sm:$0xff]
    %v160 = vld [vmem:[#allocation4 + $0x18] sm:$0xff]
    %v161 = vld [vmem:[#allocation4 + $0x20] sm:$0xff]
    %v162 = vld [vmem:[#allocation4 + $0x28] sm:$0xff]
    %v163 = vld [vmem:[#allocation4 + $0x30] sm:$0xff]
    %v164 = vld [vmem:[#allocation4 + $0x38] sm:$0xff]
    %v165 = vld [vmem:[#allocation10] sm:$0xff]
    %v166 = vld [vmem:[#allocation10 + $0x8] sm:$0xff]
    %v167 = vld [vmem:[#allocation10 + $0x10] sm:$0xff]
    %v168 = vld [vmem:[#allocation10 + $0x18] sm:$0xff]
    %v169 = vld [vmem:[#allocation10 + $0x20] sm:$0xff]
    %v170 = vld [vmem:[#allocation10 + $0x28] sm:$0xff]
    %v171 = vld [vmem:[#allocation10 + $0x30] sm:$0xff]
    %v172 = vld [vmem:[#allocation10 + $0x38] sm:$0xff]
    %v173 = vld [vmem:[#allocation10 + $0x40] sm:$0xff]
    %v174 = vld [vmem:[#allocation10 + $0x48] sm:$0xff]
    %v175 = vld [vmem:[#allocation10 + $0x50] sm:$0xff]
    %v176 = vld [vmem:[#allocation10 + $0x58] sm:$0xff]
    %v177 = vld [vmem:[#allocation10 + $0x60] sm:$0xff]
    %v178 = vld [vmem:[#allocation10 + $0x68] sm:$0xff]
    %v179 = vld [vmem:[#allocation10 + $0x70] sm:$0xff]
    %v180 = vld [vmem:[#allocation10 + $0x78] sm:$0xff]
    %v181 = vld [vmem:[%s5] sm:$0x1]
    %v183 = vlaneseq
    %v184 = vshrl.u32 %v183, 7
    %v185 = vsub.s32 0, %v184
    %v186 = vrot.slane %v181, %v185
    %188 = vmatprep.subr.mxu0 0.0
    %189 = vmatpush1.msra.mxu0 %v180
    %190 = vmatprep.subr.mxu0 0.0
    %191 = vmatpush1.msra.mxu0 %v179
    %192 = vmatprep.subr.mxu0 0.0
    %193 = vmatpush1.msra.mxu0 %v178
    %194 = vmatprep.subr.mxu0 0.0
    %195 = vmatpush1.msra.mxu0 %v177
    %196 = vmatprep.subr.mxu0 0.0
    %197 = vmatpush1.msra.mxu0 %v176
    %198 = vmatprep.subr.mxu0 0.0
    %199 = vmatpush1.msra.mxu0 %v175
    %200 = vmatprep.subr.mxu0 0.0
    %201 = vmatpush1.msra.mxu0 %v174
    %202 = vmatprep.subr.mxu0 0.0
    %203 = vmatpush1.msra.mxu0 %v173
    %204 = vmatprep.subr.mxu0 0.0
    %205 = vmatpush1.msra.mxu0 %v172
    %206 = vmatprep.subr.mxu0 0.0
    %207 = vmatpush1.msra.mxu0 %v171
    %208 = vmatprep.subr.mxu0 0.0
    %209 = vmatpush1.msra.mxu0 %v170
    %210 = vmatprep.subr.mxu0 0.0
    %211 = vmatpush1.msra.mxu0 %v169
    %212 = vmatprep.subr.mxu0 0.0
    %213 = vmatpush1.msra.mxu0 %v168
    %214 = vmatprep.subr.mxu0 0.0
    %215 = vmatpush1.msra.mxu0 %v167
    %216 = vmatprep.subr.mxu0 0.0
    %217 = vmatpush1.msra.mxu0 %v166
    %218 = vmatprep.subr.mxu0 0.0
    %219 = vmatpush1.msra.mxu0 %v165
    %220 = vmatprep.subr.mxu0 0.0
    %221 = vmatpush2.msra.mxu0 0.0
    %222 = vmatprep.subr.mxu0 0.0
    %223 = vmatpush2.msra.mxu0 0.0
    %224 = vmatprep.subr.mxu0 0.0
    %225 = vmatpush2.msra.mxu0 0.0
    %226 = vmatprep.subr.mxu0 0.0
    %227 = vmatpush2.msra.mxu0 0.0
    %228 = vmatprep.subr.mxu0 0.0
    %229 = vmatpush2.msra.mxu0 0.0
    %230 = vmatprep.subr.mxu0 0.0
    %231 = vmatpush2.msra.mxu0 0.0
    %232 = vmatprep.subr.mxu0 0.0
    %233 = vmatpush2.msra.mxu0 0.0
    %234 = vmatprep.subr.mxu0 0.0
    %235 = vmatpush2.msra.mxu0 0.0
    %236 = vmatprep.subr.mxu0 0.0
    %237 = vmatpush2.msra.mxu0 0.0
    %238 = vmatprep.subr.mxu0 0.0
    %239 = vmatpush2.msra.mxu0 0.0
    %240 = vmatprep.subr.mxu0 0.0
    %241 = vmatpush2.msra.mxu0 0.0
    %242 = vmatprep.subr.mxu0 0.0
    %243 = vmatpush2.msra.mxu0 0.0
    %244 = vmatprep.subr.mxu0 0.0
    %245 = vmatpush2.msra.mxu0 0.0
    %246 = vmatprep.subr.mxu0 0.0
    %247 = vmatpush2.msra.mxu0 0.0
    %248 = vmatprep.subr.mxu0 0.0
    %249 = vmatpush2.msra.mxu0 0.0
    %250 = vmatprep.subr.mxu0 0.0
    %251 = vmatpush2.msra.mxu0 0.0
    %252 = vmatprep.mubr.f32.mxu0 0.0
    %253 = vmatmul.mubr.f32.gmra.mxu0 %v157
    %v254 = vpop.f32.mrf.mxu0
    %v255 = vadd.f32 %v186, %v254
    %v256 = vpop.f32.mrf.mxu0
    %257 = vmatprep.mubr.f32.mxu0 0.0
    %258 = vmatmul.mubr.f32.gmra.mxu0 %v158
    %v259 = vpop.f32.mrf.mxu0
    %v260 = vadd.f32 %v186, %v259
    %v261 = vpop.f32.mrf.mxu0
    %262 = vmatprep.mubr.f32.mxu0 0.0
    %263 = vmatmul.mubr.f32.gmra.mxu0 %v159
    %v264 = vpop.f32.mrf.mxu0
    %v265 = vadd.f32 %v186, %v264
    %v266 = vpop.f32.mrf.mxu0
    %267 = vmatprep.mubr.f32.mxu0 0.0
    %268 = vmatmul.mubr.f32.gmra.mxu0 %v160
    %v269 = vpop.f32.mrf.mxu0
    %v270 = vadd.f32 %v186, %v269
    %v271 = vpop.f32.mrf.mxu0
    %272 = vmatprep.mubr.f32.mxu0 0.0
    %273 = vmatmul.mubr.f32.gmra.mxu0 %v161
    %v274 = vpop.f32.mrf.mxu0
    %v275 = vadd.f32 %v186, %v274
    %v276 = vpop.f32.mrf.mxu0
    %277 = vmatprep.mubr.f32.mxu0 0.0
    %278 = vmatmul.mubr.f32.gmra.mxu0 %v162
    %v279 = vpop.f32.mrf.mxu0
    %v280 = vadd.f32 %v186, %v279
    %v281 = vpop.f32.mrf.mxu0
    %282 = vmatprep.mubr.f32.mxu0 0.0
    %283 = vmatmul.mubr.f32.gmra.mxu0 %v163
    %v284 = vpop.f32.mrf.mxu0
    %v285 = vadd.f32 %v186, %v284
    %v286 = vpop.f32.mrf.mxu0
    %287 = vmatprep.mubr.f32.mxu0 0.0
    %288 = vmatmul.mubr.f32.gmra.mxu0 %v164
    %v289 = vpop.f32.mrf.mxu0
    %v290 = vadd.f32 %v186, %v289
    %v291 = vpop.f32.mrf.mxu0
    %292 = vdwg.mxu0
    %293 = vst [vmem:[#allocation2] sm:$0xff] %v255
    %294 = vst [vmem:[#allocation2 + $0x8] sm:$0xff] %v260
    %295 = vst [vmem:[#allocation2 + $0x10] sm:$0xff] %v265
    %296 = vst [vmem:[#allocation2 + $0x18] sm:$0xff] %v270
    %297 = vst [vmem:[#allocation2 + $0x20] sm:$0xff] %v275
    %298 = vst [vmem:[#allocation2 + $0x28] sm:$0xff] %v280
    %299 = vst [vmem:[#allocation2 + $0x30] sm:$0xff] %v285
    %300 = vst [vmem:[#allocation2 + $0x38] sm:$0xff] %v290
    %v301 = vld [vmem:[#allocation12] sm:$0xff]
    %v302 = vld [vmem:[#allocation12 + $0x8] sm:$0xff]
    %v303 = vld [vmem:[#allocation12 + $0x10] sm:$0xff]
    %v304 = vld [vmem:[#allocation12 + $0x18] sm:$0xff]
    %v305 = vld [vmem:[#allocation7] sm:$0xff]
    %v306 = vld [vmem:[#allocation9] sm:$0xff]
    %v307 = vld [vmem:[#allocation2] sm:$0xff]
    %vm308 = vcmask 261120
    %v310 = vsel %vm308, %v305, 0
    %312 = vmatprep.subr.mxu0 0.0
    %313 = vmatpush1.msra.mxu0 0.0
    %314 = vmatprep.subr.mxu0 0.0
    %315 = vmatpush1.msra.mxu0 0.0
    %316 = vmatprep.subr.mxu0 0.0
    %317 = vmatpush1.msra.mxu0 0.0
    %318 = vmatprep.subr.mxu0 0.0
    %319 = vmatpush1.msra.mxu0 0.0
    %320 = vmatprep.subr.mxu0 0.0
    %321 = vmatpush1.msra.mxu0 0.0
    %322 = vmatprep.subr.mxu0 0.0
    %323 = vmatpush1.msra.mxu0 0.0
    %324 = vmatprep.subr.mxu0 0.0
    %325 = vmatpush1.msra.mxu0 0.0
    %326 = vmatprep.subr.mxu0 0.0
    %327 = vmatpush1.msra.mxu0 0.0
    %328 = vmatprep.subr.mxu0 0.0
    %329 = vmatpush1.msra.mxu0 0.0
    %330 = vmatprep.subr.mxu0 0.0
    %331 = vmatpush1.msra.mxu0 0.0
    %332 = vmatprep.subr.mxu0 0.0
    %333 = vmatpush1.msra.mxu0 0.0
    %334 = vmatprep.subr.mxu0 0.0
    %335 = vmatpush1.msra.mxu0 0.0
    %336 = vmatprep.subr.mxu0 0.0
    %337 = vmatpush1.msra.mxu0 %v304
    %338 = vmatprep.subr.mxu0 0.0
    %339 = vmatpush1.msra.mxu0 %v303
    %340 = vmatprep.subr.mxu0 0.0
    %341 = vmatpush1.msra.mxu0 %v302
    %342 = vmatprep.subr.mxu0 0.0
    %343 = vmatpush1.msra.mxu0 %v301
    %344 = vmatprep.subr.mxu0 0.0
    %345 = vmatpush2.msra.mxu0 0.0
    %346 = vmatprep.subr.mxu0 0.0
    %347 = vmatpush2.msra.mxu0 0.0
    %348 = vmatprep.subr.mxu0 0.0
    %349 = vmatpush2.msra.mxu0 0.0
    %350 = vmatprep.subr.mxu0 0.0
    %351 = vmatpush2.msra.mxu0 0.0
    %352 = vmatprep.subr.mxu0 0.0
    %353 = vmatpush2.msra.mxu0 0.0
    %354 = vmatprep.subr.mxu0 0.0
    %355 = vmatpush2.msra.mxu0 0.0
    %356 = vmatprep.subr.mxu0 0.0
    %357 = vmatpush2.msra.mxu0 0.0
    %358 = vmatprep.subr.mxu0 0.0
    %359 = vmatpush2.msra.mxu0 0.0
    %360 = vmatprep.subr.mxu0 0.0
    %361 = vmatpush2.msra.mxu0 0.0
    %362 = vmatprep.subr.mxu0 0.0
    %363 = vmatpush2.msra.mxu0 0.0
    %364 = vmatprep.subr.mxu0 0.0
    %365 = vmatpush2.msra.mxu0 0.0
    %366 = vmatprep.subr.mxu0 0.0
    %367 = vmatpush2.msra.mxu0 0.0
    %368 = vmatprep.subr.mxu0 0.0
    %369 = vmatpush2.msra.mxu0 0.0
    %370 = vmatprep.subr.mxu0 0.0
    %371 = vmatpush2.msra.mxu0 0.0
    %372 = vmatprep.subr.mxu0 0.0
    %373 = vmatpush2.msra.mxu0 0.0
    %374 = vmatprep.subr.mxu0 0.0
    %375 = vmatpush2.msra.mxu0 0.0
    %376 = vmatprep.mubr.f32.mxu0 0.0
    %377 = vmatmul.mubr.f32.gmra.mxu0 %v310
    %v378 = vpop.f32.mrf.mxu0
    %v379 = vadd.f32 0.0, %v378
    %v380 = vpop.f32.mrf.mxu0
    %381 = vdwg.mxu0
    %v382 = vadd.f32 %v307, %v379
    %v383 = vtanh.pop %v382
    %v384 = vxor.u32 %v382, 2147483648
    %v385 = vmul.f32 %v384, 1.442695
    %v386 = vpow.pop %v385
    %v387 = vadd.f32 %v386, 1.0
    %v388 = vrcp.pop %v387
    %v389 = vmul.f32 1.0, %v388
    %v390 = vsel %vm156, %v383, %v389
    %392 = vrot.lane.b32.xlu0 %v306, 32
    %v393 = vpop.permute.xlu0 %392
    %v395 = vmul.f32 %v390, %v393
    %397 = vrot.lane.b32.xlu0 %v390, 64
    %v398 = vpop.permute.xlu0 %397
    %v400 = vmul.f32 %v390, %v398
    %402 = vrot.lane.b32.xlu0 %v400, 32
    %v403 = vpop.permute.xlu0 %402
    %v405 = vadd.f32 %v395, %v403
    %v406 = vtanh.pop %v405
    %408 = vrot.lane.b32.xlu0 %v406, 64
    %v409 = vpop.permute.xlu0 %408
    %v411 = vmul.f32 %v390, %v409
    %413 = vrot.lane.b32.xlu0 %v411, 32
    %v414 = vpop.permute.xlu0 %413
    %416 = vst.msk [vmem:[#allocation3] sm:$0xff] %vm308, %v414
    %s417 = scalar_lea.vmem [#allocation2], 8
    %v418 = vld [vmem:[%s417] sm:$0xff]
    %v419 = vsel %vm308, %v414, 0
    %421 = vmatprep.subr.mxu0 0.0
    %422 = vmatpush1.msra.mxu0 0.0
    %423 = vmatprep.subr.mxu0 0.0
    %424 = vmatpush1.msra.mxu0 0.0
    %425 = vmatprep.subr.mxu0 0.0
    %426 = vmatpush1.msra.mxu0 0.0
    %427 = vmatprep.subr.mxu0 0.0
    %428 = vmatpush1.msra.mxu0 0.0
    %429 = vmatprep.subr.mxu0 0.0
    %430 = vmatpush1.msra.mxu0 0.0
    %431 = vmatprep.subr.mxu0 0.0
    %432 = vmatpush1.msra.mxu0 0.0
    %433 = vmatprep.subr.mxu0 0.0
    %434 = vmatpush1.msra.mxu0 0.0
    %435 = vmatprep.subr.mxu0 0.0
    %436 = vmatpush1.msra.mxu0 0.0
    %437 = vmatprep.subr.mxu0 0.0
    %438 = vmatpush1.msra.mxu0 0.0
    %439 = vmatprep.subr.mxu0 0.0
    %440 = vmatpush1.msra.mxu0 0.0
    %441 = vmatprep.subr.mxu0 0.0
    %442 = vmatpush1.msra.mxu0 0.0
    %443 = vmatprep.subr.mxu0 0.0
    %444 = vmatpush1.msra.mxu0 0.0
    %445 = vmatprep.subr.mxu0 0.0
    %446 = vmatpush1.msra.mxu0 %v304
    %447 = vmatprep.subr.mxu0 0.0
    %448 = vmatpush1.msra.mxu0 %v303
    %449 = vmatprep.subr.mxu0 0.0
    %450 = vmatpush1.msra.mxu0 %v302
    %451 = vmatprep.subr.mxu0 0.0
    %452 = vmatpush1.msra.mxu0 %v301
    %453 = vmatprep.subr.mxu0 0.0
    %454 = vmatpush2.msra.mxu0 0.0
    %455 = vmatprep.subr.mxu0 0.0
    %456 = vmatpush2.msra.mxu0 0.0
    %457 = vmatprep.subr.mxu0 0.0
    %458 = vmatpush2.msra.mxu0 0.0
    %459 = vmatprep.subr.mxu0 0.0
    %460 = vmatpush2.msra.mxu0 0.0
    %461 = vmatprep.subr.mxu0 0.0
    %462 = vmatpush2.msra.mxu0 0.0
    %463 = vmatprep.subr.mxu0 0.0
    %464 = vmatpush2.msra.mxu0 0.0
    %465 = vmatprep.subr.mxu0 0.0
    %466 = vmatpush2.msra.mxu0 0.0
    %467 = vmatprep.subr.mxu0 0.0
    %468 = vmatpush2.msra.mxu0 0.0
    %469 = vmatprep.subr.mxu0 0.0
    %470 = vmatpush2.msra.mxu0 0.0
    %471 = vmatprep.subr.mxu0 0.0
    %472 = vmatpush2.msra.mxu0 0.0
    %473 = vmatprep.subr.mxu0 0.0
    %474 = vmatpush2.msra.mxu0 0.0
    %475 = vmatprep.subr.mxu0 0.0
    %476 = vmatpush2.msra.mxu0 0.0
    %477 = vmatprep.subr.mxu0 0.0
    %478 = vmatpush2.msra.mxu0 0.0
    %479 = vmatprep.subr.mxu0 0.0
    %480 = vmatpush2.msra.mxu0 0.0
    %481 = vmatprep.subr.mxu0 0.0
    %482 = vmatpush2.msra.mxu0 0.0
    %483 = vmatprep.subr.mxu0 0.0
    %484 = vmatpush2.msra.mxu0 0.0
    %485 = vmatprep.mubr.f32.mxu0 0.0
    %486 = vmatmul.mubr.f32.gmra.mxu0 %v419
    %v487 = vpop.f32.mrf.mxu0
    %v488 = vadd.f32 0.0, %v487
    %v489 = vpop.f32.mrf.mxu0
    %490 = vdwg.mxu0
    %v491 = vadd.f32 %v418, %v488
    %v492 = vtanh.pop %v491
    %v493 = vxor.u32 %v491, 2147483648
    %v494 = vmul.f32 %v493, 1.442695
    %v495 = vpow.pop %v494
    %v496 = vadd.f32 %v495, 1.0
    %v497 = vrcp.pop %v496
    %v498 = vmul.f32 1.0, %v497
    %v499 = vsel %vm156, %v492, %v498
    %v500 = vmul.f32 %v499, %v405
    %502 = vrot.lane.b32.xlu0 %v499, 64
    %v503 = vpop.permute.xlu0 %502
    %v505 = vmul.f32 %v499, %v503
    %507 = vrot.lane.b32.xlu0 %v505, 32
    %v508 = vpop.permute.xlu0 %507
    %v510 = vadd.f32 %v500, %v508
    %v511 = vtanh.pop %v510
    %513 = vrot.lane.b32.xlu0 %v511, 64
    %v514 = vpop.permute.xlu0 %513
    %v516 = vmul.f32 %v499, %v514
    %518 = vrot.lane.b32.xlu0 %v516, 32
    %v519 = vpop.permute.xlu0 %518
    %s521 = scalar_lea.vmem [#allocation3], 8
    %522 = vst.msk [vmem:[%s521] sm:$0xff] %vm308, %v519
    %s523 = scalar_lea.vmem [#allocation2], 16
    %v524 = vld [vmem:[%s523] sm:$0xff]
    %v525 = vsel %vm308, %v519, 0
    %527 = vmatprep.subr.mxu0 0.0
    %528 = vmatpush1.msra.mxu0 0.0
    %529 = vmatprep.subr.mxu0 0.0
    %530 = vmatpush1.msra.mxu0 0.0
    %531 = vmatprep.subr.mxu0 0.0
    %532 = vmatpush1.msra.mxu0 0.0
    %533 = vmatprep.subr.mxu0 0.0
    %534 = vmatpush1.msra.mxu0 0.0
    %535 = vmatprep.subr.mxu0 0.0
    %536 = vmatpush1.msra.mxu0 0.0
    %537 = vmatprep.subr.mxu0 0.0
    %538 = vmatpush1.msra.mxu0 0.0
    %539 = vmatprep.subr.mxu0 0.0
    %540 = vmatpush1.msra.mxu0 0.0
    %541 = vmatprep.subr.mxu0 0.0
    %542 = vmatpush1.msra.mxu0 0.0
    %543 = vmatprep.subr.mxu0 0.0
    %544 = vmatpush1.msra.mxu0 0.0
    %545 = vmatprep.subr.mxu0 0.0
    %546 = vmatpush1.msra.mxu0 0.0
    %547 = vmatprep.subr.mxu0 0.0
    %548 = vmatpush1.msra.mxu0 0.0
    %549 = vmatprep.subr.mxu0 0.0
    %550 = vmatpush1.msra.mxu0 0.0
    %551 = vmatprep.subr.mxu0 0.0
    %552 = vmatpush1.msra.mxu0 %v304
    %553 = vmatprep.subr.mxu0 0.0
    %554 = vmatpush1.msra.mxu0 %v303
    %555 = vmatprep.subr.mxu0 0.0
    %556 = vmatpush1.msra.mxu0 %v302
    %557 = vmatprep.subr.mxu0 0.0
    %558 = vmatpush1.msra.mxu0 %v301
    %559 = vmatprep.subr.mxu0 0.0
    %560 = vmatpush2.msra.mxu0 0.0
    %561 = vmatprep.subr.mxu0 0.0
    %562 = vmatpush2.msra.mxu0 0.0
    %563 = vmatprep.subr.mxu0 0.0
    %564 = vmatpush2.msra.mxu0 0.0
    %565 = vmatprep.subr.mxu0 0.0
    %566 = vmatpush2.msra.mxu0 0.0
    %567 = vmatprep.subr.mxu0 0.0
    %568 = vmatpush2.msra.mxu0 0.0
    %569 = vmatprep.subr.mxu0 0.0
    %570 = vmatpush2.msra.mxu0 0.0
    %571 = vmatprep.subr.mxu0 0.0
    %572 = vmatpush2.msra.mxu0 0.0
    %573 = vmatprep.subr.mxu0 0.0
    %574 = vmatpush2.msra.mxu0 0.0
    %575 = vmatprep.subr.mxu0 0.0
    %576 = vmatpush2.msra.mxu0 0.0
    %577 = vmatprep.subr.mxu0 0.0
    %578 = vmatpush2.msra.mxu0 0.0
    %579 = vmatprep.subr.mxu0 0.0
    %580 = vmatpush2.msra.mxu0 0.0
    %581 = vmatprep.subr.mxu0 0.0
    %582 = vmatpush2.msra.mxu0 0.0
    %583 = vmatprep.subr.mxu0 0.0
    %584 = vmatpush2.msra.mxu0 0.0
    %585 = vmatprep.subr.mxu0 0.0
    %586 = vmatpush2.msra.mxu0 0.0
    %587 = vmatprep.subr.mxu0 0.0
    %588 = vmatpush2.msra.mxu0 0.0
    %589 = vmatprep.subr.mxu0 0.0
    %590 = vmatpush2.msra.mxu0 0.0
    %591 = vmatprep.mubr.f32.mxu0 0.0
    %592 = vmatmul.mubr.f32.gmra.mxu0 %v525
    %v593 = vpop.f32.mrf.mxu0
    %v594 = vadd.f32 0.0, %v593
    %v595 = vpop.f32.mrf.mxu0
    %596 = vdwg.mxu0
    %v597 = vadd.f32 %v524, %v594
    %v598 = vtanh.pop %v597
    %v599 = vxor.u32 %v597, 2147483648
    %v600 = vmul.f32 %v599, 1.442695
    %v601 = vpow.pop %v600
    %v602 = vadd.f32 %v601, 1.0
    %v603 = vrcp.pop %v602
    %v604 = vmul.f32 1.0, %v603
    %v605 = vsel %vm156, %v598, %v604
    %v606 = vmul.f32 %v605, %v510
    %608 = vrot.lane.b32.xlu0 %v605, 64
    %v609 = vpop.permute.xlu0 %608
    %v611 = vmul.f32 %v605, %v609
    %613 = vrot.lane.b32.xlu0 %v611, 32
    %v614 = vpop.permute.xlu0 %613
    %v616 = vadd.f32 %v606, %v614
    %v617 = vtanh.pop %v616
    %619 = vrot.lane.b32.xlu0 %v617, 64
    %v620 = vpop.permute.xlu0 %619
    %v622 = vmul.f32 %v605, %v620
    %624 = vrot.lane.b32.xlu0 %v622, 32
    %v625 = vpop.permute.xlu0 %624
    %s627 = scalar_lea.vmem [#allocation3], 16
    %628 = vst.msk [vmem:[%s627] sm:$0xff] %vm308, %v625
    %s629 = scalar_lea.vmem [#allocation2], 24
    %v630 = vld [vmem:[%s629] sm:$0xff]
    %v631 = vsel %vm308, %v625, 0
    %633 = vmatprep.subr.mxu0 0.0
    %634 = vmatpush1.msra.mxu0 0.0
    %635 = vmatprep.subr.mxu0 0.0
    %636 = vmatpush1.msra.mxu0 0.0
    %637 = vmatprep.subr.mxu0 0.0
    %638 = vmatpush1.msra.mxu0 0.0
    %639 = vmatprep.subr.mxu0 0.0
    %640 = vmatpush1.msra.mxu0 0.0
    %641 = vmatprep.subr.mxu0 0.0
    %642 = vmatpush1.msra.mxu0 0.0
    %643 = vmatprep.subr.mxu0 0.0
    %644 = vmatpush1.msra.mxu0 0.0
    %645 = vmatprep.subr.mxu0 0.0
    %646 = vmatpush1.msra.mxu0 0.0
    %647 = vmatprep.subr.mxu0 0.0
    %648 = vmatpush1.msra.mxu0 0.0
    %649 = vmatprep.subr.mxu0 0.0
    %650 = vmatpush1.msra.mxu0 0.0
    %651 = vmatprep.subr.mxu0 0.0
    %652 = vmatpush1.msra.mxu0 0.0
    %653 = vmatprep.subr.mxu0 0.0
    %654 = vmatpush1.msra.mxu0 0.0
    %655 = vmatprep.subr.mxu0 0.0
    %656 = vmatpush1.msra.mxu0 0.0
    %657 = vmatprep.subr.mxu0 0.0
    %658 = vmatpush1.msra.mxu0 %v304
    %659 = vmatprep.subr.mxu0 0.0
    %660 = vmatpush1.msra.mxu0 %v303
    %661 = vmatprep.subr.mxu0 0.0
    %662 = vmatpush1.msra.mxu0 %v302
    %663 = vmatprep.subr.mxu0 0.0
    %664 = vmatpush1.msra.mxu0 %v301
    %665 = vmatprep.subr.mxu0 0.0
    %666 = vmatpush2.msra.mxu0 0.0
    %667 = vmatprep.subr.mxu0 0.0
    %668 = vmatpush2.msra.mxu0 0.0
    %669 = vmatprep.subr.mxu0 0.0
    %670 = vmatpush2.msra.mxu0 0.0
    %671 = vmatprep.subr.mxu0 0.0
    %672 = vmatpush2.msra.mxu0 0.0
    %673 = vmatprep.subr.mxu0 0.0
    %674 = vmatpush2.msra.mxu0 0.0
    %675 = vmatprep.subr.mxu0 0.0
    %676 = vmatpush2.msra.mxu0 0.0
    %677 = vmatprep.subr.mxu0 0.0
    %678 = vmatpush2.msra.mxu0 0.0
    %679 = vmatprep.subr.mxu0 0.0
    %680 = vmatpush2.msra.mxu0 0.0
    %681 = vmatprep.subr.mxu0 0.0
    %682 = vmatpush2.msra.mxu0 0.0
    %683 = vmatprep.subr.mxu0 0.0
    %684 = vmatpush2.msra.mxu0 0.0
    %685 = vmatprep.subr.mxu0 0.0
    %686 = vmatpush2.msra.mxu0 0.0
    %687 = vmatprep.subr.mxu0 0.0
    %688 = vmatpush2.msra.mxu0 0.0
    %689 = vmatprep.subr.mxu0 0.0
    %690 = vmatpush2.msra.mxu0 0.0
    %691 = vmatprep.subr.mxu0 0.0
    %692 = vmatpush2.msra.mxu0 0.0
    %693 = vmatprep.subr.mxu0 0.0
    %694 = vmatpush2.msra.mxu0 0.0
    %695 = vmatprep.subr.mxu0 0.0
    %696 = vmatpush2.msra.mxu0 0.0
    %697 = vmatprep.mubr.f32.mxu0 0.0
    %698 = vmatmul.mubr.f32.gmra.mxu0 %v631
    %v699 = vpop.f32.mrf.mxu0
    %v700 = vadd.f32 0.0, %v699
    %v701 = vpop.f32.mrf.mxu0
    %702 = vdwg.mxu0
    %v703 = vadd.f32 %v630, %v700
    %v704 = vtanh.pop %v703
    %v705 = vxor.u32 %v703, 2147483648
    %v706 = vmul.f32 %v705, 1.442695
    %v707 = vpow.pop %v706
    %v708 = vadd.f32 %v707, 1.0
    %v709 = vrcp.pop %v708
    %v710 = vmul.f32 1.0, %v709
    %v711 = vsel %vm156, %v704, %v710
    %v712 = vmul.f32 %v711, %v616
    %714 = vrot.lane.b32.xlu0 %v711, 64
    %v715 = vpop.permute.xlu0 %714
    %v717 = vmul.f32 %v711, %v715
    %719 = vrot.lane.b32.xlu0 %v717, 32
    %v720 = vpop.permute.xlu0 %719
    %v722 = vadd.f32 %v712, %v720
    %v723 = vtanh.pop %v722
    %725 = vrot.lane.b32.xlu0 %v723, 64
    %v726 = vpop.permute.xlu0 %725
    %v728 = vmul.f32 %v711, %v726
    %730 = vrot.lane.b32.xlu0 %v728, 32
    %v731 = vpop.permute.xlu0 %730
    %s733 = scalar_lea.vmem [#allocation3], 24
    %734 = vst.msk [vmem:[%s733] sm:$0xff] %vm308, %v731
    %s735 = scalar_lea.vmem [#allocation2], 32
    %v736 = vld [vmem:[%s735] sm:$0xff]
    %v737 = vsel %vm308, %v731, 0
    %739 = vmatprep.subr.mxu0 0.0
    %740 = vmatpush1.msra.mxu0 0.0
    %741 = vmatprep.subr.mxu0 0.0
    %742 = vmatpush1.msra.mxu0 0.0
    %743 = vmatprep.subr.mxu0 0.0
    %744 = vmatpush1.msra.mxu0 0.0
    %745 = vmatprep.subr.mxu0 0.0
    %746 = vmatpush1.msra.mxu0 0.0
    %747 = vmatprep.subr.mxu0 0.0
    %748 = vmatpush1.msra.mxu0 0.0
    %749 = vmatprep.subr.mxu0 0.0
    %750 = vmatpush1.msra.mxu0 0.0
    %751 = vmatprep.subr.mxu0 0.0
    %752 = vmatpush1.msra.mxu0 0.0
    %753 = vmatprep.subr.mxu0 0.0
    %754 = vmatpush1.msra.mxu0 0.0
    %755 = vmatprep.subr.mxu0 0.0
    %756 = vmatpush1.msra.mxu0 0.0
    %757 = vmatprep.subr.mxu0 0.0
    %758 = vmatpush1.msra.mxu0 0.0
    %759 = vmatprep.subr.mxu0 0.0
    %760 = vmatpush1.msra.mxu0 0.0
    %761 = vmatprep.subr.mxu0 0.0
    %762 = vmatpush1.msra.mxu0 0.0
    %763 = vmatprep.subr.mxu0 0.0
    %764 = vmatpush1.msra.mxu0 %v304
    %765 = vmatprep.subr.mxu0 0.0
    %766 = vmatpush1.msra.mxu0 %v303
    %767 = vmatprep.subr.mxu0 0.0
    %768 = vmatpush1.msra.mxu0 %v302
    %769 = vmatprep.subr.mxu0 0.0
    %770 = vmatpush1.msra.mxu0 %v301
    %771 = vmatprep.subr.mxu0 0.0
    %772 = vmatpush2.msra.mxu0 0.0
    %773 = vmatprep.subr.mxu0 0.0
    %774 = vmatpush2.msra.mxu0 0.0
    %775 = vmatprep.subr.mxu0 0.0
    %776 = vmatpush2.msra.mxu0 0.0
    %777 = vmatprep.subr.mxu0 0.0
    %778 = vmatpush2.msra.mxu0 0.0
    %779 = vmatprep.subr.mxu0 0.0
    %780 = vmatpush2.msra.mxu0 0.0
    %781 = vmatprep.subr.mxu0 0.0
    %782 = vmatpush2.msra.mxu0 0.0
    %783 = vmatprep.subr.mxu0 0.0
    %784 = vmatpush2.msra.mxu0 0.0
    %785 = vmatprep.subr.mxu0 0.0
    %786 = vmatpush2.msra.mxu0 0.0
    %787 = vmatprep.subr.mxu0 0.0
    %788 = vmatpush2.msra.mxu0 0.0
    %789 = vmatprep.subr.mxu0 0.0
    %790 = vmatpush2.msra.mxu0 0.0
    %791 = vmatprep.subr.mxu0 0.0
    %792 = vmatpush2.msra.mxu0 0.0
    %793 = vmatprep.subr.mxu0 0.0
    %794 = vmatpush2.msra.mxu0 0.0
    %795 = vmatprep.subr.mxu0 0.0
    %796 = vmatpush2.msra.mxu0 0.0
    %797 = vmatprep.subr.mxu0 0.0
    %798 = vmatpush2.msra.mxu0 0.0
    %799 = vmatprep.subr.mxu0 0.0
    %800 = vmatpush2.msra.mxu0 0.0
    %801 = vmatprep.subr.mxu0 0.0
    %802 = vmatpush2.msra.mxu0 0.0
    %803 = vmatprep.mubr.f32.mxu0 0.0
    %804 = vmatmul.mubr.f32.gmra.mxu0 %v737
    %v805 = vpop.f32.mrf.mxu0
    %v806 = vadd.f32 0.0, %v805
    %v807 = vpop.f32.mrf.mxu0
    %808 = vdwg.mxu0
    %v809 = vadd.f32 %v736, %v806
    %v810 = vtanh.pop %v809
    %v811 = vxor.u32 %v809, 2147483648
    %v812 = vmul.f32 %v811, 1.442695
    %v813 = vpow.pop %v812
    %v814 = vadd.f32 %v813, 1.0
    %v815 = vrcp.pop %v814
    %v816 = vmul.f32 1.0, %v815
    %v817 = vsel %vm156, %v810, %v816
    %v818 = vmul.f32 %v817, %v722
    %820 = vrot.lane.b32.xlu0 %v817, 64
    %v821 = vpop.permute.xlu0 %820
    %v823 = vmul.f32 %v817, %v821
    %825 = vrot.lane.b32.xlu0 %v823, 32
    %v826 = vpop.permute.xlu0 %825
    %v828 = vadd.f32 %v818, %v826
    %v829 = vtanh.pop %v828
    %831 = vrot.lane.b32.xlu0 %v829, 64
    %v832 = vpop.permute.xlu0 %831
    %v834 = vmul.f32 %v817, %v832
    %836 = vrot.lane.b32.xlu0 %v834, 32
    %v837 = vpop.permute.xlu0 %836
    %s839 = scalar_lea.vmem [#allocation3], 32
    %840 = vst.msk [vmem:[%s839] sm:$0xff] %vm308, %v837
    %s841 = scalar_lea.vmem [#allocation2], 40
    %v842 = vld [vmem:[%s841] sm:$0xff]
    %v843 = vsel %vm308, %v837, 0
    %845 = vmatprep.subr.mxu0 0.0
    %846 = vmatpush1.msra.mxu0 0.0
    %847 = vmatprep.subr.mxu0 0.0
    %848 = vmatpush1.msra.mxu0 0.0
    %849 = vmatprep.subr.mxu0 0.0
    %850 = vmatpush1.msra.mxu0 0.0
    %851 = vmatprep.subr.mxu0 0.0
    %852 = vmatpush1.msra.mxu0 0.0
    %853 = vmatprep.subr.mxu0 0.0
    %854 = vmatpush1.msra.mxu0 0.0
    %855 = vmatprep.subr.mxu0 0.0
    %856 = vmatpush1.msra.mxu0 0.0
    %857 = vmatprep.subr.mxu0 0.0
    %858 = vmatpush1.msra.mxu0 0.0
    %859 = vmatprep.subr.mxu0 0.0
    %860 = vmatpush1.msra.mxu0 0.0
    %861 = vmatprep.subr.mxu0 0.0
    %862 = vmatpush1.msra.mxu0 0.0
    %863 = vmatprep.subr.mxu0 0.0
    %864 = vmatpush1.msra.mxu0 0.0
    %865 = vmatprep.subr.mxu0 0.0
    %866 = vmatpush1.msra.mxu0 0.0
    %867 = vmatprep.subr.mxu0 0.0
    %868 = vmatpush1.msra.mxu0 0.0
    %869 = vmatprep.subr.mxu0 0.0
    %870 = vmatpush1.msra.mxu0 %v304
    %871 = vmatprep.subr.mxu0 0.0
    %872 = vmatpush1.msra.mxu0 %v303
    %873 = vmatprep.subr.mxu0 0.0
    %874 = vmatpush1.msra.mxu0 %v302
    %875 = vmatprep.subr.mxu0 0.0
    %876 = vmatpush1.msra.mxu0 %v301
    %877 = vmatprep.subr.mxu0 0.0
    %878 = vmatpush2.msra.mxu0 0.0
    %879 = vmatprep.subr.mxu0 0.0
    %880 = vmatpush2.msra.mxu0 0.0
    %881 = vmatprep.subr.mxu0 0.0
    %882 = vmatpush2.msra.mxu0 0.0
    %883 = vmatprep.subr.mxu0 0.0
    %884 = vmatpush2.msra.mxu0 0.0
    %885 = vmatprep.subr.mxu0 0.0
    %886 = vmatpush2.msra.mxu0 0.0
    %887 = vmatprep.subr.mxu0 0.0
    %888 = vmatpush2.msra.mxu0 0.0
    %889 = vmatprep.subr.mxu0 0.0
    %890 = vmatpush2.msra.mxu0 0.0
    %891 = vmatprep.subr.mxu0 0.0
    %892 = vmatpush2.msra.mxu0 0.0
    %893 = vmatprep.subr.mxu0 0.0
    %894 = vmatpush2.msra.mxu0 0.0
    %895 = vmatprep.subr.mxu0 0.0
    %896 = vmatpush2.msra.mxu0 0.0
    %897 = vmatprep.subr.mxu0 0.0
    %898 = vmatpush2.msra.mxu0 0.0
    %899 = vmatprep.subr.mxu0 0.0
    %900 = vmatpush2.msra.mxu0 0.0
    %901 = vmatprep.subr.mxu0 0.0
    %902 = vmatpush2.msra.mxu0 0.0
    %903 = vmatprep.subr.mxu0 0.0
    %904 = vmatpush2.msra.mxu0 0.0
    %905 = vmatprep.subr.mxu0 0.0
    %906 = vmatpush2.msra.mxu0 0.0
    %907 = vmatprep.subr.mxu0 0.0
    %908 = vmatpush2.msra.mxu0 0.0
    %909 = vmatprep.mubr.f32.mxu0 0.0
    %910 = vmatmul.mubr.f32.gmra.mxu0 %v843
    %v911 = vpop.f32.mrf.mxu0
    %v912 = vadd.f32 0.0, %v911
    %v913 = vpop.f32.mrf.mxu0
    %914 = vdwg.mxu0
    %v915 = vadd.f32 %v842, %v912
    %v916 = vtanh.pop %v915
    %v917 = vxor.u32 %v915, 2147483648
    %v918 = vmul.f32 %v917, 1.442695
    %v919 = vpow.pop %v918
    %v920 = vadd.f32 %v919, 1.0
    %v921 = vrcp.pop %v920
    %v922 = vmul.f32 1.0, %v921
    %v923 = vsel %vm156, %v916, %v922
    %v924 = vmul.f32 %v923, %v828
    %926 = vrot.lane.b32.xlu0 %v923, 64
    %v927 = vpop.permute.xlu0 %926
    %v929 = vmul.f32 %v923, %v927
    %931 = vrot.lane.b32.xlu0 %v929, 32
    %v932 = vpop.permute.xlu0 %931
    %v934 = vadd.f32 %v924, %v932
    %v935 = vtanh.pop %v934
    %937 = vrot.lane.b32.xlu0 %v935, 64
    %v938 = vpop.permute.xlu0 %937
    %v940 = vmul.f32 %v923, %v938
    %942 = vrot.lane.b32.xlu0 %v940, 32
    %v943 = vpop.permute.xlu0 %942
    %s945 = scalar_lea.vmem [#allocation3], 40
    %946 = vst.msk [vmem:[%s945] sm:$0xff] %vm308, %v943
    %s947 = scalar_lea.vmem [#allocation2], 48
    %v948 = vld [vmem:[%s947] sm:$0xff]
    %v949 = vsel %vm308, %v943, 0
    %951 = vmatprep.subr.mxu0 0.0
    %952 = vmatpush1.msra.mxu0 0.0
    %953 = vmatprep.subr.mxu0 0.0
    %954 = vmatpush1.msra.mxu0 0.0
    %955 = vmatprep.subr.mxu0 0.0
    %956 = vmatpush1.msra.mxu0 0.0
    %957 = vmatprep.subr.mxu0 0.0
    %958 = vmatpush1.msra.mxu0 0.0
    %959 = vmatprep.subr.mxu0 0.0
    %960 = vmatpush1.msra.mxu0 0.0
    %961 = vmatprep.subr.mxu0 0.0
    %962 = vmatpush1.msra.mxu0 0.0
    %963 = vmatprep.subr.mxu0 0.0
    %964 = vmatpush1.msra.mxu0 0.0
    %965 = vmatprep.subr.mxu0 0.0
    %966 = vmatpush1.msra.mxu0 0.0
    %967 = vmatprep.subr.mxu0 0.0
    %968 = vmatpush1.msra.mxu0 0.0
    %969 = vmatprep.subr.mxu0 0.0
    %970 = vmatpush1.msra.mxu0 0.0
    %971 = vmatprep.subr.mxu0 0.0
    %972 = vmatpush1.msra.mxu0 0.0
    %973 = vmatprep.subr.mxu0 0.0
    %974 = vmatpush1.msra.mxu0 0.0
    %975 = vmatprep.subr.mxu0 0.0
    %976 = vmatpush1.msra.mxu0 %v304
    %977 = vmatprep.subr.mxu0 0.0
    %978 = vmatpush1.msra.mxu0 %v303
    %979 = vmatprep.subr.mxu0 0.0
    %980 = vmatpush1.msra.mxu0 %v302
    %981 = vmatprep.subr.mxu0 0.0
    %982 = vmatpush1.msra.mxu0 %v301
    %983 = vmatprep.subr.mxu0 0.0
    %984 = vmatpush2.msra.mxu0 0.0
    %985 = vmatprep.subr.mxu0 0.0
    %986 = vmatpush2.msra.mxu0 0.0
    %987 = vmatprep.subr.mxu0 0.0
    %988 = vmatpush2.msra.mxu0 0.0
    %989 = vmatprep.subr.mxu0 0.0
    %990 = vmatpush2.msra.mxu0 0.0
    %991 = vmatprep.subr.mxu0 0.0
    %992 = vmatpush2.msra.mxu0 0.0
    %993 = vmatprep.subr.mxu0 0.0
    %994 = vmatpush2.msra.mxu0 0.0
    %995 = vmatprep.subr.mxu0 0.0
    %996 = vmatpush2.msra.mxu0 0.0
    %997 = vmatprep.subr.mxu0 0.0
    %998 = vmatpush2.msra.mxu0 0.0
    %999 = vmatprep.subr.mxu0 0.0
    %1000 = vmatpush2.msra.mxu0 0.0
    %1001 = vmatprep.subr.mxu0 0.0
    %1002 = vmatpush2.msra.mxu0 0.0
    %1003 = vmatprep.subr.mxu0 0.0
    %1004 = vmatpush2.msra.mxu0 0.0
    %1005 = vmatprep.subr.mxu0 0.0
    %1006 = vmatpush2.msra.mxu0 0.0
    %1007 = vmatprep.subr.mxu0 0.0
    %1008 = vmatpush2.msra.mxu0 0.0
    %1009 = vmatprep.subr.mxu0 0.0
    %1010 = vmatpush2.msra.mxu0 0.0
    %1011 = vmatprep.subr.mxu0 0.0
    %1012 = vmatpush2.msra.mxu0 0.0
    %1013 = vmatprep.subr.mxu0 0.0
    %1014 = vmatpush2.msra.mxu0 0.0
    %1015 = vmatprep.mubr.f32.mxu0 0.0
    %1016 = vmatmul.mubr.f32.gmra.mxu0 %v949
    %v1017 = vpop.f32.mrf.mxu0
    %v1018 = vadd.f32 0.0, %v1017
    %v1019 = vpop.f32.mrf.mxu0
    %1020 = vdwg.mxu0
    %v1021 = vadd.f32 %v948, %v1018
    %v1022 = vtanh.pop %v1021
    %v1023 = vxor.u32 %v1021, 2147483648
    %v1024 = vmul.f32 %v1023, 1.442695
    %v1025 = vpow.pop %v1024
    %v1026 = vadd.f32 %v1025, 1.0
    %v1027 = vrcp.pop %v1026
    %v1028 = vmul.f32 1.0, %v1027
    %v1029 = vsel %vm156, %v1022, %v1028
    %v1030 = vmul.f32 %v1029, %v934
    %1032 = vrot.lane.b32.xlu0 %v1029, 64
    %v1033 = vpop.permute.xlu0 %1032
    %v1035 = vmul.f32 %v1029, %v1033
    %1037 = vrot.lane.b32.xlu0 %v1035, 32
    %v1038 = vpop.permute.xlu0 %1037
    %v1040 = vadd.f32 %v1030, %v1038
    %v1041 = vtanh.pop %v1040
    %1043 = vrot.lane.b32.xlu0 %v1041, 64
    %v1044 = vpop.permute.xlu0 %1043
    %v1046 = vmul.f32 %v1029, %v1044
    %1048 = vrot.lane.b32.xlu0 %v1046, 32
    %v1049 = vpop.permute.xlu0 %1048
    %s1051 = scalar_lea.vmem [#allocation3], 48
    %1052 = vst.msk [vmem:[%s1051] sm:$0xff] %vm308, %v1049
    %s1053 = scalar_lea.vmem [#allocation2], 56
    %v1054 = vld [vmem:[%s1053] sm:$0xff]
    %v1055 = vsel %vm308, %v1049, 0
    %1057 = vmatprep.subr.mxu0 0.0
    %1058 = vmatpush1.msra.mxu0 0.0
    %1059 = vmatprep.subr.mxu0 0.0
    %1060 = vmatpush1.msra.mxu0 0.0
    %1061 = vmatprep.subr.mxu0 0.0
    %1062 = vmatpush1.msra.mxu0 0.0
    %1063 = vmatprep.subr.mxu0 0.0
    %1064 = vmatpush1.msra.mxu0 0.0
    %1065 = vmatprep.subr.mxu0 0.0
    %1066 = vmatpush1.msra.mxu0 0.0
    %1067 = vmatprep.subr.mxu0 0.0
    %1068 = vmatpush1.msra.mxu0 0.0
    %1069 = vmatprep.subr.mxu0 0.0
    %1070 = vmatpush1.msra.mxu0 0.0
    %1071 = vmatprep.subr.mxu0 0.0
    %1072 = vmatpush1.msra.mxu0 0.0
    %1073 = vmatprep.subr.mxu0 0.0
    %1074 = vmatpush1.msra.mxu0 0.0
    %1075 = vmatprep.subr.mxu0 0.0
    %1076 = vmatpush1.msra.mxu0 0.0
    %1077 = vmatprep.subr.mxu0 0.0
    %1078 = vmatpush1.msra.mxu0 0.0
    %1079 = vmatprep.subr.mxu0 0.0
    %1080 = vmatpush1.msra.mxu0 0.0
    %1081 = vmatprep.subr.mxu0 0.0
    %1082 = vmatpush1.msra.mxu0 %v304
    %1083 = vmatprep.subr.mxu0 0.0
    %1084 = vmatpush1.msra.mxu0 %v303
    %1085 = vmatprep.subr.mxu0 0.0
    %1086 = vmatpush1.msra.mxu0 %v302
    %1087 = vmatprep.subr.mxu0 0.0
    %1088 = vmatpush1.msra.mxu0 %v301
    %1089 = vmatprep.subr.mxu0 0.0
    %1090 = vmatpush2.msra.mxu0 0.0
    %1091 = vmatprep.subr.mxu0 0.0
    %1092 = vmatpush2.msra.mxu0 0.0
    %1093 = vmatprep.subr.mxu0 0.0
    %1094 = vmatpush2.msra.mxu0 0.0
    %1095 = vmatprep.subr.mxu0 0.0
    %1096 = vmatpush2.msra.mxu0 0.0
    %1097 = vmatprep.subr.mxu0 0.0
    %1098 = vmatpush2.msra.mxu0 0.0
    %1099 = vmatprep.subr.mxu0 0.0
    %1100 = vmatpush2.msra.mxu0 0.0
    %1101 = vmatprep.subr.mxu0 0.0
    %1102 = vmatpush2.msra.mxu0 0.0
    %1103 = vmatprep.subr.mxu0 0.0
    %1104 = vmatpush2.msra.mxu0 0.0
    %1105 = vmatprep.subr.mxu0 0.0
    %1106 = vmatpush2.msra.mxu0 0.0
    %1107 = vmatprep.subr.mxu0 0.0
    %1108 = vmatpush2.msra.mxu0 0.0
    %1109 = vmatprep.subr.mxu0 0.0
    %1110 = vmatpush2.msra.mxu0 0.0
    %1111 = vmatprep.subr.mxu0 0.0
    %1112 = vmatpush2.msra.mxu0 0.0
    %1113 = vmatprep.subr.mxu0 0.0
    %1114 = vmatpush2.msra.mxu0 0.0
    %1115 = vmatprep.subr.mxu0 0.0
    %1116 = vmatpush2.msra.mxu0 0.0
    %1117 = vmatprep.subr.mxu0 0.0
    %1118 = vmatpush2.msra.mxu0 0.0
    %1119 = vmatprep.subr.mxu0 0.0
    %1120 = vmatpush2.msra.mxu0 0.0
    %1121 = vmatprep.mubr.f32.mxu0 0.0
    %1122 = vmatmul.mubr.f32.gmra.mxu0 %v1055
    %v1123 = vpop.f32.mrf.mxu0
    %v1124 = vadd.f32 0.0, %v1123
    %v1125 = vpop.f32.mrf.mxu0
    %1126 = vdwg.mxu0
    %v1127 = vadd.f32 %v1054, %v1124
    %v1128 = vtanh.pop %v1127
    %v1129 = vxor.u32 %v1127, 2147483648
    %v1130 = vmul.f32 %v1129, 1.442695
    %v1131 = vpow.pop %v1130
    %v1132 = vadd.f32 %v1131, 1.0
    %v1133 = vrcp.pop %v1132
    %v1134 = vmul.f32 1.0, %v1133
    %v1135 = vsel %vm156, %v1128, %v1134
    %v1136 = vmul.f32 %v1135, %v1040
    %1138 = vrot.lane.b32.xlu0 %v1135, 64
    %v1139 = vpop.permute.xlu0 %1138
    %v1141 = vmul.f32 %v1135, %v1139
    %1143 = vrot.lane.b32.xlu0 %v1141, 32
    %v1144 = vpop.permute.xlu0 %1143
    %v1146 = vadd.f32 %v1136, %v1144
    %v1147 = vtanh.pop %v1146
    %1149 = vrot.lane.b32.xlu0 %v1147, 64
    %v1150 = vpop.permute.xlu0 %1149
    %v1152 = vmul.f32 %v1135, %v1150
    %1154 = vrot.lane.b32.xlu0 %v1152, 32
    %v1155 = vpop.permute.xlu0 %1154
    %s1157 = scalar_lea.vmem [#allocation3], 56
    %1158 = vst.msk [vmem:[%s1157] sm:$0xff] %vm308, %v1155
    %1159 = vst.msk [vmem:[#allocation19] sm:$0xff] %vm308, %v1155
    %1161 = vrot.lane.b32.xlu0 %v1146, 96
    %v1162 = vpop.permute.xlu0 %1161
    %1164 = vst.msk [vmem:[#allocation21] sm:$0xff] %vm308, %v1162
    %v1165 = vld [vmem:[#allocation3] sm:$0xff]
    %v1166 = vld [vmem:[#allocation3 + $0x8] sm:$0xff]
    %v1167 = vld [vmem:[#allocation3 + $0x10] sm:$0xff]
    %v1168 = vld [vmem:[#allocation3 + $0x18] sm:$0xff]
    %v1169 = vld [vmem:[#allocation3 + $0x20] sm:$0xff]
    %v1170 = vld [vmem:[#allocation3 + $0x28] sm:$0xff]
    %v1171 = vld [vmem:[#allocation3 + $0x30] sm:$0xff]
    %v1172 = vld [vmem:[#allocation3 + $0x38] sm:$0xff]
    %v1173 = vld [vmem:[#allocation13] sm:$0xff]
    %v1174 = vld [vmem:[#allocation13 + $0x8] sm:$0xff]
    %v1175 = vld [vmem:[#allocation13 + $0x10] sm:$0xff]
    %v1176 = vld [vmem:[#allocation13 + $0x18] sm:$0xff]
    %v1177 = vld [vmem:[%s8] sm:$0x1]
    %v1179 = vlaneseq
    %v1180 = vshrl.u32 %v1179, 7
    %v1181 = vsub.s32 0, %v1180
    %v1182 = vrot.slane %v1177, %v1181
    %v1185 = vsel %vm308, %v1165, 0
    %v1188 = vsel %vm308, %v1166, 0
    %v1191 = vsel %vm308, %v1167, 0
    %v1194 = vsel %vm308, %v1168, 0
    %v1197 = vsel %vm308, %v1169, 0
    %v1200 = vsel %vm308, %v1170, 0
    %v1203 = vsel %vm308, %v1171, 0
    %v1206 = vsel %vm308, %v1172, 0
    %1208 = vmatprep.subr.mxu0 0.0
    %1209 = vmatpush1.msra.mxu0 0.0
    %1210 = vmatprep.subr.mxu0 0.0
    %1211 = vmatpush1.msra.mxu0 0.0
    %1212 = vmatprep.subr.mxu0 0.0
    %1213 = vmatpush1.msra.mxu0 0.0
    %1214 = vmatprep.subr.mxu0 0.0
    %1215 = vmatpush1.msra.mxu0 0.0
    %1216 = vmatprep.subr.mxu0 0.0
    %1217 = vmatpush1.msra.mxu0 0.0
    %1218 = vmatprep.subr.mxu0 0.0
    %1219 = vmatpush1.msra.mxu0 0.0
    %1220 = vmatprep.subr.mxu0 0.0
    %1221 = vmatpush1.msra.mxu0 0.0
    %1222 = vmatprep.subr.mxu0 0.0
    %1223 = vmatpush1.msra.mxu0 0.0
    %1224 = vmatprep.subr.mxu0 0.0
    %1225 = vmatpush1.msra.mxu0 0.0
    %1226 = vmatprep.subr.mxu0 0.0
    %1227 = vmatpush1.msra.mxu0 0.0
    %1228 = vmatprep.subr.mxu0 0.0
    %1229 = vmatpush1.msra.mxu0 0.0
    %1230 = vmatprep.subr.mxu0 0.0
    %1231 = vmatpush1.msra.mxu0 0.0
    %1232 = vmatprep.subr.mxu0 0.0
    %1233 = vmatpush1.msra.mxu0 %v1176
    %1234 = vmatprep.subr.mxu0 0.0
    %1235 = vmatpush1.msra.mxu0 %v1175
    %1236 = vmatprep.subr.mxu0 0.0
    %1237 = vmatpush1.msra.mxu0 %v1174
    %1238 = vmatprep.subr.mxu0 0.0
    %1239 = vmatpush1.msra.mxu0 %v1173
    %1240 = vmatprep.subr.mxu0 0.0
    %1241 = vmatpush2.msra.mxu0 0.0
    %1242 = vmatprep.subr.mxu0 0.0
    %1243 = vmatpush2.msra.mxu0 0.0
    %1244 = vmatprep.subr.mxu0 0.0
    %1245 = vmatpush2.msra.mxu0 0.0
    %1246 = vmatprep.subr.mxu0 0.0
    %1247 = vmatpush2.msra.mxu0 0.0
    %1248 = vmatprep.subr.mxu0 0.0
    %1249 = vmatpush2.msra.mxu0 0.0
    %1250 = vmatprep.subr.mxu0 0.0
    %1251 = vmatpush2.msra.mxu0 0.0
    %1252 = vmatprep.subr.mxu0 0.0
    %1253 = vmatpush2.msra.mxu0 0.0
    %1254 = vmatprep.subr.mxu0 0.0
    %1255 = vmatpush2.msra.mxu0 0.0
    %1256 = vmatprep.subr.mxu0 0.0
    %1257 = vmatpush2.msra.mxu0 0.0
    %1258 = vmatprep.subr.mxu0 0.0
    %1259 = vmatpush2.msra.mxu0 0.0
    %1260 = vmatprep.subr.mxu0 0.0
    %1261 = vmatpush2.msra.mxu0 0.0
    %1262 = vmatprep.subr.mxu0 0.0
    %1263 = vmatpush2.msra.mxu0 0.0
    %1264 = vmatprep.subr.mxu0 0.0
    %1265 = vmatpush2.msra.mxu0 0.0
    %1266 = vmatprep.subr.mxu0 0.0
    %1267 = vmatpush2.msra.mxu0 0.0
    %1268 = vmatprep.subr.mxu0 0.0
    %1269 = vmatpush2.msra.mxu0 0.0
    %1270 = vmatprep.subr.mxu0 0.0
    %1271 = vmatpush2.msra.mxu0 0.0
    %1272 = vmatprep.mubr.f32.mxu0 0.0
    %1273 = vmatmul.mubr.f32.gmra.mxu0 %v1185
    %v1274 = vpop.f32.mrf.mxu0
    %v1275 = vadd.f32 %v1182, %v1274
    %v1276 = vpop.f32.mrf.mxu0
    %1277 = vmatprep.mubr.f32.mxu0 0.0
    %1278 = vmatmul.mubr.f32.gmra.mxu0 %v1188
    %v1279 = vpop.f32.mrf.mxu0
    %v1280 = vadd.f32 %v1182, %v1279
    %v1281 = vpop.f32.mrf.mxu0
    %1282 = vmatprep.mubr.f32.mxu0 0.0
    %1283 = vmatmul.mubr.f32.gmra.mxu0 %v1191
    %v1284 = vpop.f32.mrf.mxu0
    %v1285 = vadd.f32 %v1182, %v1284
    %v1286 = vpop.f32.mrf.mxu0
    %1287 = vmatprep.mubr.f32.mxu0 0.0
    %1288 = vmatmul.mubr.f32.gmra.mxu0 %v1194
    %v1289 = vpop.f32.mrf.mxu0
    %v1290 = vadd.f32 %v1182, %v1289
    %v1291 = vpop.f32.mrf.mxu0
    %1292 = vmatprep.mubr.f32.mxu0 0.0
    %1293 = vmatmul.mubr.f32.gmra.mxu0 %v1197
    %v1294 = vpop.f32.mrf.mxu0
    %v1295 = vadd.f32 %v1182, %v1294
    %v1296 = vpop.f32.mrf.mxu0
    %1297 = vmatprep.mubr.f32.mxu0 0.0
    %1298 = vmatmul.mubr.f32.gmra.mxu0 %v1200
    %v1299 = vpop.f32.mrf.mxu0
    %v1300 = vadd.f32 %v1182, %v1299
    %v1301 = vpop.f32.mrf.mxu0
    %1302 = vmatprep.mubr.f32.mxu0 0.0
    %1303 = vmatmul.mubr.f32.gmra.mxu0 %v1203
    %v1304 = vpop.f32.mrf.mxu0
    %v1305 = vadd.f32 %v1182, %v1304
    %v1306 = vpop.f32.mrf.mxu0
    %1307 = vmatprep.mubr.f32.mxu0 0.0
    %1308 = vmatmul.mubr.f32.gmra.mxu0 %v1206
    %v1309 = vpop.f32.mrf.mxu0
    %v1310 = vadd.f32 %v1182, %v1309
    %v1311 = vpop.f32.mrf.mxu0
    %1312 = vdwg.mxu0
    %1313 = vst [vmem:[#allocation2] sm:$0xff] %v1275
    %1314 = vst [vmem:[#allocation2 + $0x8] sm:$0xff] %v1280
    %1315 = vst [vmem:[#allocation2 + $0x10] sm:$0xff] %v1285
    %1316 = vst [vmem:[#allocation2 + $0x18] sm:$0xff] %v1290
    %1317 = vst [vmem:[#allocation2 + $0x20] sm:$0xff] %v1295
    %1318 = vst [vmem:[#allocation2 + $0x28] sm:$0xff] %v1300
    %1319 = vst [vmem:[#allocation2 + $0x30] sm:$0xff] %v1305
    %1320 = vst [vmem:[#allocation2 + $0x38] sm:$0xff] %v1310
    %v1321 = vld [vmem:[#allocation15] sm:$0xff]
    %v1322 = vld [vmem:[#allocation15 + $0x8] sm:$0xff]
    %v1323 = vld [vmem:[#allocation15 + $0x10] sm:$0xff]
    %v1324 = vld [vmem:[#allocation15 + $0x18] sm:$0xff]
    %s1325 = scalar_lea.vmem [#allocation7], 8
    %v1326 = vld [vmem:[%s1325] sm:$0xff]
    %s1327 = scalar_lea.vmem [#allocation9], 8
    %v1328 = vld [vmem:[%s1327] sm:$0xff]
    %v1329 = vld [vmem:[#allocation2] sm:$0xff]
    %v1331 = vsel %vm308, %v1326, 0
    %1333 = vmatprep.subr.mxu0 0.0
    %1334 = vmatpush1.msra.mxu0 0.0
    %1335 = vmatprep.subr.mxu0 0.0
    %1336 = vmatpush1.msra.mxu0 0.0
    %1337 = vmatprep.subr.mxu0 0.0
    %1338 = vmatpush1.msra.mxu0 0.0
    %1339 = vmatprep.subr.mxu0 0.0
    %1340 = vmatpush1.msra.mxu0 0.0
    %1341 = vmatprep.subr.mxu0 0.0
    %1342 = vmatpush1.msra.mxu0 0.0
    %1343 = vmatprep.subr.mxu0 0.0
    %1344 = vmatpush1.msra.mxu0 0.0
    %1345 = vmatprep.subr.mxu0 0.0
    %1346 = vmatpush1.msra.mxu0 0.0
    %1347 = vmatprep.subr.mxu0 0.0
    %1348 = vmatpush1.msra.mxu0 0.0
    %1349 = vmatprep.subr.mxu0 0.0
    %1350 = vmatpush1.msra.mxu0 0.0
    %1351 = vmatprep.subr.mxu0 0.0
    %1352 = vmatpush1.msra.mxu0 0.0
    %1353 = vmatprep.subr.mxu0 0.0
    %1354 = vmatpush1.msra.mxu0 0.0
    %1355 = vmatprep.subr.mxu0 0.0
    %1356 = vmatpush1.msra.mxu0 0.0
    %1357 = vmatprep.subr.mxu0 0.0
    %1358 = vmatpush1.msra.mxu0 %v1324
    %1359 = vmatprep.subr.mxu0 0.0
    %1360 = vmatpush1.msra.mxu0 %v1323
    %1361 = vmatprep.subr.mxu0 0.0
    %1362 = vmatpush1.msra.mxu0 %v1322
    %1363 = vmatprep.subr.mxu0 0.0
    %1364 = vmatpush1.msra.mxu0 %v1321
    %1365 = vmatprep.subr.mxu0 0.0
    %1366 = vmatpush2.msra.mxu0 0.0
    %1367 = vmatprep.subr.mxu0 0.0
    %1368 = vmatpush2.msra.mxu0 0.0
    %1369 = vmatprep.subr.mxu0 0.0
    %1370 = vmatpush2.msra.mxu0 0.0
    %1371 = vmatprep.subr.mxu0 0.0
    %1372 = vmatpush2.msra.mxu0 0.0
    %1373 = vmatprep.subr.mxu0 0.0
    %1374 = vmatpush2.msra.mxu0 0.0
    %1375 = vmatprep.subr.mxu0 0.0
    %1376 = vmatpush2.msra.mxu0 0.0
    %1377 = vmatprep.subr.mxu0 0.0
    %1378 = vmatpush2.msra.mxu0 0.0
    %1379 = vmatprep.subr.mxu0 0.0
    %1380 = vmatpush2.msra.mxu0 0.0
    %1381 = vmatprep.subr.mxu0 0.0
    %1382 = vmatpush2.msra.mxu0 0.0
    %1383 = vmatprep.subr.mxu0 0.0
    %1384 = vmatpush2.msra.mxu0 0.0
    %1385 = vmatprep.subr.mxu0 0.0
    %1386 = vmatpush2.msra.mxu0 0.0
    %1387 = vmatprep.subr.mxu0 0.0
    %1388 = vmatpush2.msra.mxu0 0.0
    %1389 = vmatprep.subr.mxu0 0.0
    %1390 = vmatpush2.msra.mxu0 0.0
    %1391 = vmatprep.subr.mxu0 0.0
    %1392 = vmatpush2.msra.mxu0 0.0
    %1393 = vmatprep.subr.mxu0 0.0
    %1394 = vmatpush2.msra.mxu0 0.0
    %1395 = vmatprep.subr.mxu0 0.0
    %1396 = vmatpush2.msra.mxu0 0.0
    %1397 = vmatprep.mubr.f32.mxu0 0.0
    %1398 = vmatmul.mubr.f32.gmra.mxu0 %v1331
    %v1399 = vpop.f32.mrf.mxu0
    %v1400 = vadd.f32 0.0, %v1399
    %v1401 = vpop.f32.mrf.mxu0
    %1402 = vdwg.mxu0
    %v1403 = vadd.f32 %v1329, %v1400
    %v1404 = vtanh.pop %v1403
    %v1405 = vxor.u32 %v1403, 2147483648
    %v1406 = vmul.f32 %v1405, 1.442695
    %v1407 = vpow.pop %v1406
    %v1408 = vadd.f32 %v1407, 1.0
    %v1409 = vrcp.pop %v1408
    %v1410 = vmul.f32 1.0, %v1409
    %v1411 = vsel %vm156, %v1404, %v1410
    %1413 = vrot.lane.b32.xlu0 %v1328, 32
    %v1414 = vpop.permute.xlu0 %1413
    %v1416 = vmul.f32 %v1411, %v1414
    %1418 = vrot.lane.b32.xlu0 %v1411, 64
    %v1419 = vpop.permute.xlu0 %1418
    %v1421 = vmul.f32 %v1411, %v1419
    %1423 = vrot.lane.b32.xlu0 %v1421, 32
    %v1424 = vpop.permute.xlu0 %1423
    %v1426 = vadd.f32 %v1416, %v1424
    %v1427 = vtanh.pop %v1426
    %1429 = vrot.lane.b32.xlu0 %v1427, 64
    %v1430 = vpop.permute.xlu0 %1429
    %v1432 = vmul.f32 %v1411, %v1430
    %1434 = vrot.lane.b32.xlu0 %v1432, 32
    %v1435 = vpop.permute.xlu0 %1434
    %1437 = vst.msk [vmem:[#allocation3] sm:$0xff] %vm308, %v1435
    %v1438 = vld [vmem:[%s417] sm:$0xff]
    %v1439 = vsel %vm308, %v1435, 0
    %1441 = vmatprep.subr.mxu0 0.0
    %1442 = vmatpush1.msra.mxu0 0.0
    %1443 = vmatprep.subr.mxu0 0.0
    %1444 = vmatpush1.msra.mxu0 0.0
    %1445 = vmatprep.subr.mxu0 0.0
    %1446 = vmatpush1.msra.mxu0 0.0
    %1447 = vmatprep.subr.mxu0 0.0
    %1448 = vmatpush1.msra.mxu0 0.0
    %1449 = vmatprep.subr.mxu0 0.0
    %1450 = vmatpush1.msra.mxu0 0.0
    %1451 = vmatprep.subr.mxu0 0.0
    %1452 = vmatpush1.msra.mxu0 0.0
    %1453 = vmatprep.subr.mxu0 0.0
    %1454 = vmatpush1.msra.mxu0 0.0
    %1455 = vmatprep.subr.mxu0 0.0
    %1456 = vmatpush1.msra.mxu0 0.0
    %1457 = vmatprep.subr.mxu0 0.0
    %1458 = vmatpush1.msra.mxu0 0.0
    %1459 = vmatprep.subr.mxu0 0.0
    %1460 = vmatpush1.msra.mxu0 0.0
    %1461 = vmatprep.subr.mxu0 0.0
    %1462 = vmatpush1.msra.mxu0 0.0
    %1463 = vmatprep.subr.mxu0 0.0
    %1464 = vmatpush1.msra.mxu0 0.0
    %1465 = vmatprep.subr.mxu0 0.0
    %1466 = vmatpush1.msra.mxu0 %v1324
    %1467 = vmatprep.subr.mxu0 0.0
    %1468 = vmatpush1.msra.mxu0 %v1323
    %1469 = vmatprep.subr.mxu0 0.0
    %1470 = vmatpush1.msra.mxu0 %v1322
    %1471 = vmatprep.subr.mxu0 0.0
    %1472 = vmatpush1.msra.mxu0 %v1321
    %1473 = vmatprep.subr.mxu0 0.0
    %1474 = vmatpush2.msra.mxu0 0.0
    %1475 = vmatprep.subr.mxu0 0.0
    %1476 = vmatpush2.msra.mxu0 0.0
    %1477 = vmatprep.subr.mxu0 0.0
    %1478 = vmatpush2.msra.mxu0 0.0
    %1479 = vmatprep.subr.mxu0 0.0
    %1480 = vmatpush2.msra.mxu0 0.0
    %1481 = vmatprep.subr.mxu0 0.0
    %1482 = vmatpush2.msra.mxu0 0.0
    %1483 = vmatprep.subr.mxu0 0.0
    %1484 = vmatpush2.msra.mxu0 0.0
    %1485 = vmatprep.subr.mxu0 0.0
    %1486 = vmatpush2.msra.mxu0 0.0
    %1487 = vmatprep.subr.mxu0 0.0
    %1488 = vmatpush2.msra.mxu0 0.0
    %1489 = vmatprep.subr.mxu0 0.0
    %1490 = vmatpush2.msra.mxu0 0.0
    %1491 = vmatprep.subr.mxu0 0.0
    %1492 = vmatpush2.msra.mxu0 0.0
    %1493 = vmatprep.subr.mxu0 0.0
    %1494 = vmatpush2.msra.mxu0 0.0
    %1495 = vmatprep.subr.mxu0 0.0
    %1496 = vmatpush2.msra.mxu0 0.0
    %1497 = vmatprep.subr.mxu0 0.0
    %1498 = vmatpush2.msra.mxu0 0.0
    %1499 = vmatprep.subr.mxu0 0.0
    %1500 = vmatpush2.msra.mxu0 0.0
    %1501 = vmatprep.subr.mxu0 0.0
    %1502 = vmatpush2.msra.mxu0 0.0
    %1503 = vmatprep.subr.mxu0 0.0
    %1504 = vmatpush2.msra.mxu0 0.0
    %1505 = vmatprep.mubr.f32.mxu0 0.0
    %1506 = vmatmul.mubr.f32.gmra.mxu0 %v1439
    %v1507 = vpop.f32.mrf.mxu0
    %v1508 = vadd.f32 0.0, %v1507
    %v1509 = vpop.f32.mrf.mxu0
    %1510 = vdwg.mxu0
    %v1511 = vadd.f32 %v1438, %v1508
    %v1512 = vtanh.pop %v1511
    %v1513 = vxor.u32 %v1511, 2147483648
    %v1514 = vmul.f32 %v1513, 1.442695
    %v1515 = vpow.pop %v1514
    %v1516 = vadd.f32 %v1515, 1.0
    %v1517 = vrcp.pop %v1516
    %v1518 = vmul.f32 1.0, %v1517
    %v1519 = vsel %vm156, %v1512, %v1518
    %v1520 = vmul.f32 %v1519, %v1426
    %1522 = vrot.lane.b32.xlu0 %v1519, 64
    %v1523 = vpop.permute.xlu0 %1522
    %v1525 = vmul.f32 %v1519, %v1523
    %1527 = vrot.lane.b32.xlu0 %v1525, 32
    %v1528 = vpop.permute.xlu0 %1527
    %v1530 = vadd.f32 %v1520, %v1528
    %v1531 = vtanh.pop %v1530
    %1533 = vrot.lane.b32.xlu0 %v1531, 64
    %v1534 = vpop.permute.xlu0 %1533
    %v1536 = vmul.f32 %v1519, %v1534
    %1538 = vrot.lane.b32.xlu0 %v1536, 32
    %v1539 = vpop.permute.xlu0 %1538
    %1541 = vst.msk [vmem:[%s521] sm:$0xff] %vm308, %v1539
    %v1542 = vld [vmem:[%s523] sm:$0xff]
    %v1543 = vsel %vm308, %v1539, 0
    %1545 = vmatprep.subr.mxu0 0.0
    %1546 = vmatpush1.msra.mxu0 0.0
    %1547 = vmatprep.subr.mxu0 0.0
    %1548 = vmatpush1.msra.mxu0 0.0
    %1549 = vmatprep.subr.mxu0 0.0
    %1550 = vmatpush1.msra.mxu0 0.0
    %1551 = vmatprep.subr.mxu0 0.0
    %1552 = vmatpush1.msra.mxu0 0.0
    %1553 = vmatprep.subr.mxu0 0.0
    %1554 = vmatpush1.msra.mxu0 0.0
    %1555 = vmatprep.subr.mxu0 0.0
    %1556 = vmatpush1.msra.mxu0 0.0
    %1557 = vmatprep.subr.mxu0 0.0
    %1558 = vmatpush1.msra.mxu0 0.0
    %1559 = vmatprep.subr.mxu0 0.0
    %1560 = vmatpush1.msra.mxu0 0.0
    %1561 = vmatprep.subr.mxu0 0.0
    %1562 = vmatpush1.msra.mxu0 0.0
    %1563 = vmatprep.subr.mxu0 0.0
    %1564 = vmatpush1.msra.mxu0 0.0
    %1565 = vmatprep.subr.mxu0 0.0
    %1566 = vmatpush1.msra.mxu0 0.0
    %1567 = vmatprep.subr.mxu0 0.0
    %1568 = vmatpush1.msra.mxu0 0.0
    %1569 = vmatprep.subr.mxu0 0.0
    %1570 = vmatpush1.msra.mxu0 %v1324
    %1571 = vmatprep.subr.mxu0 0.0
    %1572 = vmatpush1.msra.mxu0 %v1323
    %1573 = vmatprep.subr.mxu0 0.0
    %1574 = vmatpush1.msra.mxu0 %v1322
    %1575 = vmatprep.subr.mxu0 0.0
    %1576 = vmatpush1.msra.mxu0 %v1321
    %1577 = vmatprep.subr.mxu0 0.0
    %1578 = vmatpush2.msra.mxu0 0.0
    %1579 = vmatprep.subr.mxu0 0.0
    %1580 = vmatpush2.msra.mxu0 0.0
    %1581 = vmatprep.subr.mxu0 0.0
    %1582 = vmatpush2.msra.mxu0 0.0
    %1583 = vmatprep.subr.mxu0 0.0
    %1584 = vmatpush2.msra.mxu0 0.0
    %1585 = vmatprep.subr.mxu0 0.0
    %1586 = vmatpush2.msra.mxu0 0.0
    %1587 = vmatprep.subr.mxu0 0.0
    %1588 = vmatpush2.msra.mxu0 0.0
    %1589 = vmatprep.subr.mxu0 0.0
    %1590 = vmatpush2.msra.mxu0 0.0
    %1591 = vmatprep.subr.mxu0 0.0
    %1592 = vmatpush2.msra.mxu0 0.0
    %1593 = vmatprep.subr.mxu0 0.0
    %1594 = vmatpush2.msra.mxu0 0.0
    %1595 = vmatprep.subr.mxu0 0.0
    %1596 = vmatpush2.msra.mxu0 0.0
    %1597 = vmatprep.subr.mxu0 0.0
    %1598 = vmatpush2.msra.mxu0 0.0
    %1599 = vmatprep.subr.mxu0 0.0
    %1600 = vmatpush2.msra.mxu0 0.0
    %1601 = vmatprep.subr.mxu0 0.0
    %1602 = vmatpush2.msra.mxu0 0.0
    %1603 = vmatprep.subr.mxu0 0.0
    %1604 = vmatpush2.msra.mxu0 0.0
    %1605 = vmatprep.subr.mxu0 0.0
    %1606 = vmatpush2.msra.mxu0 0.0
    %1607 = vmatprep.subr.mxu0 0.0
    %1608 = vmatpush2.msra.mxu0 0.0
    %1609 = vmatprep.mubr.f32.mxu0 0.0
    %1610 = vmatmul.mubr.f32.gmra.mxu0 %v1543
    %v1611 = vpop.f32.mrf.mxu0
    %v1612 = vadd.f32 0.0, %v1611
    %v1613 = vpop.f32.mrf.mxu0
    %1614 = vdwg.mxu0
    %v1615 = vadd.f32 %v1542, %v1612
    %v1616 = vtanh.pop %v1615
    %v1617 = vxor.u32 %v1615, 2147483648
    %v1618 = vmul.f32 %v1617, 1.442695
    %v1619 = vpow.pop %v1618
    %v1620 = vadd.f32 %v1619, 1.0
    %v1621 = vrcp.pop %v1620
    %v1622 = vmul.f32 1.0, %v1621
    %v1623 = vsel %vm156, %v1616, %v1622
    %v1624 = vmul.f32 %v1623, %v1530
    %1626 = vrot.lane.b32.xlu0 %v1623, 64
    %v1627 = vpop.permute.xlu0 %1626
    %v1629 = vmul.f32 %v1623, %v1627
    %1631 = vrot.lane.b32.xlu0 %v1629, 32
    %v1632 = vpop.permute.xlu0 %1631
    %v1634 = vadd.f32 %v1624, %v1632
    %v1635 = vtanh.pop %v1634
    %1637 = vrot.lane.b32.xlu0 %v1635, 64
    %v1638 = vpop.permute.xlu0 %1637
    %v1640 = vmul.f32 %v1623, %v1638
    %1642 = vrot.lane.b32.xlu0 %v1640, 32
    %v1643 = vpop.permute.xlu0 %1642
    %1645 = vst.msk [vmem:[%s627] sm:$0xff] %vm308, %v1643
    %v1646 = vld [vmem:[%s629] sm:$0xff]
    %v1647 = vsel %vm308, %v1643, 0
    %1649 = vmatprep.subr.mxu0 0.0
    %1650 = vmatpush1.msra.mxu0 0.0
    %1651 = vmatprep.subr.mxu0 0.0
    %1652 = vmatpush1.msra.mxu0 0.0
    %1653 = vmatprep.subr.mxu0 0.0
    %1654 = vmatpush1.msra.mxu0 0.0
    %1655 = vmatprep.subr.mxu0 0.0
    %1656 = vmatpush1.msra.mxu0 0.0
    %1657 = vmatprep.subr.mxu0 0.0
    %1658 = vmatpush1.msra.mxu0 0.0
    %1659 = vmatprep.subr.mxu0 0.0
    %1660 = vmatpush1.msra.mxu0 0.0
    %1661 = vmatprep.subr.mxu0 0.0
    %1662 = vmatpush1.msra.mxu0 0.0
    %1663 = vmatprep.subr.mxu0 0.0
    %1664 = vmatpush1.msra.mxu0 0.0
    %1665 = vmatprep.subr.mxu0 0.0
    %1666 = vmatpush1.msra.mxu0 0.0
    %1667 = vmatprep.subr.mxu0 0.0
    %1668 = vmatpush1.msra.mxu0 0.0
    %1669 = vmatprep.subr.mxu0 0.0
    %1670 = vmatpush1.msra.mxu0 0.0
    %1671 = vmatprep.subr.mxu0 0.0
    %1672 = vmatpush1.msra.mxu0 0.0
    %1673 = vmatprep.subr.mxu0 0.0
    %1674 = vmatpush1.msra.mxu0 %v1324
    %1675 = vmatprep.subr.mxu0 0.0
    %1676 = vmatpush1.msra.mxu0 %v1323
    %1677 = vmatprep.subr.mxu0 0.0
    %1678 = vmatpush1.msra.mxu0 %v1322
    %1679 = vmatprep.subr.mxu0 0.0
    %1680 = vmatpush1.msra.mxu0 %v1321
    %1681 = vmatprep.subr.mxu0 0.0
    %1682 = vmatpush2.msra.mxu0 0.0
    %1683 = vmatprep.subr.mxu0 0.0
    %1684 = vmatpush2.msra.mxu0 0.0
    %1685 = vmatprep.subr.mxu0 0.0
    %1686 = vmatpush2.msra.mxu0 0.0
    %1687 = vmatprep.subr.mxu0 0.0
    %1688 = vmatpush2.msra.mxu0 0.0
    %1689 = vmatprep.subr.mxu0 0.0
    %1690 = vmatpush2.msra.mxu0 0.0
    %1691 = vmatprep.subr.mxu0 0.0
    %1692 = vmatpush2.msra.mxu0 0.0
    %1693 = vmatprep.subr.mxu0 0.0
    %1694 = vmatpush2.msra.mxu0 0.0
    %1695 = vmatprep.subr.mxu0 0.0
    %1696 = vmatpush2.msra.mxu0 0.0
    %1697 = vmatprep.subr.mxu0 0.0
    %1698 = vmatpush2.msra.mxu0 0.0
    %1699 = vmatprep.subr.mxu0 0.0
    %1700 = vmatpush2.msra.mxu0 0.0
    %1701 = vmatprep.subr.mxu0 0.0
    %1702 = vmatpush2.msra.mxu0 0.0
    %1703 = vmatprep.subr.mxu0 0.0
    %1704 = vmatpush2.msra.mxu0 0.0
    %1705 = vmatprep.subr.mxu0 0.0
    %1706 = vmatpush2.msra.mxu0 0.0
    %1707 = vmatprep.subr.mxu0 0.0
    %1708 = vmatpush2.msra.mxu0 0.0
    %1709 = vmatprep.subr.mxu0 0.0
    %1710 = vmatpush2.msra.mxu0 0.0
    %1711 = vmatprep.subr.mxu0 0.0
    %1712 = vmatpush2.msra.mxu0 0.0
    %1713 = vmatprep.mubr.f32.mxu0 0.0
    %1714 = vmatmul.mubr.f32.gmra.mxu0 %v1647
    %v1715 = vpop.f32.mrf.mxu0
    %v1716 = vadd.f32 0.0, %v1715
    %v1717 = vpop.f32.mrf.mxu0
    %1718 = vdwg.mxu0
    %v1719 = vadd.f32 %v1646, %v1716
    %v1720 = vtanh.pop %v1719
    %v1721 = vxor.u32 %v1719, 2147483648
    %v1722 = vmul.f32 %v1721, 1.442695
    %v1723 = vpow.pop %v1722
    %v1724 = vadd.f32 %v1723, 1.0
    %v1725 = vrcp.pop %v1724
    %v1726 = vmul.f32 1.0, %v1725
    %v1727 = vsel %vm156, %v1720, %v1726
    %v1728 = vmul.f32 %v1727, %v1634
    %1730 = vrot.lane.b32.xlu0 %v1727, 64
    %v1731 = vpop.permute.xlu0 %1730
    %v1733 = vmul.f32 %v1727, %v1731
    %1735 = vrot.lane.b32.xlu0 %v1733, 32
    %v1736 = vpop.permute.xlu0 %1735
    %v1738 = vadd.f32 %v1728, %v1736
    %v1739 = vtanh.pop %v1738
    %1741 = vrot.lane.b32.xlu0 %v1739, 64
    %v1742 = vpop.permute.xlu0 %1741
    %v1744 = vmul.f32 %v1727, %v1742
    %1746 = vrot.lane.b32.xlu0 %v1744, 32
    %v1747 = vpop.permute.xlu0 %1746
    %1749 = vst.msk [vmem:[%s733] sm:$0xff] %vm308, %v1747
    %v1750 = vld [vmem:[%s735] sm:$0xff]
    %v1751 = vsel %vm308, %v1747, 0
    %1753 = vmatprep.subr.mxu0 0.0
    %1754 = vmatpush1.msra.mxu0 0.0
    %1755 = vmatprep.subr.mxu0 0.0
    %1756 = vmatpush1.msra.mxu0 0.0
    %1757 = vmatprep.subr.mxu0 0.0
    %1758 = vmatpush1.msra.mxu0 0.0
    %1759 = vmatprep.subr.mxu0 0.0
    %1760 = vmatpush1.msra.mxu0 0.0
    %1761 = vmatprep.subr.mxu0 0.0
    %1762 = vmatpush1.msra.mxu0 0.0
    %1763 = vmatprep.subr.mxu0 0.0
    %1764 = vmatpush1.msra.mxu0 0.0
    %1765 = vmatprep.subr.mxu0 0.0
    %1766 = vmatpush1.msra.mxu0 0.0
    %1767 = vmatprep.subr.mxu0 0.0
    %1768 = vmatpush1.msra.mxu0 0.0
    %1769 = vmatprep.subr.mxu0 0.0
    %1770 = vmatpush1.msra.mxu0 0.0
    %1771 = vmatprep.subr.mxu0 0.0
    %1772 = vmatpush1.msra.mxu0 0.0
    %1773 = vmatprep.subr.mxu0 0.0
    %1774 = vmatpush1.msra.mxu0 0.0
    %1775 = vmatprep.subr.mxu0 0.0
    %1776 = vmatpush1.msra.mxu0 0.0
    %1777 = vmatprep.subr.mxu0 0.0
    %1778 = vmatpush1.msra.mxu0 %v1324
    %1779 = vmatprep.subr.mxu0 0.0
    %1780 = vmatpush1.msra.mxu0 %v1323
    %1781 = vmatprep.subr.mxu0 0.0
    %1782 = vmatpush1.msra.mxu0 %v1322
    %1783 = vmatprep.subr.mxu0 0.0
    %1784 = vmatpush1.msra.mxu0 %v1321
    %1785 = vmatprep.subr.mxu0 0.0
    %1786 = vmatpush2.msra.mxu0 0.0
    %1787 = vmatprep.subr.mxu0 0.0
    %1788 = vmatpush2.msra.mxu0 0.0
    %1789 = vmatprep.subr.mxu0 0.0
    %1790 = vmatpush2.msra.mxu0 0.0
    %1791 = vmatprep.subr.mxu0 0.0
    %1792 = vmatpush2.msra.mxu0 0.0
    %1793 = vmatprep.subr.mxu0 0.0
    %1794 = vmatpush2.msra.mxu0 0.0
    %1795 = vmatprep.subr.mxu0 0.0
    %1796 = vmatpush2.msra.mxu0 0.0
    %1797 = vmatprep.subr.mxu0 0.0
    %1798 = vmatpush2.msra.mxu0 0.0
    %1799 = vmatprep.subr.mxu0 0.0
    %1800 = vmatpush2.msra.mxu0 0.0
    %1801 = vmatprep.subr.mxu0 0.0
    %1802 = vmatpush2.msra.mxu0 0.0
    %1803 = vmatprep.subr.mxu0 0.0
    %1804 = vmatpush2.msra.mxu0 0.0
    %1805 = vmatprep.subr.mxu0 0.0
    %1806 = vmatpush2.msra.mxu0 0.0
    %1807 = vmatprep.subr.mxu0 0.0
    %1808 = vmatpush2.msra.mxu0 0.0
    %1809 = vmatprep.subr.mxu0 0.0
    %1810 = vmatpush2.msra.mxu0 0.0
    %1811 = vmatprep.subr.mxu0 0.0
    %1812 = vmatpush2.msra.mxu0 0.0
    %1813 = vmatprep.subr.mxu0 0.0
    %1814 = vmatpush2.msra.mxu0 0.0
    %1815 = vmatprep.subr.mxu0 0.0
    %1816 = vmatpush2.msra.mxu0 0.0
    %1817 = vmatprep.mubr.f32.mxu0 0.0
    %1818 = vmatmul.mubr.f32.gmra.mxu0 %v1751
    %v1819 = vpop.f32.mrf.mxu0
    %v1820 = vadd.f32 0.0, %v1819
    %v1821 = vpop.f32.mrf.mxu0
    %1822 = vdwg.mxu0
    %v1823 = vadd.f32 %v1750, %v1820
    %v1824 = vtanh.pop %v1823
    %v1825 = vxor.u32 %v1823, 2147483648
    %v1826 = vmul.f32 %v1825, 1.442695
    %v1827 = vpow.pop %v1826
    %v1828 = vadd.f32 %v1827, 1.0
    %v1829 = vrcp.pop %v1828
    %v1830 = vmul.f32 1.0, %v1829
    %v1831 = vsel %vm156, %v1824, %v1830
    %v1832 = vmul.f32 %v1831, %v1738
    %1834 = vrot.lane.b32.xlu0 %v1831, 64
    %v1835 = vpop.permute.xlu0 %1834
    %v1837 = vmul.f32 %v1831, %v1835
    %1839 = vrot.lane.b32.xlu0 %v1837, 32
    %v1840 = vpop.permute.xlu0 %1839
    %v1842 = vadd.f32 %v1832, %v1840
    %v1843 = vtanh.pop %v1842
    %1845 = vrot.lane.b32.xlu0 %v1843, 64
    %v1846 = vpop.permute.xlu0 %1845
    %v1848 = vmul.f32 %v1831, %v1846
    %1850 = vrot.lane.b32.xlu0 %v1848, 32
    %v1851 = vpop.permute.xlu0 %1850
    %1853 = vst.msk [vmem:[%s839] sm:$0xff] %vm308, %v1851
    %v1854 = vld [vmem:[%s841] sm:$0xff]
    %v1855 = vsel %vm308, %v1851, 0
    %1857 = vmatprep.subr.mxu0 0.0
    %1858 = vmatpush1.msra.mxu0 0.0
    %1859 = vmatprep.subr.mxu0 0.0
    %1860 = vmatpush1.msra.mxu0 0.0
    %1861 = vmatprep.subr.mxu0 0.0
    %1862 = vmatpush1.msra.mxu0 0.0
    %1863 = vmatprep.subr.mxu0 0.0
    %1864 = vmatpush1.msra.mxu0 0.0
    %1865 = vmatprep.subr.mxu0 0.0
    %1866 = vmatpush1.msra.mxu0 0.0
    %1867 = vmatprep.subr.mxu0 0.0
    %1868 = vmatpush1.msra.mxu0 0.0
    %1869 = vmatprep.subr.mxu0 0.0
    %1870 = vmatpush1.msra.mxu0 0.0
    %1871 = vmatprep.subr.mxu0 0.0
    %1872 = vmatpush1.msra.mxu0 0.0
    %1873 = vmatprep.subr.mxu0 0.0
    %1874 = vmatpush1.msra.mxu0 0.0
    %1875 = vmatprep.subr.mxu0 0.0
    %1876 = vmatpush1.msra.mxu0 0.0
    %1877 = vmatprep.subr.mxu0 0.0
    %1878 = vmatpush1.msra.mxu0 0.0
    %1879 = vmatprep.subr.mxu0 0.0
    %1880 = vmatpush1.msra.mxu0 0.0
    %1881 = vmatprep.subr.mxu0 0.0
    %1882 = vmatpush1.msra.mxu0 %v1324
    %1883 = vmatprep.subr.mxu0 0.0
    %1884 = vmatpush1.msra.mxu0 %v1323
    %1885 = vmatprep.subr.mxu0 0.0
    %1886 = vmatpush1.msra.mxu0 %v1322
    %1887 = vmatprep.subr.mxu0 0.0
    %1888 = vmatpush1.msra.mxu0 %v1321
    %1889 = vmatprep.subr.mxu0 0.0
    %1890 = vmatpush2.msra.mxu0 0.0
    %1891 = vmatprep.subr.mxu0 0.0
    %1892 = vmatpush2.msra.mxu0 0.0
    %1893 = vmatprep.subr.mxu0 0.0
    %1894 = vmatpush2.msra.mxu0 0.0
    %1895 = vmatprep.subr.mxu0 0.0
    %1896 = vmatpush2.msra.mxu0 0.0
    %1897 = vmatprep.subr.mxu0 0.0
    %1898 = vmatpush2.msra.mxu0 0.0
    %1899 = vmatprep.subr.mxu0 0.0
    %1900 = vmatpush2.msra.mxu0 0.0
    %1901 = vmatprep.subr.mxu0 0.0
    %1902 = vmatpush2.msra.mxu0 0.0
    %1903 = vmatprep.subr.mxu0 0.0
    %1904 = vmatpush2.msra.mxu0 0.0
    %1905 = vmatprep.subr.mxu0 0.0
    %1906 = vmatpush2.msra.mxu0 0.0
    %1907 = vmatprep.subr.mxu0 0.0
    %1908 = vmatpush2.msra.mxu0 0.0
    %1909 = vmatprep.subr.mxu0 0.0
    %1910 = vmatpush2.msra.mxu0 0.0
    %1911 = vmatprep.subr.mxu0 0.0
    %1912 = vmatpush2.msra.mxu0 0.0
    %1913 = vmatprep.subr.mxu0 0.0
    %1914 = vmatpush2.msra.mxu0 0.0
    %1915 = vmatprep.subr.mxu0 0.0
    %1916 = vmatpush2.msra.mxu0 0.0
    %1917 = vmatprep.subr.mxu0 0.0
    %1918 = vmatpush2.msra.mxu0 0.0
    %1919 = vmatprep.subr.mxu0 0.0
    %1920 = vmatpush2.msra.mxu0 0.0
    %1921 = vmatprep.mubr.f32.mxu0 0.0
    %1922 = vmatmul.mubr.f32.gmra.mxu0 %v1855
    %v1923 = vpop.f32.mrf.mxu0
    %v1924 = vadd.f32 0.0, %v1923
    %v1925 = vpop.f32.mrf.mxu0
    %1926 = vdwg.mxu0
    %v1927 = vadd.f32 %v1854, %v1924
    %v1928 = vtanh.pop %v1927
    %v1929 = vxor.u32 %v1927, 2147483648
    %v1930 = vmul.f32 %v1929, 1.442695
    %v1931 = vpow.pop %v1930
    %v1932 = vadd.f32 %v1931, 1.0
    %v1933 = vrcp.pop %v1932
    %v1934 = vmul.f32 1.0, %v1933
    %v1935 = vsel %vm156, %v1928, %v1934
    %v1936 = vmul.f32 %v1935, %v1842
    %1938 = vrot.lane.b32.xlu0 %v1935, 64
    %v1939 = vpop.permute.xlu0 %1938
    %v1941 = vmul.f32 %v1935, %v1939
    %1943 = vrot.lane.b32.xlu0 %v1941, 32
    %v1944 = vpop.permute.xlu0 %1943
    %v1946 = vadd.f32 %v1936, %v1944
    %v1947 = vtanh.pop %v1946
    %1949 = vrot.lane.b32.xlu0 %v1947, 64
    %v1950 = vpop.permute.xlu0 %1949
    %v1952 = vmul.f32 %v1935, %v1950
    %1954 = vrot.lane.b32.xlu0 %v1952, 32
    %v1955 = vpop.permute.xlu0 %1954
    %1957 = vst.msk [vmem:[%s945] sm:$0xff] %vm308, %v1955
    %v1958 = vld [vmem:[%s947] sm:$0xff]
    %v1959 = vsel %vm308, %v1955, 0
    %1961 = vmatprep.subr.mxu0 0.0
    %1962 = vmatpush1.msra.mxu0 0.0
    %1963 = vmatprep.subr.mxu0 0.0
    %1964 = vmatpush1.msra.mxu0 0.0
    %1965 = vmatprep.subr.mxu0 0.0
    %1966 = vmatpush1.msra.mxu0 0.0
    %1967 = vmatprep.subr.mxu0 0.0
    %1968 = vmatpush1.msra.mxu0 0.0
    %1969 = vmatprep.subr.mxu0 0.0
    %1970 = vmatpush1.msra.mxu0 0.0
    %1971 = vmatprep.subr.mxu0 0.0
    %1972 = vmatpush1.msra.mxu0 0.0
    %1973 = vmatprep.subr.mxu0 0.0
    %1974 = vmatpush1.msra.mxu0 0.0
    %1975 = vmatprep.subr.mxu0 0.0
    %1976 = vmatpush1.msra.mxu0 0.0
    %1977 = vmatprep.subr.mxu0 0.0
    %1978 = vmatpush1.msra.mxu0 0.0
    %1979 = vmatprep.subr.mxu0 0.0
    %1980 = vmatpush1.msra.mxu0 0.0
    %1981 = vmatprep.subr.mxu0 0.0
    %1982 = vmatpush1.msra.mxu0 0.0
    %1983 = vmatprep.subr.mxu0 0.0
    %1984 = vmatpush1.msra.mxu0 0.0
    %1985 = vmatprep.subr.mxu0 0.0
    %1986 = vmatpush1.msra.mxu0 %v1324
    %1987 = vmatprep.subr.mxu0 0.0
    %1988 = vmatpush1.msra.mxu0 %v1323
    %1989 = vmatprep.subr.mxu0 0.0
    %1990 = vmatpush1.msra.mxu0 %v1322
    %1991 = vmatprep.subr.mxu0 0.0
    %1992 = vmatpush1.msra.mxu0 %v1321
    %1993 = vmatprep.subr.mxu0 0.0
    %1994 = vmatpush2.msra.mxu0 0.0
    %1995 = vmatprep.subr.mxu0 0.0
    %1996 = vmatpush2.msra.mxu0 0.0
    %1997 = vmatprep.subr.mxu0 0.0
    %1998 = vmatpush2.msra.mxu0 0.0
    %1999 = vmatprep.subr.mxu0 0.0
    %2000 = vmatpush2.msra.mxu0 0.0
    %2001 = vmatprep.subr.mxu0 0.0
    %2002 = vmatpush2.msra.mxu0 0.0
    %2003 = vmatprep.subr.mxu0 0.0
    %2004 = vmatpush2.msra.mxu0 0.0
    %2005 = vmatprep.subr.mxu0 0.0
    %2006 = vmatpush2.msra.mxu0 0.0
    %2007 = vmatprep.subr.mxu0 0.0
    %2008 = vmatpush2.msra.mxu0 0.0
    %2009 = vmatprep.subr.mxu0 0.0
    %2010 = vmatpush2.msra.mxu0 0.0
    %2011 = vmatprep.subr.mxu0 0.0
    %2012 = vmatpush2.msra.mxu0 0.0
    %2013 = vmatprep.subr.mxu0 0.0
    %2014 = vmatpush2.msra.mxu0 0.0
    %2015 = vmatprep.subr.mxu0 0.0
    %2016 = vmatpush2.msra.mxu0 0.0
    %2017 = vmatprep.subr.mxu0 0.0
    %2018 = vmatpush2.msra.mxu0 0.0
    %2019 = vmatprep.subr.mxu0 0.0
    %2020 = vmatpush2.msra.mxu0 0.0
    %2021 = vmatprep.subr.mxu0 0.0
    %2022 = vmatpush2.msra.mxu0 0.0
    %2023 = vmatprep.subr.mxu0 0.0
    %2024 = vmatpush2.msra.mxu0 0.0
    %2025 = vmatprep.mubr.f32.mxu0 0.0
    %2026 = vmatmul.mubr.f32.gmra.mxu0 %v1959
    %v2027 = vpop.f32.mrf.mxu0
    %v2028 = vadd.f32 0.0, %v2027
    %v2029 = vpop.f32.mrf.mxu0
    %2030 = vdwg.mxu0
    %v2031 = vadd.f32 %v1958, %v2028
    %v2032 = vtanh.pop %v2031
    %v2033 = vxor.u32 %v2031, 2147483648
    %v2034 = vmul.f32 %v2033, 1.442695
    %v2035 = vpow.pop %v2034
    %v2036 = vadd.f32 %v2035, 1.0
    %v2037 = vrcp.pop %v2036
    %v2038 = vmul.f32 1.0, %v2037
    %v2039 = vsel %vm156, %v2032, %v2038
    %v2040 = vmul.f32 %v2039, %v1946
    %2042 = vrot.lane.b32.xlu0 %v2039, 64
    %v2043 = vpop.permute.xlu0 %2042
    %v2045 = vmul.f32 %v2039, %v2043
    %2047 = vrot.lane.b32.xlu0 %v2045, 32
    %v2048 = vpop.permute.xlu0 %2047
    %v2050 = vadd.f32 %v2040, %v2048
    %v2051 = vtanh.pop %v2050
    %2053 = vrot.lane.b32.xlu0 %v2051, 64
    %v2054 = vpop.permute.xlu0 %2053
    %v2056 = vmul.f32 %v2039, %v2054
    %2058 = vrot.lane.b32.xlu0 %v2056, 32
    %v2059 = vpop.permute.xlu0 %2058
    %2061 = vst.msk [vmem:[%s1051] sm:$0xff] %vm308, %v2059
    %v2062 = vld [vmem:[%s1053] sm:$0xff]
    %v2063 = vsel %vm308, %v2059, 0
    %2065 = vmatprep.subr.mxu0 0.0
    %2066 = vmatpush1.msra.mxu0 0.0
    %2067 = vmatprep.subr.mxu0 0.0
    %2068 = vmatpush1.msra.mxu0 0.0
    %2069 = vmatprep.subr.mxu0 0.0
    %2070 = vmatpush1.msra.mxu0 0.0
    %2071 = vmatprep.subr.mxu0 0.0
    %2072 = vmatpush1.msra.mxu0 0.0
    %2073 = vmatprep.subr.mxu0 0.0
    %2074 = vmatpush1.msra.mxu0 0.0
    %2075 = vmatprep.subr.mxu0 0.0
    %2076 = vmatpush1.msra.mxu0 0.0
    %2077 = vmatprep.subr.mxu0 0.0
    %2078 = vmatpush1.msra.mxu0 0.0
    %2079 = vmatprep.subr.mxu0 0.0
    %2080 = vmatpush1.msra.mxu0 0.0
    %2081 = vmatprep.subr.mxu0 0.0
    %2082 = vmatpush1.msra.mxu0 0.0
    %2083 = vmatprep.subr.mxu0 0.0
    %2084 = vmatpush1.msra.mxu0 0.0
    %2085 = vmatprep.subr.mxu0 0.0
    %2086 = vmatpush1.msra.mxu0 0.0
    %2087 = vmatprep.subr.mxu0 0.0
    %2088 = vmatpush1.msra.mxu0 0.0
    %2089 = vmatprep.subr.mxu0 0.0
    %2090 = vmatpush1.msra.mxu0 %v1324
    %2091 = vmatprep.subr.mxu0 0.0
    %2092 = vmatpush1.msra.mxu0 %v1323
    %2093 = vmatprep.subr.mxu0 0.0
    %2094 = vmatpush1.msra.mxu0 %v1322
    %2095 = vmatprep.subr.mxu0 0.0
    %2096 = vmatpush1.msra.mxu0 %v1321
    %2097 = vmatprep.subr.mxu0 0.0
    %2098 = vmatpush2.msra.mxu0 0.0
    %2099 = vmatprep.subr.mxu0 0.0
    %2100 = vmatpush2.msra.mxu0 0.0
    %2101 = vmatprep.subr.mxu0 0.0
    %2102 = vmatpush2.msra.mxu0 0.0
    %2103 = vmatprep.subr.mxu0 0.0
    %2104 = vmatpush2.msra.mxu0 0.0
    %2105 = vmatprep.subr.mxu0 0.0
    %2106 = vmatpush2.msra.mxu0 0.0
    %2107 = vmatprep.subr.mxu0 0.0
    %2108 = vmatpush2.msra.mxu0 0.0
    %2109 = vmatprep.subr.mxu0 0.0
    %2110 = vmatpush2.msra.mxu0 0.0
    %2111 = vmatprep.subr.mxu0 0.0
    %2112 = vmatpush2.msra.mxu0 0.0
    %2113 = vmatprep.subr.mxu0 0.0
    %2114 = vmatpush2.msra.mxu0 0.0
    %2115 = vmatprep.subr.mxu0 0.0
    %2116 = vmatpush2.msra.mxu0 0.0
    %2117 = vmatprep.subr.mxu0 0.0
    %2118 = vmatpush2.msra.mxu0 0.0
    %2119 = vmatprep.subr.mxu0 0.0
    %2120 = vmatpush2.msra.mxu0 0.0
    %2121 = vmatprep.subr.mxu0 0.0
    %2122 = vmatpush2.msra.mxu0 0.0
    %2123 = vmatprep.subr.mxu0 0.0
    %2124 = vmatpush2.msra.mxu0 0.0
    %2125 = vmatprep.subr.mxu0 0.0
    %2126 = vmatpush2.msra.mxu0 0.0
    %2127 = vmatprep.subr.mxu0 0.0
    %2128 = vmatpush2.msra.mxu0 0.0
    %2129 = vmatprep.mubr.f32.mxu0 0.0
    %2130 = vmatmul.mubr.f32.gmra.mxu0 %v2063
    %v2131 = vpop.f32.mrf.mxu0
    %v2132 = vadd.f32 0.0, %v2131
    %v2133 = vpop.f32.mrf.mxu0
    %2134 = vdwg.mxu0
    %v2135 = vadd.f32 %v2062, %v2132
    %v2136 = vtanh.pop %v2135
    %v2137 = vxor.u32 %v2135, 2147483648
    %v2138 = vmul.f32 %v2137, 1.442695
    %v2139 = vpow.pop %v2138
    %v2140 = vadd.f32 %v2139, 1.0
    %v2141 = vrcp.pop %v2140
    %v2142 = vmul.f32 1.0, %v2141
    %v2143 = vsel %vm156, %v2136, %v2142
    %v2144 = vmul.f32 %v2143, %v2050
    %2146 = vrot.lane.b32.xlu0 %v2143, 64
    %v2147 = vpop.permute.xlu0 %2146
    %v2149 = vmul.f32 %v2143, %v2147
    %2151 = vrot.lane.b32.xlu0 %v2149, 32
    %v2152 = vpop.permute.xlu0 %2151
    %v2154 = vadd.f32 %v2144, %v2152
    %v2155 = vtanh.pop %v2154
    %2157 = vrot.lane.b32.xlu0 %v2155, 64
    %v2158 = vpop.permute.xlu0 %2157
    %v2160 = vmul.f32 %v2143, %v2158
    %2162 = vrot.lane.b32.xlu0 %v2160, 32
    %v2163 = vpop.permute.xlu0 %2162
    %2165 = vst.msk [vmem:[%s1157] sm:$0xff] %vm308, %v2163
    %s2166 = scalar_lea.vmem [#allocation19], 8
    %2167 = vst.msk [vmem:[%s2166] sm:$0xff] %vm308, %v2163
    %2169 = vrot.lane.b32.xlu0 %v2154, 96
    %v2170 = vpop.permute.xlu0 %2169
    %s2172 = scalar_lea.vmem [#allocation21], 8
    %2173 = vst.msk [vmem:[%s2172] sm:$0xff] %vm308, %v2170
    %v2174 = vld [vmem:[#allocation3] sm:$0xff]
    %v2175 = vld [vmem:[#allocation3 + $0x8] sm:$0xff]
    %v2176 = vld [vmem:[#allocation3 + $0x10] sm:$0xff]
    %v2177 = vld [vmem:[#allocation3 + $0x18] sm:$0xff]
    %v2178 = vld [vmem:[#allocation3 + $0x20] sm:$0xff]
    %v2179 = vld [vmem:[#allocation3 + $0x28] sm:$0xff]
    %v2180 = vld [vmem:[#allocation3 + $0x30] sm:$0xff]
    %v2181 = vld [vmem:[#allocation3 + $0x38] sm:$0xff]
    %v2182 = vld [vmem:[#allocation16] sm:$0xff]
    %v2183 = vld [vmem:[#allocation16 + $0x8] sm:$0xff]
    %v2184 = vld [vmem:[#allocation16 + $0x10] sm:$0xff]
    %v2185 = vld [vmem:[#allocation16 + $0x18] sm:$0xff]
    %v2186 = vld [vmem:[%s10] sm:$0x1]
    %v2188 = vlaneseq
    %v2189 = vshrl.u32 %v2188, 7
    %v2190 = vsub.s32 0, %v2189
    %v2191 = vrot.slane %v2186, %v2190
    %v2194 = vsel %vm308, %v2174, 0
    %v2197 = vsel %vm308, %v2175, 0
    %v2200 = vsel %vm308, %v2176, 0
    %v2203 = vsel %vm308, %v2177, 0
    %v2206 = vsel %vm308, %v2178, 0
    %v2209 = vsel %vm308, %v2179, 0
    %v2212 = vsel %vm308, %v2180, 0
    %v2215 = vsel %vm308, %v2181, 0
    %2217 = vmatprep.subr.mxu0 0.0
    %2218 = vmatpush1.msra.mxu0 0.0
    %2219 = vmatprep.subr.mxu0 0.0
    %2220 = vmatpush1.msra.mxu0 0.0
    %2221 = vmatprep.subr.mxu0 0.0
    %2222 = vmatpush1.msra.mxu0 0.0
    %2223 = vmatprep.subr.mxu0 0.0
    %2224 = vmatpush1.msra.mxu0 0.0
    %2225 = vmatprep.subr.mxu0 0.0
    %2226 = vmatpush1.msra.mxu0 0.0
    %2227 = vmatprep.subr.mxu0 0.0
    %2228 = vmatpush1.msra.mxu0 0.0
    %2229 = vmatprep.subr.mxu0 0.0
    %2230 = vmatpush1.msra.mxu0 0.0
    %2231 = vmatprep.subr.mxu0 0.0
    %2232 = vmatpush1.msra.mxu0 0.0
    %2233 = vmatprep.subr.mxu0 0.0
    %2234 = vmatpush1.msra.mxu0 0.0
    %2235 = vmatprep.subr.mxu0 0.0
    %2236 = vmatpush1.msra.mxu0 0.0
    %2237 = vmatprep.subr.mxu0 0.0
    %2238 = vmatpush1.msra.mxu0 0.0
    %2239 = vmatprep.subr.mxu0 0.0
    %2240 = vmatpush1.msra.mxu0 0.0
    %2241 = vmatprep.subr.mxu0 0.0
    %2242 = vmatpush1.msra.mxu0 %v2185
    %2243 = vmatprep.subr.mxu0 0.0
    %2244 = vmatpush1.msra.mxu0 %v2184
    %2245 = vmatprep.subr.mxu0 0.0
    %2246 = vmatpush1.msra.mxu0 %v2183
    %2247 = vmatprep.subr.mxu0 0.0
    %2248 = vmatpush1.msra.mxu0 %v2182
    %2249 = vmatprep.subr.mxu0 0.0
    %2250 = vmatpush2.msra.mxu0 0.0
    %2251 = vmatprep.subr.mxu0 0.0
    %2252 = vmatpush2.msra.mxu0 0.0
    %2253 = vmatprep.subr.mxu0 0.0
    %2254 = vmatpush2.msra.mxu0 0.0
    %2255 = vmatprep.subr.mxu0 0.0
    %2256 = vmatpush2.msra.mxu0 0.0
    %2257 = vmatprep.subr.mxu0 0.0
    %2258 = vmatpush2.msra.mxu0 0.0
    %2259 = vmatprep.subr.mxu0 0.0
    %2260 = vmatpush2.msra.mxu0 0.0
    %2261 = vmatprep.subr.mxu0 0.0
    %2262 = vmatpush2.msra.mxu0 0.0
    %2263 = vmatprep.subr.mxu0 0.0
    %2264 = vmatpush2.msra.mxu0 0.0
    %2265 = vmatprep.subr.mxu0 0.0
    %2266 = vmatpush2.msra.mxu0 0.0
    %2267 = vmatprep.subr.mxu0 0.0
    %2268 = vmatpush2.msra.mxu0 0.0
    %2269 = vmatprep.subr.mxu0 0.0
    %2270 = vmatpush2.msra.mxu0 0.0
    %2271 = vmatprep.subr.mxu0 0.0
    %2272 = vmatpush2.msra.mxu0 0.0
    %2273 = vmatprep.subr.mxu0 0.0
    %2274 = vmatpush2.msra.mxu0 0.0
    %2275 = vmatprep.subr.mxu0 0.0
    %2276 = vmatpush2.msra.mxu0 0.0
    %2277 = vmatprep.subr.mxu0 0.0
    %2278 = vmatpush2.msra.mxu0 0.0
    %2279 = vmatprep.subr.mxu0 0.0
    %2280 = vmatpush2.msra.mxu0 0.0
    %2281 = vmatprep.mubr.f32.mxu0 0.0
    %2282 = vmatmul.mubr.f32.gmra.mxu0 %v2194
    %v2283 = vpop.f32.mrf.mxu0
    %v2284 = vadd.f32 %v2191, %v2283
    %v2285 = vpop.f32.mrf.mxu0
    %2286 = vmatprep.mubr.f32.mxu0 0.0
    %2287 = vmatmul.mubr.f32.gmra.mxu0 %v2197
    %v2288 = vpop.f32.mrf.mxu0
    %v2289 = vadd.f32 %v2191, %v2288
    %v2290 = vpop.f32.mrf.mxu0
    %2291 = vmatprep.mubr.f32.mxu0 0.0
    %2292 = vmatmul.mubr.f32.gmra.mxu0 %v2200
    %v2293 = vpop.f32.mrf.mxu0
    %v2294 = vadd.f32 %v2191, %v2293
    %v2295 = vpop.f32.mrf.mxu0
    %2296 = vmatprep.mubr.f32.mxu0 0.0
    %2297 = vmatmul.mubr.f32.gmra.mxu0 %v2203
    %v2298 = vpop.f32.mrf.mxu0
    %v2299 = vadd.f32 %v2191, %v2298
    %v2300 = vpop.f32.mrf.mxu0
    %2301 = vmatprep.mubr.f32.mxu0 0.0
    %2302 = vmatmul.mubr.f32.gmra.mxu0 %v2206
    %v2303 = vpop.f32.mrf.mxu0
    %v2304 = vadd.f32 %v2191, %v2303
    %v2305 = vpop.f32.mrf.mxu0
    %2306 = vmatprep.mubr.f32.mxu0 0.0
    %2307 = vmatmul.mubr.f32.gmra.mxu0 %v2209
    %v2308 = vpop.f32.mrf.mxu0
    %v2309 = vadd.f32 %v2191, %v2308
    %v2310 = vpop.f32.mrf.mxu0
    %2311 = vmatprep.mubr.f32.mxu0 0.0
    %2312 = vmatmul.mubr.f32.gmra.mxu0 %v2212
    %v2313 = vpop.f32.mrf.mxu0
    %v2314 = vadd.f32 %v2191, %v2313
    %v2315 = vpop.f32.mrf.mxu0
    %2316 = vmatprep.mubr.f32.mxu0 0.0
    %2317 = vmatmul.mubr.f32.gmra.mxu0 %v2215
    %v2318 = vpop.f32.mrf.mxu0
    %v2319 = vadd.f32 %v2191, %v2318
    %v2320 = vpop.f32.mrf.mxu0
    %2321 = vdwg.mxu0
    %2322 = vst [vmem:[#allocation18] sm:$0xff] %v2284
    %2323 = vst [vmem:[#allocation18 + $0x8] sm:$0xff] %v2289
    %2324 = vst [vmem:[#allocation18 + $0x10] sm:$0xff] %v2294
    %2325 = vst [vmem:[#allocation18 + $0x18] sm:$0xff] %v2299
    %2326 = vst [vmem:[#allocation18 + $0x20] sm:$0xff] %v2304
    %2327 = vst [vmem:[#allocation18 + $0x28] sm:$0xff] %v2309
    %2328 = vst [vmem:[#allocation18 + $0x30] sm:$0xff] %v2314
    %2329 = vst [vmem:[#allocation18 + $0x38] sm:$0xff] %v2319
    // Predicated region
    $region78: #{tpu_custom_call.1} parent=1 // pred_check
      _
    $region79: #{tpu_custom_call.1} parent=1 // pred_check_branch
      %2331 = sbr.rel (0) target = $region81
    $region80: #{tpu_custom_call.1} parent=1 // pred_region
      %s2333 = ssub.s32 1024, 1024
      %2334 = vsyncadd [#allocation6], %s2333
      %s2335 = sshll.u32 [#allocation18], 4
      %s2336 = int_to_ptr.vmem [resolvable:$true] %s2335
      %2341 = dma.vmem_to_hbm [thread:$0]  %s2336, 1024, %s11, [#allocation6], 128, 128, 8
    $region81: #{tpu_custom_call.1} parent=1 // pred_fallthru
      _
    // Predicated region
    $region82: #{tpu_custom_call.1} parent=1 // pred_check
      _
    $region83: #{tpu_custom_call.1} parent=1 // pred_check_branch
      %2343 = sbr.rel (0) target = $region85
    $region84: #{tpu_custom_call.1} parent=1 // pred_region
      %s2345 = ssub.s32 256, 256
      %2346 = vsyncadd [#allocation20], %s2345
      %s2347 = sshll.u32 [#allocation19], 4
      %s2348 = int_to_ptr.vmem [resolvable:$true] %s2347
      %2353 = dma.vmem_to_hbm [thread:$0]  %s2348, 256, %s12, [#allocation20], 128, 128, 8
    $region85: #{tpu_custom_call.1} parent=1 // pred_fallthru
      _
    // Predicated region
    $region86: #{tpu_custom_call.1} parent=1 // pred_check
      _
    $region87: #{tpu_custom_call.1} parent=1 // pred_check_branch
      %2355 = sbr.rel (0) target = $region89
    $region88: #{tpu_custom_call.1} parent=1 // pred_region
      %s2357 = ssub.s32 256, 256
      %2358 = vsyncadd [#allocation20], %s2357
      %s2359 = sshll.u32 [#allocation21], 4
      %s2360 = int_to_ptr.vmem [resolvable:$true] %s2359
      %2365 = dma.vmem_to_hbm [thread:$0]  %s2360, 256, %s13, [#allocation20], 128, 128, 8
    $region89: #{tpu_custom_call.1} parent=1 // pred_fallthru
      _
    // Predicated region
    $region90: #{tpu_custom_call.1} parent=1 // pred_check
      _
    $region91: #{tpu_custom_call.1} parent=1 // pred_check_branch
      %2367 = sbr.rel (0) target = $region93
    $region92: #{tpu_custom_call.1} parent=1 // pred_region
      %2368 = dma.done [#allocation6], 1024
    $region93: #{tpu_custom_call.1} parent=1 // pred_fallthru
      _
    // Predicated region
    $region94: #{tpu_custom_call.1} parent=1 // pred_check
      _
    $region95: #{tpu_custom_call.1} parent=1 // pred_check_branch
      %2370 = sbr.rel (0) target = $region97
    $region96: #{tpu_custom_call.1} parent=1 // pred_region
      %2371 = dma.done [#allocation20], 256
    $region97: #{tpu_custom_call.1} parent=1 // pred_fallthru
      _
    // Predicated region
    $region98: #{tpu_custom_call.1} parent=1 // pred_check
      _
    $region99: #{tpu_custom_call.1} parent=1 // pred_check_branch
      %2373 = sbr.rel (0) target = $region101
    $region100: #{tpu_custom_call.1} parent=1 // pred_region
      %2374 = dma.done [#allocation20], 256
    $region101: #{tpu_custom_call.1} parent=1 // pred_fallthru
      _
    %2375 = vsyncpa [#allocation5], 1
    %2376 = vsyncpa [#allocation8], 1
    %2377 = vsyncpa [#allocation11], 1
    %2378 = vsyncpa [#allocation14], 1
    %2379 = vsyncpa [#allocation17], 1
    %2380 = vsyncpa [#allocation6], 1
    %2381 = vsyncpa [#allocation20], 1

</llo_original>
